<compile_context>
chip_gen: v7x
topology: tpu7x:2x2x1
jax: 0.10.0
libtpu: 0.0.40
codegen_flags: <defaults>
</compile_context>

<pallas_src>
import functools

import jax
import jax.numpy as jnp
from jax import lax
from jax.experimental import pallas as pl
from jax.experimental.pallas import tpu as pltpu


def _round_up(x, m):
    return ((x + m - 1) // m) * m


def _pick_row_tile(m, target=1024):
    """Largest divisor of m that is a multiple of 8 and <= target (fallback: m)."""
    for cand in range(min(target, m), 7, -1):
        if m % cand == 0 and cand % 8 == 0:
            return cand
    return m


def _vmem_limit_bytes(per_call_bytes):
    # Raise the scoped-VMEM limit for large tiles (with headroom), but stay well
    # below the smallest physical VMEM (v7x: 64 MiB per TensorCore).
    return int(min(48 * 2**20, max(32 * 2**20, 2 * per_call_bytes + 8 * 2**20)))


# -----------------------------------------------------------------------------
# Phase 1: 3x3 conv (9 accumulating matmuls) + bias, per-tile BN partial stats.
# -----------------------------------------------------------------------------
def _conv_bias_stats_kernel(x_ref, w_ref, b_ref, y_ref, part_ref, xp_ref, *,
                            H, W, Cin):
    # x_ref   : (1, H, W, Cin)          one image of the NHWC activation
    # w_ref   : (9, Cin_pad, Cout_pad)  bf16 taps, tap order (kh, kw), K order cin
    # b_ref   : (1, Cout_pad)           conv bias   (zero in padded channels)
    # y_ref   : (H*W, Cout_pad)         f32 conv+bias tile (lane-dense slab)
    # part_ref: (1, 2, Cout_pad)        per-tile [sum, sum-of-squares]
    # xp_ref  : (H+2, W+2, Cin_pad)     f32 scratch: halo + channel-padded input
    Cin_pad = xp_ref.shape[-1]
    TM, Cout_pad = y_ref.shape

    # Stage the input tile.  Every region read below is rewritten every grid
    # step (interior data, interior pad lanes, halo ring), so there is no
    # zero-once dependence and the grid axis is safe to shard across cores.
    xp_ref[1:H + 1, 1:W + 1, :Cin] = x_ref[0]
    if Cin_pad > Cin:
        xp_ref[1:H + 1, 1:W + 1, Cin:] = jnp.zeros((H, W, Cin_pad - Cin),
                                                   xp_ref.dtype)
    zrow = jnp.zeros((1, W + 2, Cin_pad), xp_ref.dtype)
    xp_ref[0:1, :, :] = zrow
    xp_ref[H + 1:H + 2, :, :] = zrow
    zcol = jnp.zeros((H, 1, Cin_pad), xp_ref.dtype)
    xp_ref[1:H + 1, 0:1, :] = zcol
    xp_ref[1:H + 1, W + 1:W + 2, :] = zcol

    # 3x3 conv = nine accumulating matmuls (bf16 MXU operands, f32 accumulation).
    # No im2col matrix is materialized.
    acc = jnp.zeros((TM, Cout_pad), jnp.float32)
    for t in range(9):
        dh, dw = t // 3, t % 3
        win = xp_ref[dh:dh + H, dw:dw + W, :].reshape(TM, Cin_pad)
        acc = acc + jnp.dot(win.astype(jnp.bfloat16), w_ref[t],
                            preferred_element_type=jnp.float32)
    acc = acc + b_ref[...]

    y_ref[...] = acc
    # Per-tile BatchNorm partials (reduced across tiles in the wrapper).
    part_ref[:, 0:1, :] = jnp.sum(acc, axis=0,
                                  keepdims=True).reshape(1, 1, Cout_pad)
    part_ref[:, 1:2, :] = jnp.sum(acc * acc, axis=0,
                                  keepdims=True).reshape(1, 1, Cout_pad)


# -----------------------------------------------------------------------------
# Phase 2: BatchNorm (batch stats) + affine + ReLU, in place, fully parallel.
# -----------------------------------------------------------------------------
def _bn_relu_kernel(y_ref, stats_ref, g_ref, bb_ref, o_ref, *, inv_count, eps):
    # y_ref    : (TM2, Cout_pad)  conv+bias tile
    # stats_ref: (2, Cout_pad)    [sum, sum-of-squares] over all N*H*W rows
    # o_ref    : (TM2, Cout_pad)  output tile, aliased onto y's HBM buffer
    mean = stats_ref[0:1, :] * inv_count
    var = stats_ref[1:2, :] * inv_count - mean * mean          # biased variance
    scale = g_ref[...] * lax.rsqrt(var + eps)
    shift = bb_ref[...] - mean * scale
    o_ref[...] = jnp.maximum(y_ref[...] * scale + shift, 0.0).astype(o_ref.dtype)


# -----------------------------------------------------------------------------
# Wrapper: NCHW module boundary, weight packing, two pallas_calls.
# -----------------------------------------------------------------------------
def conv_block_forward(x_nchw, w, b, gamma, beta, eps=1e-5):
    N, Cin, H, W = x_nchw.shape
    Cout = w.shape[0]
    Cin_pad = _round_up(Cin, 128)
    Cout_pad = _round_up(Cout, 128)
    TM = H * W                      # phase-1 row tile: one image per grid step
    M = N * TM

    x_nhwc = jnp.transpose(x_nchw, (0, 2, 3, 1)).astype(jnp.float32)

    # Pack Conv2d weight (Cout, Cin, 3, 3) -> (9, Cin_pad, Cout_pad) bf16 taps.
    w_hwio = jnp.transpose(w, (2, 3, 1, 0)).astype(jnp.float32)      # (3,3,Cin,Cout)
    w_pad = jnp.zeros((3, 3, Cin_pad, Cout_pad), jnp.float32)
    w_pad = w_pad.at[:, :, :Cin, :Cout].set(w_hwio)
    w_taps = w_pad.reshape(9, Cin_pad, Cout_pad).astype(jnp.bfloat16)

    def pad_vec(v):
        return jnp.zeros((1, Cout_pad), jnp.float32).at[0, :Cout].set(
            v.astype(jnp.float32))

    b_p, g_p, bb_p = pad_vec(b), pad_vec(gamma), pad_vec(beta)

    # ------------------------ phase 1: conv + bias + stats -------------------
    p1_bytes = (2 * H * W * Cin * 4                    # double-buffered input tile
                + 9 * Cin_pad * Cout_pad * 2           # bf16 weight taps
                + 2 * TM * Cout_pad * 4                # double-buffered y tile
                + (H + 2) * (W + 2) * Cin_pad * 4      # halo scratch
                + 6 * TM * Cout_pad * 4)               # accumulator / temporaries
    y_conv, partials = pl.pallas_call(
        functools.partial(_conv_bias_stats_kernel, H=H, W=W, Cin=Cin),
        out_shape=(jax.ShapeDtypeStruct((M, Cout_pad), jnp.float32),
                   jax.ShapeDtypeStruct((N, 2, Cout_pad), jnp.float32)),
        grid=(N,),
        in_specs=[
            pl.BlockSpec((1, H, W, Cin), lambda n: (n, 0, 0, 0)),
            pl.BlockSpec((9, Cin_pad, Cout_pad), lambda n: (0, 0, 0)),
            pl.BlockSpec((1, Cout_pad), lambda n: (0, 0)),
        ],
        out_specs=(
            pl.BlockSpec((TM, Cout_pad), lambda n: (n, 0)),
            pl.BlockSpec((1, 2, Cout_pad), lambda n: (n, 0, 0)),
        ),
        scratch_shapes=[pltpu.VMEM((H + 2, W + 2, Cin_pad), jnp.float32)],
        compiler_params=pltpu.CompilerParams(
            dimension_semantics=("parallel",),
            vmem_limit_bytes=_vmem_limit_bytes(p1_bytes)),
    )(x_nhwc, w_taps, b_p)

    # Tiny cross-tile reduction of the per-tile [sum, sumsq] partials.
    stats = jnp.sum(partials, axis=0)                  # (2, Cout_pad)

    # --------------------- phase 2: normalize + ReLU (in place) --------------
    TM2 = _pick_row_tile(M)
    p2_bytes = 4 * TM2 * Cout_pad * 4 + 16 * Cout_pad * 4
    out = pl.pallas_call(
        functools.partial(_bn_relu_kernel, inv_count=1.0 / M, eps=eps),
        out_shape=jax.ShapeDtypeStruct((M, Cout_pad), jnp.float32),
        grid=(M // TM2,),
        in_specs=[
            pl.BlockSpec((TM2, Cout_pad), lambda i: (i, 0)),
            pl.BlockSpec((2, Cout_pad), lambda i: (0, 0)),
            pl.BlockSpec((1, Cout_pad), lambda i: (0, 0)),
            pl.BlockSpec((1, Cout_pad), lambda i: (0, 0)),
        ],
        out_specs=pl.BlockSpec((TM2, Cout_pad), lambda i: (i, 0)),
        input_output_aliases={0: 0},
        compiler_params=pltpu.CompilerParams(
            dimension_semantics=("parallel",),
            vmem_limit_bytes=_vmem_limit_bytes(p2_bytes)),
    )(y_conv, stats, g_p, bb_p)

    # Strip channel padding, return NCHW to match the nn.Module.
    out = out[:, :Cout].reshape(N, H, W, Cout)
    return jnp.transpose(out, (0, 3, 1, 2))


# -----------------------------------------------------------------------------
# Pure-JAX reference (NCHW, f32 conv) for validation.
# -----------------------------------------------------------------------------
def reference_forward(x, w, b, gamma, beta, eps=1e-5):
    y = lax.conv_general_dilated(x, w, (1, 1), [(1, 1), (1, 1)],
                                 dimension_numbers=("NCHW", "OIHW", "NCHW"))
    y = y + b[None, :, None, None]
    mean = jnp.mean(y, axis=(0, 2, 3), keepdims=True)
    var = jnp.mean((y - mean) ** 2, axis=(0, 2, 3), keepdims=True)   # biased
    y = (y - mean) * lax.rsqrt(var + eps)
    y = y * gamma[None, :, None, None] + beta[None, :, None, None]
    return jnp.maximum(y, 0.0)


if __name__ == "__main__":
    # ConvBlock(in_channels=8, out_channels=4), x: (N=2, C=8, H=16, W=16)
    in_channels, out_channels = 8, 4
    N, H, W = 2, 16, 16

    key = jax.random.PRNGKey(0)
    kx, kw, kb, kg, kbb = jax.random.split(key, 5)
    x = jax.random.normal(kx, (N, in_channels, H, W), jnp.float32)
    w = jax.random.normal(kw, (out_channels, in_channels, 3, 3), jnp.float32) * 0.1
    b = jax.random.normal(kb, (out_channels,), jnp.float32) * 0.1
    gamma = 1.0 + jax.random.normal(kg, (out_channels,), jnp.float32) * 0.1
    beta = jax.random.normal(kbb, (out_channels,), jnp.float32) * 0.1

    fwd = jax.jit(conv_block_forward)
    out = jax.block_until_ready(fwd(x, w, b, gamma, beta))
    ref = jax.block_until_ready(reference_forward(x, w, b, gamma, beta))

    assert out.shape == (N, out_channels, H, W), out.shape
    max_err = float(jnp.max(jnp.abs(out - ref)))
    # bf16 MXU operands with f32 accumulation -> relaxed tolerance vs f32 reference.
    assert jnp.allclose(out, ref, rtol=2e-2, atol=2e-2), max_err

    print("KERNEL_OK")
</pallas_src>

<mosaic_0001>
module attributes {stable_mosaic.version = 11 : i64} {
  func.func @_conv_bias_stats_kernel(%arg0: i32, %arg1: memref<1x16x16x8xf32, #tpu.memory_space<vmem>>, %arg2: memref<9x128x128xbf16, #tpu.memory_space<vmem>>, %arg3: memref<1x128xf32, #tpu.memory_space<vmem>>, %arg4: memref<256x128xf32, #tpu.memory_space<vmem>>, %arg5: memref<1x2x128xf32, #tpu.memory_space<vmem>>, %arg6: memref<18x18x128xf32, #tpu.memory_space<vmem>>) attributes {dimension_semantics = [#tpu.dimension_semantics<parallel>], iteration_bounds = array<i64: 2>, scalar_prefetch = 0 : i64, scratch_operands = 1 : i64, tpu.core_type = #tpu.core_type<tc>, window_params = [{transform_indices = @transform_0, window_bounds = array<i64: 1, 16, 16, 8>}, {pipeline_mode = #tpu.pipeline_mode<synchronous>, transform_indices = @transform_1, window_bounds = array<i64: 9, 128, 128>}, {pipeline_mode = #tpu.pipeline_mode<synchronous>, transform_indices = @transform_2, window_bounds = array<i64: 1, 128>}, {transform_indices = @transform_3, window_bounds = array<i64: 256, 128>}, {transform_indices = @transform_4, window_bounds = array<i64: 1, 2, 128>}]} {
    %c0 = arith.constant 0 : index
    %c0_0 = arith.constant 0 : index
    %c0_1 = arith.constant 0 : index
    %c0_2 = arith.constant 0 : index
    %0 = vector.load %arg1[%c0, %c0_0, %c0_1, %c0_2] : memref<1x16x16x8xf32, #tpu.memory_space<vmem>>, vector<1x16x16x8xf32>
    %1 = vector.shape_cast %0 : vector<1x16x16x8xf32> to vector<16x16x8xf32>
    %c1 = arith.constant 1 : index
    %c1_3 = arith.constant 1 : index
    %c0_4 = arith.constant 0 : index
    %2 = vector.load %arg6[%c1, %c1_3, %c0_4] : memref<18x18x128xf32, #tpu.memory_space<vmem>>, vector<16x16x8xf32>
    tpu.vector_store %arg6[%c1, %c1_3, %c0_4], %1 {strides = array<i32>} : memref<18x18x128xf32, #tpu.memory_space<vmem>>, vector<16x16x8xf32>,
    %cst = arith.constant 0.000000e+00 : f32
    %3 = vector.broadcast %cst : f32 to vector<16x16x120xf32>
    %c1_5 = arith.constant 1 : index
    %c1_6 = arith.constant 1 : index
    %c8 = arith.constant 8 : index
    %4 = vector.load %arg6[%c1_5, %c1_6, %c8] : memref<18x18x128xf32, #tpu.memory_space<vmem>>, vector<16x16x120xf32>
    tpu.vector_store %arg6[%c1_5, %c1_6, %c8], %3 {strides = array<i32>} : memref<18x18x128xf32, #tpu.memory_space<vmem>>, vector<16x16x120xf32>,
    %cst_7 = arith.constant 0.000000e+00 : f32
    %5 = vector.broadcast %cst_7 : f32 to vector<1x18x128xf32>
    %c0_8 = arith.constant 0 : index
    %c0_9 = arith.constant 0 : index
    %c0_10 = arith.constant 0 : index
    %6 = vector.load %arg6[%c0_8, %c0_9, %c0_10] : memref<18x18x128xf32, #tpu.memory_space<vmem>>, vector<1x18x128xf32>
    tpu.vector_store %arg6[%c0_8, %c0_9, %c0_10], %5 {strides = array<i32>} : memref<18x18x128xf32, #tpu.memory_space<vmem>>, vector<1x18x128xf32>,
    %c17 = arith.constant 17 : index
    %c0_11 = arith.constant 0 : index
    %c0_12 = arith.constant 0 : index
    %7 = vector.load %arg6[%c17, %c0_11, %c0_12] : memref<18x18x128xf32, #tpu.memory_space<vmem>>, vector<1x18x128xf32>
    tpu.vector_store %arg6[%c17, %c0_11, %c0_12], %5 {strides = array<i32>} : memref<18x18x128xf32, #tpu.memory_space<vmem>>, vector<1x18x128xf32>,
    %cst_13 = arith.constant 0.000000e+00 : f32
    %8 = vector.broadcast %cst_13 : f32 to vector<16x1x128xf32>
    %c1_14 = arith.constant 1 : index
    %c0_15 = arith.constant 0 : index
    %c0_16 = arith.constant 0 : index
    %9 = vector.load %arg6[%c1_14, %c0_15, %c0_16] : memref<18x18x128xf32, #tpu.memory_space<vmem>>, vector<16x1x128xf32>
    tpu.vector_store %arg6[%c1_14, %c0_15, %c0_16], %8 {strides = array<i32>} : memref<18x18x128xf32, #tpu.memory_space<vmem>>, vector<16x1x128xf32>,
    %c1_17 = arith.constant 1 : index
    %c17_18 = arith.constant 17 : index
    %c0_19 = arith.constant 0 : index
    %10 = vector.load %arg6[%c1_17, %c17_18, %c0_19] : memref<18x18x128xf32, #tpu.memory_space<vmem>>, vector<16x1x128xf32>
    tpu.vector_store %arg6[%c1_17, %c17_18, %c0_19], %8 {strides = array<i32>} : memref<18x18x128xf32, #tpu.memory_space<vmem>>, vector<16x1x128xf32>,
    %cst_20 = arith.constant 0.000000e+00 : f32
    %11 = vector.broadcast %cst_20 : f32 to vector<256x128xf32>
    %c0_21 = arith.constant 0 : index
    %c0_22 = arith.constant 0 : index
    %c0_23 = arith.constant 0 : index
    %12 = vector.load %arg6[%c0_21, %c0_22, %c0_23] : memref<18x18x128xf32, #tpu.memory_space<vmem>>, vector<16x16x128xf32>
    %13 = vector.shape_cast %12 : vector<16x16x128xf32> to vector<256x128xf32>
    %14 = arith.truncf %13 : vector<256x128xf32> to vector<256x128xbf16>
    %c0_24 = arith.constant 0 : index
    %c0_25 = arith.constant 0 : index
    %c0_26 = arith.constant 0 : index
    %15 = vector.load %arg2[%c0_24, %c0_25, %c0_26] : memref<9x128x128xbf16, #tpu.memory_space<vmem>>, vector<1x128x128xbf16>
    %16 = vector.shape_cast %15 : vector<1x128x128xbf16> to vector<128x128xbf16>
    %cst_27 = arith.constant dense<0.000000e+00> : vector<256x128xf32>
    %17 = tpu.matmul %14, %16, %cst_27 {dimension_numbers = #tpu.dot_dimension_numbers<[1], [0], [0], [1], [0, 0, 1, 1], [], []>} : vector<256x128xbf16>, vector<128x128xbf16>, vector<256x128xf32> -> vector<256x128xf32>
    %18 = arith.addf %11, %17 : vector<256x128xf32>
    %c0_28 = arith.constant 0 : index
    %c1_29 = arith.constant 1 : index
    %c0_30 = arith.constant 0 : index
    %19 = vector.load %arg6[%c0_28, %c1_29, %c0_30] : memref<18x18x128xf32, #tpu.memory_space<vmem>>, vector<16x16x128xf32>
    %20 = vector.shape_cast %19 : vector<16x16x128xf32> to vector<256x128xf32>
    %21 = arith.truncf %20 : vector<256x128xf32> to vector<256x128xbf16>
    %c1_31 = arith.constant 1 : index
    %c0_32 = arith.constant 0 : index
    %c0_33 = arith.constant 0 : index
    %22 = vector.load %arg2[%c1_31, %c0_32, %c0_33] : memref<9x128x128xbf16, #tpu.memory_space<vmem>>, vector<1x128x128xbf16>
    %23 = vector.shape_cast %22 : vector<1x128x128xbf16> to vector<128x128xbf16>
    %cst_34 = arith.constant dense<0.000000e+00> : vector<256x128xf32>
    %24 = tpu.matmul %21, %23, %cst_34 {dimension_numbers = #tpu.dot_dimension_numbers<[1], [0], [0], [1], [0, 0, 1, 1], [], []>} : vector<256x128xbf16>, vector<128x128xbf16>, vector<256x128xf32> -> vector<256x128xf32>
    %25 = arith.addf %18, %24 : vector<256x128xf32>
    %c0_35 = arith.constant 0 : index
    %c2 = arith.constant 2 : index
    %c0_36 = arith.constant 0 : index
    %26 = vector.load %arg6[%c0_35, %c2, %c0_36] : memref<18x18x128xf32, #tpu.memory_space<vmem>>, vector<16x16x128xf32>
    %27 = vector.shape_cast %26 : vector<16x16x128xf32> to vector<256x128xf32>
    %28 = arith.truncf %27 : vector<256x128xf32> to vector<256x128xbf16>
    %c2_37 = arith.constant 2 : index
    %c0_38 = arith.constant 0 : index
    %c0_39 = arith.constant 0 : index
    %29 = vector.load %arg2[%c2_37, %c0_38, %c0_39] : memref<9x128x128xbf16, #tpu.memory_space<vmem>>, vector<1x128x128xbf16>
    %30 = vector.shape_cast %29 : vector<1x128x128xbf16> to vector<128x128xbf16>
    %cst_40 = arith.constant dense<0.000000e+00> : vector<256x128xf32>
    %31 = tpu.matmul %28, %30, %cst_40 {dimension_numbers = #tpu.dot_dimension_numbers<[1], [0], [0], [1], [0, 0, 1, 1], [], []>} : vector<256x128xbf16>, vector<128x128xbf16>, vector<256x128xf32> -> vector<256x128xf32>
    %32 = arith.addf %25, %31 : vector<256x128xf32>
    %c1_41 = arith.constant 1 : index
    %c0_42 = arith.constant 0 : index
    %c0_43 = arith.constant 0 : index
    %33 = vector.load %arg6[%c1_41, %c0_42, %c0_43] : memref<18x18x128xf32, #tpu.memory_space<vmem>>, vector<16x16x128xf32>
    %34 = vector.shape_cast %33 : vector<16x16x128xf32> to vector<256x128xf32>
    %35 = arith.truncf %34 : vector<256x128xf32> to vector<256x128xbf16>
    %c3 = arith.constant 3 : index
    %c0_44 = arith.constant 0 : index
    %c0_45 = arith.constant 0 : index
    %36 = vector.load %arg2[%c3, %c0_44, %c0_45] : memref<9x128x128xbf16, #tpu.memory_space<vmem>>, vector<1x128x128xbf16>
    %37 = vector.shape_cast %36 : vector<1x128x128xbf16> to vector<128x128xbf16>
    %cst_46 = arith.constant dense<0.000000e+00> : vector<256x128xf32>
    %38 = tpu.matmul %35, %37, %cst_46 {dimension_numbers = #tpu.dot_dimension_numbers<[1], [0], [0], [1], [0, 0, 1, 1], [], []>} : vector<256x128xbf16>, vector<128x128xbf16>, vector<256x128xf32> -> vector<256x128xf32>
    %39 = arith.addf %32, %38 : vector<256x128xf32>
    %c1_47 = arith.constant 1 : index
    %c1_48 = arith.constant 1 : index
    %c0_49 = arith.constant 0 : index
    %40 = vector.load %arg6[%c1_47, %c1_48, %c0_49] : memref<18x18x128xf32, #tpu.memory_space<vmem>>, vector<16x16x128xf32>
    %41 = vector.shape_cast %40 : vector<16x16x128xf32> to vector<256x128xf32>
    %42 = arith.truncf %41 : vector<256x128xf32> to vector<256x128xbf16>
    %c4 = arith.constant 4 : index
    %c0_50 = arith.constant 0 : index
    %c0_51 = arith.constant 0 : index
    %43 = vector.load %arg2[%c4, %c0_50, %c0_51] : memref<9x128x128xbf16, #tpu.memory_space<vmem>>, vector<1x128x128xbf16>
    %44 = vector.shape_cast %43 : vector<1x128x128xbf16> to vector<128x128xbf16>
    %cst_52 = arith.constant dense<0.000000e+00> : vector<256x128xf32>
    %45 = tpu.matmul %42, %44, %cst_52 {dimension_numbers = #tpu.dot_dimension_numbers<[1], [0], [0], [1], [0, 0, 1, 1], [], []>} : vector<256x128xbf16>, vector<128x128xbf16>, vector<256x128xf32> -> vector<256x128xf32>
    %46 = arith.addf %39, %45 : vector<256x128xf32>
    %c1_53 = arith.constant 1 : index
    %c2_54 = arith.constant 2 : index
    %c0_55 = arith.constant 0 : index
    %47 = vector.load %arg6[%c1_53, %c2_54, %c0_55] : memref<18x18x128xf32, #tpu.memory_space<vmem>>, vector<16x16x128xf32>
    %48 = vector.shape_cast %47 : vector<16x16x128xf32> to vector<256x128xf32>
    %49 = arith.truncf %48 : vector<256x128xf32> to vector<256x128xbf16>
    %c5 = arith.constant 5 : index
    %c0_56 = arith.constant 0 : index
    %c0_57 = arith.constant 0 : index
    %50 = vector.load %arg2[%c5, %c0_56, %c0_57] : memref<9x128x128xbf16, #tpu.memory_space<vmem>>, vector<1x128x128xbf16>
    %51 = vector.shape_cast %50 : vector<1x128x128xbf16> to vector<128x128xbf16>
    %cst_58 = arith.constant dense<0.000000e+00> : vector<256x128xf32>
    %52 = tpu.matmul %49, %51, %cst_58 {dimension_numbers = #tpu.dot_dimension_numbers<[1], [0], [0], [1], [0, 0, 1, 1], [], []>} : vector<256x128xbf16>, vector<128x128xbf16>, vector<256x128xf32> -> vector<256x128xf32>
    %53 = arith.addf %46, %52 : vector<256x128xf32>
    %c2_59 = arith.constant 2 : index
    %c0_60 = arith.constant 0 : index
    %c0_61 = arith.constant 0 : index
    %54 = vector.load %arg6[%c2_59, %c0_60, %c0_61] : memref<18x18x128xf32, #tpu.memory_space<vmem>>, vector<16x16x128xf32>
    %55 = vector.shape_cast %54 : vector<16x16x128xf32> to vector<256x128xf32>
    %56 = arith.truncf %55 : vector<256x128xf32> to vector<256x128xbf16>
    %c6 = arith.constant 6 : index
    %c0_62 = arith.constant 0 : index
    %c0_63 = arith.constant 0 : index
    %57 = vector.load %arg2[%c6, %c0_62, %c0_63] : memref<9x128x128xbf16, #tpu.memory_space<vmem>>, vector<1x128x128xbf16>
    %58 = vector.shape_cast %57 : vector<1x128x128xbf16> to vector<128x128xbf16>
    %cst_64 = arith.constant dense<0.000000e+00> : vector<256x128xf32>
    %59 = tpu.matmul %56, %58, %cst_64 {dimension_numbers = #tpu.dot_dimension_numbers<[1], [0], [0], [1], [0, 0, 1, 1], [], []>} : vector<256x128xbf16>, vector<128x128xbf16>, vector<256x128xf32> -> vector<256x128xf32>
    %60 = arith.addf %53, %59 : vector<256x128xf32>
    %c2_65 = arith.constant 2 : index
    %c1_66 = arith.constant 1 : index
    %c0_67 = arith.constant 0 : index
    %61 = vector.load %arg6[%c2_65, %c1_66, %c0_67] : memref<18x18x128xf32, #tpu.memory_space<vmem>>, vector<16x16x128xf32>
    %62 = vector.shape_cast %61 : vector<16x16x128xf32> to vector<256x128xf32>
    %63 = arith.truncf %62 : vector<256x128xf32> to vector<256x128xbf16>
    %c7 = arith.constant 7 : index
    %c0_68 = arith.constant 0 : index
    %c0_69 = arith.constant 0 : index
    %64 = vector.load %arg2[%c7, %c0_68, %c0_69] : memref<9x128x128xbf16, #tpu.memory_space<vmem>>, vector<1x128x128xbf16>
    %65 = vector.shape_cast %64 : vector<1x128x128xbf16> to vector<128x128xbf16>
    %cst_70 = arith.constant dense<0.000000e+00> : vector<256x128xf32>
    %66 = tpu.matmul %63, %65, %cst_70 {dimension_numbers = #tpu.dot_dimension_numbers<[1], [0], [0], [1], [0, 0, 1, 1], [], []>} : vector<256x128xbf16>, vector<128x128xbf16>, vector<256x128xf32> -> vector<256x128xf32>
    %67 = arith.addf %60, %66 : vector<256x128xf32>
    %c2_71 = arith.constant 2 : index
    %c2_72 = arith.constant 2 : index
    %c0_73 = arith.constant 0 : index
    %68 = vector.load %arg6[%c2_71, %c2_72, %c0_73] : memref<18x18x128xf32, #tpu.memory_space<vmem>>, vector<16x16x128xf32>
    %69 = vector.shape_cast %68 : vector<16x16x128xf32> to vector<256x128xf32>
    %70 = arith.truncf %69 : vector<256x128xf32> to vector<256x128xbf16>
    %c8_74 = arith.constant 8 : index
    %c0_75 = arith.constant 0 : index
    %c0_76 = arith.constant 0 : index
    %71 = vector.load %arg2[%c8_74, %c0_75, %c0_76] : memref<9x128x128xbf16, #tpu.memory_space<vmem>>, vector<1x128x128xbf16>
    %72 = vector.shape_cast %71 : vector<1x128x128xbf16> to vector<128x128xbf16>
    %cst_77 = arith.constant dense<0.000000e+00> : vector<256x128xf32>
    %73 = tpu.matmul %70, %72, %cst_77 {dimension_numbers = #tpu.dot_dimension_numbers<[1], [0], [0], [1], [0, 0, 1, 1], [], []>} : vector<256x128xbf16>, vector<128x128xbf16>, vector<256x128xf32> -> vector<256x128xf32>
    %74 = arith.addf %67, %73 : vector<256x128xf32>
    %c0_78 = arith.constant 0 : index
    %c0_79 = arith.constant 0 : index
    %75 = vector.load %arg3[%c0_78, %c0_79] : memref<1x128xf32, #tpu.memory_space<vmem>>, vector<1x128xf32>
    %76 = vector.broadcast %75 : vector<1x128xf32> to vector<256x128xf32>
    %77 = arith.addf %74, %76 : vector<256x128xf32>
    %c0_80 = arith.constant 0 : index
    %c0_81 = arith.constant 0 : index
    %78 = vector.load %arg4[%c0_80, %c0_81] : memref<256x128xf32, #tpu.memory_space<vmem>>, vector<256x128xf32>
    tpu.vector_store %arg4[%c0_80, %c0_81], %77 {strides = array<i32>} : memref<256x128xf32, #tpu.memory_space<vmem>>, vector<256x128xf32>,
    %cst_82 = arith.constant dense<0.000000e+00> : vector<128xf32>
    %79 = vector.multi_reduction <add>, %77, %cst_82 [0] : vector<256x128xf32> to vector<128xf32>
    %80 = vector.shape_cast %79 : vector<128xf32> to vector<1x128xf32>
    %81 = vector.shape_cast %80 : vector<1x128xf32> to vector<1x1x128xf32>
    %c0_83 = arith.constant 0 : index
    %c0_84 = arith.constant 0 : index
    %c0_85 = arith.constant 0 : index
    %82 = vector.load %arg5[%c0_83, %c0_84, %c0_85] : memref<1x2x128xf32, #tpu.memory_space<vmem>>, vector<1x1x128xf32>
    tpu.vector_store %arg5[%c0_83, %c0_84, %c0_85], %81 {strides = array<i32>} : memref<1x2x128xf32, #tpu.memory_space<vmem>>, vector<1x1x128xf32>,
    %83 = arith.mulf %77, %77 : vector<256x128xf32>
    %cst_86 = arith.constant dense<0.000000e+00> : vector<128xf32>
    %84 = vector.multi_reduction <add>, %83, %cst_86 [0] : vector<256x128xf32> to vector<128xf32>
    %85 = vector.shape_cast %84 : vector<128xf32> to vector<1x128xf32>
    %86 = vector.shape_cast %85 : vector<1x128xf32> to vector<1x1x128xf32>
    %c0_87 = arith.constant 0 : index
    %c1_88 = arith.constant 1 : index
    %c0_89 = arith.constant 0 : index
    %87 = vector.load %arg5[%c0_87, %c1_88, %c0_89] : memref<1x2x128xf32, #tpu.memory_space<vmem>>, vector<1x1x128xf32>
    tpu.vector_store %arg5[%c0_87, %c1_88, %c0_89], %86 {strides = array<i32>} : memref<1x2x128xf32, #tpu.memory_space<vmem>>, vector<1x1x128xf32>,
    return
  }
  func.func @transform_0(%arg0: i32) -> (i32, i32, i32, i32) {
    %c0_i32 = arith.constant 0 : i32
    %c0_i32_0 = arith.constant 0 : i32
    %c0_i32_1 = arith.constant 0 : i32
    %c0_i32_2 = arith.constant 0 : i32
    return %arg0, %c0_i32, %c0_i32_0, %c0_i32_1 : i32, i32, i32, i32
  }
  func.func @transform_1(%arg0: i32) -> (i32, i32, i32) {
    %c0_i32 = arith.constant 0 : i32
    %c0_i32_0 = arith.constant 0 : i32
    %c0_i32_1 = arith.constant 0 : i32
    %c0_i32_2 = arith.constant 0 : i32
    return %c0_i32, %c0_i32_0, %c0_i32_1 : i32, i32, i32
  }
  func.func @transform_2(%arg0: i32) -> (i32, i32) {
    %c0_i32 = arith.constant 0 : i32
    %c0_i32_0 = arith.constant 0 : i32
    %c0_i32_1 = arith.constant 0 : i32
    return %c0_i32, %c0_i32_0 : i32, i32
  }
  func.func @transform_3(%arg0: i32) -> (i32, i32) {
    %c0_i32 = arith.constant 0 : i32
    %c0_i32_0 = arith.constant 0 : i32
    return %arg0, %c0_i32 : i32, i32
  }
  func.func @transform_4(%arg0: i32) -> (i32, i32, i32) {
    %c0_i32 = arith.constant 0 : i32
    %c0_i32_0 = arith.constant 0 : i32
    %c0_i32_1 = arith.constant 0 : i32
    return %arg0, %c0_i32, %c0_i32_0 : i32, i32, i32
  }
}

module attributes {stable_mosaic.version = 11 : i64} {
  func.func @_bn_relu_kernel(%arg0: i32, %arg1: memref<512x128xf32, #tpu.memory_space<vmem>>, %arg2: memref<2x128xf32, #tpu.memory_space<vmem>>, %arg3: memref<1x128xf32, #tpu.memory_space<vmem>>, %arg4: memref<1x128xf32, #tpu.memory_space<vmem>>, %arg5: memref<512x128xf32, #tpu.memory_space<vmem>>) attributes {dimension_semantics = [#tpu.dimension_semantics<parallel>], iteration_bounds = array<i64: 1>, scalar_prefetch = 0 : i64, scratch_operands = 0 : i64, tpu.core_type = #tpu.core_type<tc>, window_params = [{transform_indices = @transform_0, window_bounds = array<i64: 512, 128>}, {pipeline_mode = #tpu.pipeline_mode<synchronous>, transform_indices = @transform_1, window_bounds = array<i64: 2, 128>}, {pipeline_mode = #tpu.pipeline_mode<synchronous>, transform_indices = @transform_2, window_bounds = array<i64: 1, 128>}, {pipeline_mode = #tpu.pipeline_mode<synchronous>, transform_indices = @transform_3, window_bounds = array<i64: 1, 128>}, {transform_indices = @transform_4, window_bounds = array<i64: 512, 128>}]} {
    %c0 = arith.constant 0 : index
    %c0_0 = arith.constant 0 : index
    %0 = vector.load %arg2[%c0, %c0_0] : memref<2x128xf32, #tpu.memory_space<vmem>>, vector<1x128xf32>
    %cst = arith.constant 0.001953125 : f32
    %1 = vector.broadcast %cst : f32 to vector<1x128xf32>
    %2 = arith.mulf %0, %1 : vector<1x128xf32>
    %c1 = arith.constant 1 : index
    %c0_1 = arith.constant 0 : index
    %3 = vector.load %arg2[%c1, %c0_1] : memref<2x128xf32, #tpu.memory_space<vmem>>, vector<1x128xf32>
    %cst_2 = arith.constant 0.001953125 : f32
    %4 = vector.broadcast %cst_2 : f32 to vector<1x128xf32>
    %5 = arith.mulf %3, %4 : vector<1x128xf32>
    %6 = arith.mulf %2, %2 : vector<1x128xf32>
    %7 = arith.subf %5, %6 : vector<1x128xf32>
    %c0_3 = arith.constant 0 : index
    %c0_4 = arith.constant 0 : index
    %8 = vector.load %arg3[%c0_3, %c0_4] : memref<1x128xf32, #tpu.memory_space<vmem>>, vector<1x128xf32>
    %cst_5 = arith.constant 9.99999974E-6 : f32
    %9 = vector.broadcast %cst_5 : f32 to vector<1x128xf32>
    %10 = arith.addf %7, %9 : vector<1x128xf32>
    %11 = math.rsqrt %10 : vector<1x128xf32>
    %12 = arith.mulf %8, %11 : vector<1x128xf32>
    %c0_6 = arith.constant 0 : index
    %c0_7 = arith.constant 0 : index
    %13 = vector.load %arg4[%c0_6, %c0_7] : memref<1x128xf32, #tpu.memory_space<vmem>>, vector<1x128xf32>
    %14 = arith.mulf %2, %12 : vector<1x128xf32>
    %15 = arith.subf %13, %14 : vector<1x128xf32>
    %c0_8 = arith.constant 0 : index
    %c0_9 = arith.constant 0 : index
    %16 = vector.load %arg1[%c0_8, %c0_9] : memref<512x128xf32, #tpu.memory_space<vmem>>, vector<512x128xf32>
    %17 = vector.broadcast %12 : vector<1x128xf32> to vector<512x128xf32>
    %18 = arith.mulf %16, %17 : vector<512x128xf32>
    %19 = vector.broadcast %15 : vector<1x128xf32> to vector<512x128xf32>
    %20 = arith.addf %18, %19 : vector<512x128xf32>
    %cst_10 = arith.constant 0.000000e+00 : f32
    %21 = vector.broadcast %cst_10 : f32 to vector<512x128xf32>
    %22 = arith.maximumf %20, %21 : vector<512x128xf32>
    %c0_11 = arith.constant 0 : index
    %c0_12 = arith.constant 0 : index
    %23 = vector.load %arg5[%c0_11, %c0_12] : memref<512x128xf32, #tpu.memory_space<vmem>>, vector<512x128xf32>
    tpu.vector_store %arg5[%c0_11, %c0_12], %22 {strides = array<i32>} : memref<512x128xf32, #tpu.memory_space<vmem>>, vector<512x128xf32>,
    return
  }
  func.func @transform_0(%arg0: i32) -> (i32, i32) {
    %c0_i32 = arith.constant 0 : i32
    %c0_i32_0 = arith.constant 0 : i32
    return %arg0, %c0_i32 : i32, i32
  }
  func.func @transform_1(%arg0: i32) -> (i32, i32) {
    %c0_i32 = arith.constant 0 : i32
    %c0_i32_0 = arith.constant 0 : i32
    %c0_i32_1 = arith.constant 0 : i32
    return %c0_i32, %c0_i32_0 : i32, i32
  }
  func.func @transform_2(%arg0: i32) -> (i32, i32) {
    %c0_i32 = arith.constant 0 : i32
    %c0_i32_0 = arith.constant 0 : i32
    %c0_i32_1 = arith.constant 0 : i32
    return %c0_i32, %c0_i32_0 : i32, i32
  }
  func.func @transform_3(%arg0: i32) -> (i32, i32) {
    %c0_i32 = arith.constant 0 : i32
    %c0_i32_0 = arith.constant 0 : i32
    %c0_i32_1 = arith.constant 0 : i32
    return %c0_i32, %c0_i32_0 : i32, i32
  }
  func.func @transform_4(%arg0: i32) -> (i32, i32) {
    %c0_i32 = arith.constant 0 : i32
    %c0_i32_0 = arith.constant 0 : i32
    return %arg0, %c0_i32 : i32, i32
  }
}

</mosaic_0001>

<llo_original>
// kernel: conv_block_forward.3
$region0: #{conv_block_forward.3}
  #allocation0 [shape = 'u32[]', space=smem, size = 0x4, offset = 0x4, fixed_abs, tag = 'smem constant byte address 0x4 - core index']
  #allocation1 [shape = 'u32[144,128]{1,0:T(1,128)}', space=vmem, size = 0x12000, scoped, tag = 'internal scratch']
  %s0 = inlined_call_operand.vmem [shape: f32[512,128], index: 0, kind: input, shape index: {}, may-alias: {0,4}]
  %s1 = inlined_call_operand.vmem [shape: f32[2,128], index: 1, kind: input, shape index: {}]
  %s2 = inlined_call_operand.vmem [shape: f32[1,128], index: 2, kind: input, shape index: {}]
  %s3 = inlined_call_operand.vmem [shape: f32[1,128], index: 3, kind: input, shape index: {}]
  %s4 = inlined_call_operand.vmem [shape: f32[512,128], index: 4, kind: output, shape index: {}, may-alias: {0,4}]
  %s5 = sld [smem:[#allocation0]]
  $region26: #{conv_block_forward.3} parent=0
    _
  %s7 = ssub.s32 1, %s5
  %s8 = scalar_select 0, %s7, %s5
  // Predicated region
  $region2: #{conv_block_forward.3} parent=0 // pred_check
    _
  $region3: #{conv_block_forward.3} parent=0 // pred_check_branch
    %10 = sbr.rel (0) target = $region5
  $region4: #{conv_block_forward.3} parent=0 // pred_region
    _
  $region5: #{conv_block_forward.3} parent=0 // pred_fallthru
    _
  // Predicated region
  $region6: #{conv_block_forward.3} parent=0 // pred_check
    _
  $region7: #{conv_block_forward.3} parent=0 // pred_check_branch
    %12 = sbr.rel (0) target = $region9
  $region8: #{conv_block_forward.3} parent=0 // pred_region
    _
  $region9: #{conv_block_forward.3} parent=0 // pred_fallthru
    _
  // Predicated region
  $region10: #{conv_block_forward.3} parent=0 // pred_check
    _
  $region11: #{conv_block_forward.3} parent=0 // pred_check_branch
    %14 = sbr.rel (0) target = $region13
  $region12: #{conv_block_forward.3} parent=0 // pred_region
    _
  $region13: #{conv_block_forward.3} parent=0 // pred_fallthru
    _
  // Predicated region
  $region14: #{conv_block_forward.3} parent=0 // pred_check
    _
  $region15: #{conv_block_forward.3} parent=0 // pred_check_branch
    %16 = sbr.rel (0) target = $region17
  $region16: #{conv_block_forward.3} parent=0 // pred_region
    _
  $region17: #{conv_block_forward.3} parent=0 // pred_fallthru
    _
  %v17 = vld [vmem:[%s1] sm:$0x1]
  %v18 = vmul.f32 %v17, 0.001953125
  %v19 = vld [vmem:[%s1 + $0x1] sm:$0x1]
  %v20 = vmul.f32 %v19, 0.001953125
  %v21 = vmul.f32 %v18, %v18
  %v22 = vsub.f32 %v20, %v21
  %v23 = vld [vmem:[%s2] sm:$0x1]
  %v24 = vadd.f32 %v22, 1e-05
  %v25 = vrsqrt.pop %v24
  %v26 = vmul.f32 %v23, %v25
  %v27 = vld [vmem:[%s3] sm:$0x1]
  %v28 = vmul.f32 %v18, %v26
  %v29 = vsub.f32 %v27, %v28
  %v30 = vld [vmem:[%s0] sm:$0xff]
  %v31 = vld [vmem:[%s0 + $0x8] sm:$0xff]
  %v32 = vld [vmem:[%s0 + $0x10] sm:$0xff]
  %v33 = vld [vmem:[%s0 + $0x18] sm:$0xff]
  %v34 = vld [vmem:[%s0 + $0x20] sm:$0xff]
  %v35 = vld [vmem:[%s0 + $0x28] sm:$0xff]
  %v36 = vld [vmem:[%s0 + $0x30] sm:$0xff]
  %v37 = vld [vmem:[%s0 + $0x38] sm:$0xff]
  %v38 = vld [vmem:[%s0 + $0x40] sm:$0xff]
  %v39 = vld [vmem:[%s0 + $0x48] sm:$0xff]
  %v40 = vld [vmem:[%s0 + $0x50] sm:$0xff]
  %v41 = vld [vmem:[%s0 + $0x58] sm:$0xff]
  %v42 = vld [vmem:[%s0 + $0x60] sm:$0xff]
  %v43 = vld [vmem:[%s0 + $0x68] sm:$0xff]
  %v44 = vld [vmem:[%s0 + $0x70] sm:$0xff]
  %v45 = vld [vmem:[%s0 + $0x78] sm:$0xff]
  %v46 = vld [vmem:[%s0 + $0x80] sm:$0xff]
  %v47 = vld [vmem:[%s0 + $0x88] sm:$0xff]
  %v48 = vld [vmem:[%s0 + $0x90] sm:$0xff]
  %v49 = vld [vmem:[%s0 + $0x98] sm:$0xff]
  %v50 = vld [vmem:[%s0 + $0xa0] sm:$0xff]
  %v51 = vld [vmem:[%s0 + $0xa8] sm:$0xff]
  %v52 = vld [vmem:[%s0 + $0xb0] sm:$0xff]
  %v53 = vld [vmem:[%s0 + $0xb8] sm:$0xff]
  %v54 = vld [vmem:[%s0 + $0xc0] sm:$0xff]
  %v55 = vld [vmem:[%s0 + $0xc8] sm:$0xff]
  %v56 = vld [vmem:[%s0 + $0xd0] sm:$0xff]
  %v57 = vld [vmem:[%s0 + $0xd8] sm:$0xff]
  %v58 = vld [vmem:[%s0 + $0xe0] sm:$0xff]
  %v59 = vld [vmem:[%s0 + $0xe8] sm:$0xff]
  %v60 = vld [vmem:[%s0 + $0xf0] sm:$0xff]
  %v61 = vld [vmem:[%s0 + $0xf8] sm:$0xff]
  %v62 = vld [vmem:[%s0 + $0x100] sm:$0xff]
  %v63 = vld [vmem:[%s0 + $0x108] sm:$0xff]
  %v64 = vld [vmem:[%s0 + $0x110] sm:$0xff]
  %v65 = vld [vmem:[%s0 + $0x118] sm:$0xff]
  %v66 = vld [vmem:[%s0 + $0x120] sm:$0xff]
  %v67 = vld [vmem:[%s0 + $0x128] sm:$0xff]
  %v68 = vld [vmem:[%s0 + $0x130] sm:$0xff]
  %v69 = vld [vmem:[%s0 + $0x138] sm:$0xff]
  %v70 = vld [vmem:[%s0 + $0x140] sm:$0xff]
  %v71 = vld [vmem:[%s0 + $0x148] sm:$0xff]
  %v72 = vld [vmem:[%s0 + $0x150] sm:$0xff]
  %v73 = vld [vmem:[%s0 + $0x158] sm:$0xff]
  %v74 = vld [vmem:[%s0 + $0x160] sm:$0xff]
  %v75 = vld [vmem:[%s0 + $0x168] sm:$0xff]
  %v76 = vld [vmem:[%s0 + $0x170] sm:$0xff]
  %v77 = vld [vmem:[%s0 + $0x178] sm:$0xff]
  %v78 = vld [vmem:[%s0 + $0x180] sm:$0xff]
  %v79 = vld [vmem:[%s0 + $0x188] sm:$0xff]
  %v80 = vld [vmem:[%s0 + $0x190] sm:$0xff]
  %v81 = vld [vmem:[%s0 + $0x198] sm:$0xff]
  %v82 = vld [vmem:[%s0 + $0x1a0] sm:$0xff]
  %v83 = vld [vmem:[%s0 + $0x1a8] sm:$0xff]
  %v84 = vld [vmem:[%s0 + $0x1b0] sm:$0xff]
  %v85 = vld [vmem:[%s0 + $0x1b8] sm:$0xff]
  %v86 = vld [vmem:[%s0 + $0x1c0] sm:$0xff]
  %v87 = vld [vmem:[%s0 + $0x1c8] sm:$0xff]
  %v88 = vld [vmem:[%s0 + $0x1d0] sm:$0xff]
  %v89 = vld [vmem:[%s0 + $0x1d8] sm:$0xff]
  %v90 = vld [vmem:[%s0 + $0x1e0] sm:$0xff]
  %v91 = vld [vmem:[%s0 + $0x1e8] sm:$0xff]
  %v92 = vld [vmem:[%s0 + $0x1f0] sm:$0xff]
  %v93 = vld [vmem:[%s0 + $0x1f8] sm:$0xff]
  %v95 = vlaneseq
  %v96 = vshrl.u32 %v95, 7
  %v97 = vsub.s32 0, %v96
  %v98 = vrot.slane %v26, %v97
  %v100 = vmul.f32 %v30, %v98
  %v101 = vmul.f32 %v31, %v98
  %v102 = vmul.f32 %v32, %v98
  %v103 = vmul.f32 %v33, %v98
  %v104 = vmul.f32 %v34, %v98
  %v105 = vmul.f32 %v35, %v98
  %v106 = vmul.f32 %v36, %v98
  %v107 = vmul.f32 %v37, %v98
  %v108 = vmul.f32 %v38, %v98
  %v109 = vmul.f32 %v39, %v98
  %v110 = vmul.f32 %v40, %v98
  %v111 = vmul.f32 %v41, %v98
  %v112 = vmul.f32 %v42, %v98
  %v113 = vmul.f32 %v43, %v98
  %v114 = vmul.f32 %v44, %v98
  %v115 = vmul.f32 %v45, %v98
  %v116 = vmul.f32 %v46, %v98
  %v117 = vmul.f32 %v47, %v98
  %v118 = vmul.f32 %v48, %v98
  %v119 = vmul.f32 %v49, %v98
  %v120 = vmul.f32 %v50, %v98
  %v121 = vmul.f32 %v51, %v98
  %v122 = vmul.f32 %v52, %v98
  %v123 = vmul.f32 %v53, %v98
  %v124 = vmul.f32 %v54, %v98
  %v125 = vmul.f32 %v55, %v98
  %v126 = vmul.f32 %v56, %v98
  %v127 = vmul.f32 %v57, %v98
  %v128 = vmul.f32 %v58, %v98
  %v129 = vmul.f32 %v59, %v98
  %v130 = vmul.f32 %v60, %v98
  %v131 = vmul.f32 %v61, %v98
  %v132 = vmul.f32 %v62, %v98
  %v133 = vmul.f32 %v63, %v98
  %v134 = vmul.f32 %v64, %v98
  %v135 = vmul.f32 %v65, %v98
  %v136 = vmul.f32 %v66, %v98
  %v137 = vmul.f32 %v67, %v98
  %v138 = vmul.f32 %v68, %v98
  %v139 = vmul.f32 %v69, %v98
  %v140 = vmul.f32 %v70, %v98
  %v141 = vmul.f32 %v71, %v98
  %v142 = vmul.f32 %v72, %v98
  %v143 = vmul.f32 %v73, %v98
  %v144 = vmul.f32 %v74, %v98
  %v145 = vmul.f32 %v75, %v98
  %v146 = vmul.f32 %v76, %v98
  %v147 = vmul.f32 %v77, %v98
  %v148 = vmul.f32 %v78, %v98
  %v149 = vmul.f32 %v79, %v98
  %v150 = vmul.f32 %v80, %v98
  %v151 = vmul.f32 %v81, %v98
  %v152 = vmul.f32 %v82, %v98
  %v153 = vmul.f32 %v83, %v98
  %v154 = vmul.f32 %v84, %v98
  %v155 = vmul.f32 %v85, %v98
  %v156 = vmul.f32 %v86, %v98
  %v157 = vmul.f32 %v87, %v98
  %v158 = vmul.f32 %v88, %v98
  %v159 = vmul.f32 %v89, %v98
  %v160 = vmul.f32 %v90, %v98
  %v161 = vmul.f32 %v91, %v98
  %v162 = vmul.f32 %v92, %v98
  %v163 = vmul.f32 %v93, %v98
  %v165 = vlaneseq
  %v166 = vshrl.u32 %v165, 7
  %v167 = vsub.s32 0, %v166
  %v168 = vrot.slane %v29, %v167
  %v170 = vadd.f32 %v100, %v168
  %v171 = vadd.f32 %v101, %v168
  %v172 = vadd.f32 %v102, %v168
  %v173 = vadd.f32 %v103, %v168
  %v174 = vadd.f32 %v104, %v168
  %v175 = vadd.f32 %v105, %v168
  %v176 = vadd.f32 %v106, %v168
  %v177 = vadd.f32 %v107, %v168
  %v178 = vadd.f32 %v108, %v168
  %v179 = vadd.f32 %v109, %v168
  %v180 = vadd.f32 %v110, %v168
  %v181 = vadd.f32 %v111, %v168
  %v182 = vadd.f32 %v112, %v168
  %v183 = vadd.f32 %v113, %v168
  %v184 = vadd.f32 %v114, %v168
  %v185 = vadd.f32 %v115, %v168
  %v186 = vadd.f32 %v116, %v168
  %v187 = vadd.f32 %v117, %v168
  %v188 = vadd.f32 %v118, %v168
  %v189 = vadd.f32 %v119, %v168
  %v190 = vadd.f32 %v120, %v168
  %v191 = vadd.f32 %v121, %v168
  %v192 = vadd.f32 %v122, %v168
  %v193 = vadd.f32 %v123, %v168
  %v194 = vadd.f32 %v124, %v168
  %v195 = vadd.f32 %v125, %v168
  %v196 = vadd.f32 %v126, %v168
  %v197 = vadd.f32 %v127, %v168
  %v198 = vadd.f32 %v128, %v168
  %v199 = vadd.f32 %v129, %v168
  %v200 = vadd.f32 %v130, %v168
  %v201 = vadd.f32 %v131, %v168
  %v202 = vadd.f32 %v132, %v168
  %v203 = vadd.f32 %v133, %v168
  %v204 = vadd.f32 %v134, %v168
  %v205 = vadd.f32 %v135, %v168
  %v206 = vadd.f32 %v136, %v168
  %v207 = vadd.f32 %v137, %v168
  %v208 = vadd.f32 %v138, %v168
  %v209 = vadd.f32 %v139, %v168
  %v210 = vadd.f32 %v140, %v168
  %v211 = vadd.f32 %v141, %v168
  %v212 = vadd.f32 %v142, %v168
  %v213 = vadd.f32 %v143, %v168
  %v214 = vadd.f32 %v144, %v168
  %v215 = vadd.f32 %v145, %v168
  %v216 = vadd.f32 %v146, %v168
  %v217 = vadd.f32 %v147, %v168
  %v218 = vadd.f32 %v148, %v168
  %v219 = vadd.f32 %v149, %v168
  %v220 = vadd.f32 %v150, %v168
  %v221 = vadd.f32 %v151, %v168
  %v222 = vadd.f32 %v152, %v168
  %v223 = vadd.f32 %v153, %v168
  %v224 = vadd.f32 %v154, %v168
  %v225 = vadd.f32 %v155, %v168
  %v226 = vadd.f32 %v156, %v168
  %v227 = vadd.f32 %v157, %v168
  %v228 = vadd.f32 %v158, %v168
  %v229 = vadd.f32 %v159, %v168
  %v230 = vadd.f32 %v160, %v168
  %v231 = vadd.f32 %v161, %v168
  %v232 = vadd.f32 %v162, %v168
  %v233 = vadd.f32 %v163, %v168
  %v234 = vmax.f32 %v170, 0.0
  %v235 = vmax.f32 %v171, 0.0
  %v236 = vmax.f32 %v172, 0.0
  %v237 = vmax.f32 %v173, 0.0
  %v238 = vmax.f32 %v174, 0.0
  %v239 = vmax.f32 %v175, 0.0
  %v240 = vmax.f32 %v176, 0.0
  %v241 = vmax.f32 %v177, 0.0
  %v242 = vmax.f32 %v178, 0.0
  %v243 = vmax.f32 %v179, 0.0
  %v244 = vmax.f32 %v180, 0.0
  %v245 = vmax.f32 %v181, 0.0
  %v246 = vmax.f32 %v182, 0.0
  %v247 = vmax.f32 %v183, 0.0
  %v248 = vmax.f32 %v184, 0.0
  %v249 = vmax.f32 %v185, 0.0
  %v250 = vmax.f32 %v186, 0.0
  %v251 = vmax.f32 %v187, 0.0
  %v252 = vmax.f32 %v188, 0.0
  %v253 = vmax.f32 %v189, 0.0
  %v254 = vmax.f32 %v190, 0.0
  %v255 = vmax.f32 %v191, 0.0
  %v256 = vmax.f32 %v192, 0.0
  %v257 = vmax.f32 %v193, 0.0
  %v258 = vmax.f32 %v194, 0.0
  %v259 = vmax.f32 %v195, 0.0
  %v260 = vmax.f32 %v196, 0.0
  %v261 = vmax.f32 %v197, 0.0
  %v262 = vmax.f32 %v198, 0.0
  %v263 = vmax.f32 %v199, 0.0
  %v264 = vmax.f32 %v200, 0.0
  %v265 = vmax.f32 %v201, 0.0
  %v266 = vmax.f32 %v202, 0.0
  %v267 = vmax.f32 %v203, 0.0
  %v268 = vmax.f32 %v204, 0.0
  %v269 = vmax.f32 %v205, 0.0
  %v270 = vmax.f32 %v206, 0.0
  %v271 = vmax.f32 %v207, 0.0
  %v272 = vmax.f32 %v208, 0.0
  %v273 = vmax.f32 %v209, 0.0
  %v274 = vmax.f32 %v210, 0.0
  %v275 = vmax.f32 %v211, 0.0
  %v276 = vmax.f32 %v212, 0.0
  %v277 = vmax.f32 %v213, 0.0
  %v278 = vmax.f32 %v214, 0.0
  %v279 = vmax.f32 %v215, 0.0
  %v280 = vmax.f32 %v216, 0.0
  %v281 = vmax.f32 %v217, 0.0
  %v282 = vmax.f32 %v218, 0.0
  %v283 = vmax.f32 %v219, 0.0
  %v284 = vmax.f32 %v220, 0.0
  %v285 = vmax.f32 %v221, 0.0
  %v286 = vmax.f32 %v222, 0.0
  %v287 = vmax.f32 %v223, 0.0
  %v288 = vmax.f32 %v224, 0.0
  %v289 = vmax.f32 %v225, 0.0
  %v290 = vmax.f32 %v226, 0.0
  %v291 = vmax.f32 %v227, 0.0
  %v292 = vmax.f32 %v228, 0.0
  %v293 = vmax.f32 %v229, 0.0
  %v294 = vmax.f32 %v230, 0.0
  %v295 = vmax.f32 %v231, 0.0
  %v296 = vmax.f32 %v232, 0.0
  %v297 = vmax.f32 %v233, 0.0
  %298 = vst [vmem:[%s4] sm:$0xff] %v234
  %299 = vst [vmem:[%s4 + $0x8] sm:$0xff] %v235
  %300 = vst [vmem:[%s4 + $0x10] sm:$0xff] %v236
  %301 = vst [vmem:[%s4 + $0x18] sm:$0xff] %v237
  %302 = vst [vmem:[%s4 + $0x20] sm:$0xff] %v238
  %303 = vst [vmem:[%s4 + $0x28] sm:$0xff] %v239
  %304 = vst [vmem:[%s4 + $0x30] sm:$0xff] %v240
  %305 = vst [vmem:[%s4 + $0x38] sm:$0xff] %v241
  %306 = vst [vmem:[%s4 + $0x40] sm:$0xff] %v242
  %307 = vst [vmem:[%s4 + $0x48] sm:$0xff] %v243
  %308 = vst [vmem:[%s4 + $0x50] sm:$0xff] %v244
  %309 = vst [vmem:[%s4 + $0x58] sm:$0xff] %v245
  %310 = vst [vmem:[%s4 + $0x60] sm:$0xff] %v246
  %311 = vst [vmem:[%s4 + $0x68] sm:$0xff] %v247
  %312 = vst [vmem:[%s4 + $0x70] sm:$0xff] %v248
  %313 = vst [vmem:[%s4 + $0x78] sm:$0xff] %v249
  %314 = vst [vmem:[%s4 + $0x80] sm:$0xff] %v250
  %315 = vst [vmem:[%s4 + $0x88] sm:$0xff] %v251
  %316 = vst [vmem:[%s4 + $0x90] sm:$0xff] %v252
  %317 = vst [vmem:[%s4 + $0x98] sm:$0xff] %v253
  %318 = vst [vmem:[%s4 + $0xa0] sm:$0xff] %v254
  %319 = vst [vmem:[%s4 + $0xa8] sm:$0xff] %v255
  %320 = vst [vmem:[%s4 + $0xb0] sm:$0xff] %v256
  %321 = vst [vmem:[%s4 + $0xb8] sm:$0xff] %v257
  %322 = vst [vmem:[%s4 + $0xc0] sm:$0xff] %v258
  %323 = vst [vmem:[%s4 + $0xc8] sm:$0xff] %v259
  %324 = vst [vmem:[%s4 + $0xd0] sm:$0xff] %v260
  %325 = vst [vmem:[%s4 + $0xd8] sm:$0xff] %v261
  %326 = vst [vmem:[%s4 + $0xe0] sm:$0xff] %v262
  %327 = vst [vmem:[%s4 + $0xe8] sm:$0xff] %v263
  %328 = vst [vmem:[%s4 + $0xf0] sm:$0xff] %v264
  %329 = vst [vmem:[%s4 + $0xf8] sm:$0xff] %v265
  %330 = vst [vmem:[%s4 + $0x100] sm:$0xff] %v266
  %331 = vst [vmem:[%s4 + $0x108] sm:$0xff] %v267
  %332 = vst [vmem:[%s4 + $0x110] sm:$0xff] %v268
  %333 = vst [vmem:[%s4 + $0x118] sm:$0xff] %v269
  %334 = vst [vmem:[%s4 + $0x120] sm:$0xff] %v270
  %335 = vst [vmem:[%s4 + $0x128] sm:$0xff] %v271
  %336 = vst [vmem:[%s4 + $0x130] sm:$0xff] %v272
  %337 = vst [vmem:[%s4 + $0x138] sm:$0xff] %v273
  %338 = vst [vmem:[%s4 + $0x140] sm:$0xff] %v274
  %339 = vst [vmem:[%s4 + $0x148] sm:$0xff] %v275
  %340 = vst [vmem:[%s4 + $0x150] sm:$0xff] %v276
  %341 = vst [vmem:[%s4 + $0x158] sm:$0xff] %v277
  %342 = vst [vmem:[%s4 + $0x160] sm:$0xff] %v278
  %343 = vst [vmem:[%s4 + $0x168] sm:$0xff] %v279
  %344 = vst [vmem:[%s4 + $0x170] sm:$0xff] %v280
  %345 = vst [vmem:[%s4 + $0x178] sm:$0xff] %v281
  %346 = vst [vmem:[%s4 + $0x180] sm:$0xff] %v282
  %347 = vst [vmem:[%s4 + $0x188] sm:$0xff] %v283
  %348 = vst [vmem:[%s4 + $0x190] sm:$0xff] %v284
  %349 = vst [vmem:[%s4 + $0x198] sm:$0xff] %v285
  %350 = vst [vmem:[%s4 + $0x1a0] sm:$0xff] %v286
  %351 = vst [vmem:[%s4 + $0x1a8] sm:$0xff] %v287
  %352 = vst [vmem:[%s4 + $0x1b0] sm:$0xff] %v288
  %353 = vst [vmem:[%s4 + $0x1b8] sm:$0xff] %v289
  %354 = vst [vmem:[%s4 + $0x1c0] sm:$0xff] %v290
  %355 = vst [vmem:[%s4 + $0x1c8] sm:$0xff] %v291
  %356 = vst [vmem:[%s4 + $0x1d0] sm:$0xff] %v292
  %357 = vst [vmem:[%s4 + $0x1d8] sm:$0xff] %v293
  %358 = vst [vmem:[%s4 + $0x1e0] sm:$0xff] %v294
  %359 = vst [vmem:[%s4 + $0x1e8] sm:$0xff] %v295
  %360 = vst [vmem:[%s4 + $0x1f0] sm:$0xff] %v296
  %361 = vst [vmem:[%s4 + $0x1f8] sm:$0xff] %v297
  // Predicated region
  $region18: #{conv_block_forward.3} parent=0 // pred_check
    _
  $region19: #{conv_block_forward.3} parent=0 // pred_check_branch
    %363 = sbr.rel (0) target = $region21
  $region20: #{conv_block_forward.3} parent=0 // pred_region
    _
  $region21: #{conv_block_forward.3} parent=0 // pred_fallthru
    _
  // Predicated region
  $region22: #{conv_block_forward.3} parent=0 // pred_check
    _
  $region23: #{conv_block_forward.3} parent=0 // pred_check_branch
    %365 = sbr.rel (0) target = $region25
  $region24: #{conv_block_forward.3} parent=0 // pred_region
    _
  $region25: #{conv_block_forward.3} parent=0 // pred_fallthru
    _

// kernel: conv_block_forward.2
$region0: #{conv_block_forward.2}
  #allocation0 [shape = 'u32[]', space=smem, size = 0x4, offset = 0x4, fixed_abs, tag = 'smem constant byte address 0x4 - core index']
  #allocation1 [shape = 'u32[144,128]{1,0:T(1,128)}', space=vmem, size = 0x12000, scoped, tag = 'internal scratch']
  #allocation2 [shape = 'f32[18,18,128]{2,1,0:T(8,128)}', space=vmem, size = 0x36000, scoped, tag = 'scratch operand']
  %s0 = inlined_call_operand.vmem [shape: f32[2,16,16,8], index: 0, kind: input, shape index: {}]
  %s1 = inlined_call_operand.vmem [shape: bf16[9,128,128], index: 1, kind: input, shape index: {}]
  %s2 = inlined_call_operand.vmem [shape: f32[1,128], index: 2, kind: input, shape index: {}]
  %s3 = inlined_call_operand.vmem [shape: f32[512,128], index: 3, kind: output, shape index: {0}]
  %s4 = inlined_call_operand.vmem [shape: f32[2,2,128], index: 4, kind: output, shape index: {1}]
  %5 = xla_tuple %s3, %s4
  %s6 = sld [smem:[#allocation0]]
  $region53: #{conv_block_forward.2} parent=0
    _
  %s8 = ssub.s32 1, %s6
  %s9 = scalar_select 0, %s8, %s6
  loop: start=0, step=1, limit=4
  $region2: #{conv_block_forward.2} parent=0 // loop_pre_header
    _
  $region3: #{conv_block_forward.2} parent=0 // loop_header
    %s11 = sphi 0, %s15
    %p12 = scmp.ge.s32.totalorder %s11, 4
    %s21 = sphi 0, %s23
    %s24 = sphi 0, %s21
    %s25 = sphi 0, %s24
    %s41 = sphi 0, %s25
    %s45 = sphi 0, %s45
    %s47 = sphi 0, %s45
    %s48 = sphi 0, %s47
    %s62 = sphi 0, %s48
    %s66 = sphi 0, %s66
    %s68 = sphi 0, %s66
    %s69 = sphi 0, %s68
    %s83 = sphi 0, %s69
    %s89 = sphi 0, %s91
    %s92 = sphi 0, %s89
    %s93 = sphi 0, %s92
    %s109 = sphi 0, %s93
    %s115 = sphi 0, %s117
    %s118 = sphi 0, %s115
    %s119 = sphi 0, %s118
    %s135 = sphi 0, %s119
  $region4: #{conv_block_forward.2} parent=0 // loop_header_branch
    %14 = sbr.rel (%p12) target = $region8
  $region5: #{conv_block_forward.2} parent=0 // loop_body
    %s16 = ssub.s32 %s11, 1
    %s17 = ssub.s32 %s11, 2
    %s18 = sadd.s32 %s11, 1
    %s19 = ssub.s32 %s11, %s18
    %p20 = scmp.eq.s32.totalorder %s19, 0
    %s22 = sadd.s32 %s21, 1
    %s23 = scalar_select %p20, %s21, %s22
    %p26 = pneg %p20
    %p27 = scmp.eq.s32.totalorder %s11, 1
    %p28 = por %p26, %p27
    %p29 = scmp.ne.s32.totalorder %s21, %s24
    %p30 = scmp.eq.s32.totalorder %s11, 0
    %p31 = por %p29, %p30
    %p32 = scmp.ne.s32.totalorder %s21, %s24
    %p33 = scmp.eq.s32.totalorder %s16, 1
    %p34 = por %p32, %p33
    %p35 = scmp.ne.s32.totalorder %s24, %s25
    %p36 = scmp.eq.s32.totalorder %s16, 0
    %p37 = por %p35, %p36
    %p38 = scmp.ne.s32.totalorder %s24, %s25
    %p39 = scmp.eq.s32.totalorder %s17, 1
    %p40 = por %p38, %p39
    %p42 = scmp.ne.s32.totalorder %s25, %s41
    %p43 = scmp.eq.s32.totalorder %s17, 0
    %p44 = por %p42, %p43
    %s46 = sadd.s32 %s45, 1
    %p49 = scmp.eq.s32.totalorder %s11, 1
    %p50 = scmp.ne.s32.totalorder %s45, %s47
    %p51 = scmp.eq.s32.totalorder %s11, 0
    %p52 = por %p50, %p51
    %p53 = scmp.ne.s32.totalorder %s45, %s47
    %p54 = scmp.eq.s32.totalorder %s16, 1
    %p55 = por %p53, %p54
    %p56 = scmp.ne.s32.totalorder %s47, %s48
    %p57 = scmp.eq.s32.totalorder %s16, 0
    %p58 = por %p56, %p57
    %p59 = scmp.ne.s32.totalorder %s47, %s48
    %p60 = scmp.eq.s32.totalorder %s17, 1
    %p61 = por %p59, %p60
    %p63 = scmp.ne.s32.totalorder %s48, %s62
    %p64 = scmp.eq.s32.totalorder %s17, 0
    %p65 = por %p63, %p64
    %s67 = sadd.s32 %s66, 1
    %p70 = scmp.eq.s32.totalorder %s11, 1
    %p71 = scmp.ne.s32.totalorder %s66, %s68
    %p72 = scmp.eq.s32.totalorder %s11, 0
    %p73 = por %p71, %p72
    %p74 = scmp.ne.s32.totalorder %s66, %s68
    %p75 = scmp.eq.s32.totalorder %s16, 1
    %p76 = por %p74, %p75
    %p77 = scmp.ne.s32.totalorder %s68, %s69
    %p78 = scmp.eq.s32.totalorder %s16, 0
    %p79 = por %p77, %p78
    %p80 = scmp.ne.s32.totalorder %s68, %s69
    %p81 = scmp.eq.s32.totalorder %s17, 1
    %p82 = por %p80, %p81
    %p84 = scmp.ne.s32.totalorder %s69, %s83
    %p85 = scmp.eq.s32.totalorder %s17, 0
    %p86 = por %p84, %p85
    %s87 = ssub.s32 %s11, %s18
    %p88 = scmp.eq.s32.totalorder %s87, 0
    %s90 = sadd.s32 %s89, 1
    %s91 = scalar_select %p88, %s89, %s90
    %p94 = pneg %p88
    %p95 = scmp.eq.s32.totalorder %s11, 1
    %p96 = por %p94, %p95
    %p97 = scmp.ne.s32.totalorder %s89, %s92
    %p98 = scmp.eq.s32.totalorder %s11, 0
    %p99 = por %p97, %p98
    %p100 = scmp.ne.s32.totalorder %s89, %s92
    %p101 = scmp.eq.s32.totalorder %s16, 1
    %p102 = por %p100, %p101
    %p103 = scmp.ne.s32.totalorder %s92, %s93
    %p104 = scmp.eq.s32.totalorder %s16, 0
    %p105 = por %p103, %p104
    %p106 = scmp.ne.s32.totalorder %s92, %s93
    %p107 = scmp.eq.s32.totalorder %s17, 1
    %p108 = por %p106, %p107
    %p110 = scmp.ne.s32.totalorder %s93, %s109
    %p111 = scmp.eq.s32.totalorder %s17, 0
    %p112 = por %p110, %p111
    %s113 = ssub.s32 %s11, %s18
    %p114 = scmp.eq.s32.totalorder %s113, 0
    %s116 = sadd.s32 %s115, 1
    %s117 = scalar_select %p114, %s115, %s116
    %p120 = pneg %p114
    %p121 = scmp.eq.s32.totalorder %s11, 1
    %p122 = por %p120, %p121
    %p123 = scmp.ne.s32.totalorder %s115, %s118
    %p124 = scmp.eq.s32.totalorder %s11, 0
    %p125 = por %p123, %p124
    %p126 = scmp.ne.s32.totalorder %s115, %s118
    %p127 = scmp.eq.s32.totalorder %s16, 1
    %p128 = por %p126, %p127
    %p129 = scmp.ne.s32.totalorder %s118, %s119
    %p130 = scmp.eq.s32.totalorder %s16, 0
    %p131 = por %p129, %p130
    %p132 = scmp.ne.s32.totalorder %s118, %s119
    %p133 = scmp.eq.s32.totalorder %s17, 1
    %p134 = por %p132, %p133
    %p136 = scmp.ne.s32.totalorder %s119, %s135
    %p137 = scmp.eq.s32.totalorder %s17, 0
    %p138 = por %p136, %p137
    %p139 = scmp.le.s32.totalorder 1, %s11
    %p140 = scmp.lt.s32.totalorder %s11, 3
    %p141 = pnand %p139, %p140
    %p142 = pneg %p141
    // Predicated region
    $region9: #{conv_block_forward.2} parent=5 // pred_check
      _
    $region10: #{conv_block_forward.2} parent=5 // pred_check_branch
      %144 = sbr.rel (%p141) target = $region12
    $region11: #{conv_block_forward.2} parent=5 // pred_region
      %s145 = ssub.s32 %s11, 1
      // Predicated region
      $region13: #{conv_block_forward.2} parent=11 // pred_check
        %p146 = pneg %p58
      $region14: #{conv_block_forward.2} parent=11 // pred_check_branch
        %148 = sbr.rel (%p146) target = $region16
      $region15: #{conv_block_forward.2} parent=11 // pred_region
        _
      $region16: #{conv_block_forward.2} parent=11 // pred_fallthru
        _
      // Predicated region
      $region17: #{conv_block_forward.2} parent=11 // pred_check
        %p149 = pneg %p79
      $region18: #{conv_block_forward.2} parent=11 // pred_check_branch
        %151 = sbr.rel (%p149) target = $region20
      $region19: #{conv_block_forward.2} parent=11 // pred_region
        _
      $region20: #{conv_block_forward.2} parent=11 // pred_fallthru
        _
    $region12: #{conv_block_forward.2} parent=5 // pred_fallthru
      _
    %p152 = scmp.lt.s32.totalorder %s11, 2
    // Predicated region
    $region21: #{conv_block_forward.2} parent=5 // pred_check
      %p153 = pneg %p152
    $region22: #{conv_block_forward.2} parent=5 // pred_check_branch
      %155 = sbr.rel (%p153) target = $region24
    $region23: #{conv_block_forward.2} parent=5 // pred_region
      // Predicated region
      $region25: #{conv_block_forward.2} parent=23 // pred_check
        %p156 = pneg %p31
      $region26: #{conv_block_forward.2} parent=23 // pred_check_branch
        %158 = sbr.rel (%p156) target = $region28
      $region27: #{conv_block_forward.2} parent=23 // pred_region
        %p159 = scmp.lt.s32.totalorder %s11, 1
        %s160 = scalar_select %p159, %s11, 1
        %s161 = smul.addr %s160, 32
        %s162 = smul.addr %s161, 8
        %s163 = scalar_lea.vmem %s0, %s162
      $region28: #{conv_block_forward.2} parent=23 // pred_fallthru
        _
    $region24: #{conv_block_forward.2} parent=5 // pred_fallthru
      _
    %p164 = scmp.le.s32.totalorder 1, %s11
    %p165 = scmp.lt.s32.totalorder %s11, 3
    %p166 = pnand %p164, %p165
    %p167 = pneg %p166
    // Predicated region
    $region29: #{conv_block_forward.2} parent=5 // pred_check
      _
    $region30: #{conv_block_forward.2} parent=5 // pred_check_branch
      %169 = sbr.rel (%p166) target = $region32
    $region31: #{conv_block_forward.2} parent=5 // pred_region
      %s170 = ssub.s32 %s11, 1
      %p171 = scmp.lt.s32.totalorder %s16, 1
      %s172 = scalar_select %p171, %s16, 1
      %s173 = smul.addr %s172, 32
      %s174 = smul.addr %s173, 8
      %s175 = scalar_lea.vmem %s0, %s174
      %p176 = pneg %p37
      %p177 = pneg %p34
      %p178 = pneg %p58
      %p179 = pneg %p55
      %p180 = pneg %p79
      %p181 = pneg %p76
      %p182 = pneg %p105
      %p183 = pneg %p102
      %s184 = smul.u32 32, %s16
      %p185 = scmp.lt.s32.totalorder %s184, 63
      %s186 = scalar_select %p185, %s184, 63
      %s187 = smul.addr %s186, 8
      %s188 = scalar_lea.vmem %s3, %s187
      %p189 = pneg %p131
      %p190 = pneg %p128
      %p191 = scmp.lt.s32.totalorder %s16, 1
      %s192 = scalar_select %p191, %s16, 1
      %s193 = smul.addr %s192, 2
      %s194 = scalar_lea.vmem %s4, %s193
      %p195 = scmp.lt.s32.totalorder %s16, 1
      %s196 = scalar_select %p195, %s16, 1
      %s197 = smul.addr %s196, 32
      %s198 = smul.addr %s197, 8
      %s199 = scalar_lea.vmem %s0, %s198
      %s200 = smul.u32 32, %s16
      %p201 = scmp.lt.s32.totalorder %s200, 63
      %s202 = scalar_select %p201, %s200, 63
      %s203 = smul.addr %s202, 8
      %s204 = scalar_lea.vmem %s3, %s203
      %s205 = smul.u32 32, %s16
      %p206 = scmp.lt.s32.totalorder %s16, 1
      %s207 = scalar_select %p206, %s16, 1
      %s208 = smul.addr %s207, 2
      %s209 = scalar_lea.vmem %s4, %s208
      %v211 = vld [vmem:[%s199] sm:$0xff]
      %v212 = vld [vmem:[%s199 + $0x8] sm:$0xff]
      %v213 = vld [vmem:[%s199 + $0x10] sm:$0xff]
      %v214 = vld [vmem:[%s199 + $0x18] sm:$0xff]
      %v215 = vld [vmem:[%s199 + $0x20] sm:$0xff]
      %v216 = vld [vmem:[%s199 + $0x28] sm:$0xff]
      %v217 = vld [vmem:[%s199 + $0x30] sm:$0xff]
      %v218 = vld [vmem:[%s199 + $0x38] sm:$0xff]
      %v219 = vld [vmem:[%s199 + $0x40] sm:$0xff]
      %v220 = vld [vmem:[%s199 + $0x48] sm:$0xff]
      %v221 = vld [vmem:[%s199 + $0x50] sm:$0xff]
      %v222 = vld [vmem:[%s199 + $0x58] sm:$0xff]
      %v223 = vld [vmem:[%s199 + $0x60] sm:$0xff]
      %v224 = vld [vmem:[%s199 + $0x68] sm:$0xff]
      %v225 = vld [vmem:[%s199 + $0x70] sm:$0xff]
      %v226 = vld [vmem:[%s199 + $0x78] sm:$0xff]
      %v227 = vld [vmem:[%s199 + $0x80] sm:$0xff]
      %v228 = vld [vmem:[%s199 + $0x88] sm:$0xff]
      %v229 = vld [vmem:[%s199 + $0x90] sm:$0xff]
      %v230 = vld [vmem:[%s199 + $0x98] sm:$0xff]
      %v231 = vld [vmem:[%s199 + $0xa0] sm:$0xff]
      %v232 = vld [vmem:[%s199 + $0xa8] sm:$0xff]
      %v233 = vld [vmem:[%s199 + $0xb0] sm:$0xff]
      %v234 = vld [vmem:[%s199 + $0xb8] sm:$0xff]
      %v235 = vld [vmem:[%s199 + $0xc0] sm:$0xff]
      %v236 = vld [vmem:[%s199 + $0xc8] sm:$0xff]
      %v237 = vld [vmem:[%s199 + $0xd0] sm:$0xff]
      %v238 = vld [vmem:[%s199 + $0xd8] sm:$0xff]
      %v239 = vld [vmem:[%s199 + $0xe0] sm:$0xff]
      %v240 = vld [vmem:[%s199 + $0xe8] sm:$0xff]
      %v241 = vld [vmem:[%s199 + $0xf0] sm:$0xff]
      %v242 = vld [vmem:[%s199 + $0xf8] sm:$0xff]
      %s243 = scalar_lea.vmem [#allocation2], 24
      %vm244 = vcmask 64512
      %245 = vst.msk [vmem:[%s243 + $0x1] sm:$0xff] %vm244, %v211
      %246 = vst.msk [vmem:[%s243 + $0x9] sm:$0xff] %vm244, %v212
      %247 = vst.msk [vmem:[%s243 + $0x19] sm:$0xff] %vm244, %v213
      %248 = vst.msk [vmem:[%s243 + $0x21] sm:$0xff] %vm244, %v214
      %249 = vst.msk [vmem:[%s243 + $0x31] sm:$0xff] %vm244, %v215
      %250 = vst.msk [vmem:[%s243 + $0x39] sm:$0xff] %vm244, %v216
      %251 = vst.msk [vmem:[%s243 + $0x49] sm:$0xff] %vm244, %v217
      %252 = vst.msk [vmem:[%s243 + $0x51] sm:$0xff] %vm244, %v218
      %253 = vst.msk [vmem:[%s243 + $0x61] sm:$0xff] %vm244, %v219
      %254 = vst.msk [vmem:[%s243 + $0x69] sm:$0xff] %vm244, %v220
      %255 = vst.msk [vmem:[%s243 + $0x79] sm:$0xff] %vm244, %v221
      %256 = vst.msk [vmem:[%s243 + $0x81] sm:$0xff] %vm244, %v222
      %257 = vst.msk [vmem:[%s243 + $0x91] sm:$0xff] %vm244, %v223
      %258 = vst.msk [vmem:[%s243 + $0x99] sm:$0xff] %vm244, %v224
      %259 = vst.msk [vmem:[%s243 + $0xa9] sm:$0xff] %vm244, %v225
      %260 = vst.msk [vmem:[%s243 + $0xb1] sm:$0xff] %vm244, %v226
      %261 = vst.msk [vmem:[%s243 + $0xc1] sm:$0xff] %vm244, %v227
      %262 = vst.msk [vmem:[%s243 + $0xc9] sm:$0xff] %vm244, %v228
      %263 = vst.msk [vmem:[%s243 + $0xd9] sm:$0xff] %vm244, %v229
      %264 = vst.msk [vmem:[%s243 + $0xe1] sm:$0xff] %vm244, %v230
      %265 = vst.msk [vmem:[%s243 + $0xf1] sm:$0xff] %vm244, %v231
      %266 = vst.msk [vmem:[%s243 + $0xf9] sm:$0xff] %vm244, %v232
      %267 = vst.msk [vmem:[%s243 + $0x109] sm:$0xff] %vm244, %v233
      %268 = vst.msk [vmem:[%s243 + $0x111] sm:$0xff] %vm244, %v234
      %269 = vst.msk [vmem:[%s243 + $0x121] sm:$0xff] %vm244, %v235
      %270 = vst.msk [vmem:[%s243 + $0x129] sm:$0xff] %vm244, %v236
      %271 = vst.msk [vmem:[%s243 + $0x139] sm:$0xff] %vm244, %v237
      %272 = vst.msk [vmem:[%s243 + $0x141] sm:$0xff] %vm244, %v238
      %273 = vst.msk [vmem:[%s243 + $0x151] sm:$0xff] %vm244, %v239
      %274 = vst.msk [vmem:[%s243 + $0x159] sm:$0xff] %vm244, %v240
      %275 = vst.msk [vmem:[%s243 + $0x169] sm:$0xff] %vm244, %v241
      %276 = vst.msk [vmem:[%s243 + $0x171] sm:$0xff] %vm244, %v242
      %vm277 = vcmask 1047616
      %278 = vst.msk [vmem:[%s243 + $0x1] sm:$0xff] %vm277, 0.0
      %279 = vst.msk [vmem:[%s243 + $0x9] sm:$0xff] %vm277, 0.0
      %280 = vst.msk [vmem:[%s243 + $0x19] sm:$0xff] %vm277, 0.0
      %281 = vst.msk [vmem:[%s243 + $0x21] sm:$0xff] %vm277, 0.0
      %282 = vst.msk [vmem:[%s243 + $0x31] sm:$0xff] %vm277, 0.0
      %283 = vst.msk [vmem:[%s243 + $0x39] sm:$0xff] %vm277, 0.0
      %284 = vst.msk [vmem:[%s243 + $0x49] sm:$0xff] %vm277, 0.0
      %285 = vst.msk [vmem:[%s243 + $0x51] sm:$0xff] %vm277, 0.0
      %286 = vst.msk [vmem:[%s243 + $0x61] sm:$0xff] %vm277, 0.0
      %287 = vst.msk [vmem:[%s243 + $0x69] sm:$0xff] %vm277, 0.0
      %288 = vst.msk [vmem:[%s243 + $0x79] sm:$0xff] %vm277, 0.0
      %289 = vst.msk [vmem:[%s243 + $0x81] sm:$0xff] %vm277, 0.0
      %290 = vst.msk [vmem:[%s243 + $0x91] sm:$0xff] %vm277, 0.0
      %291 = vst.msk [vmem:[%s243 + $0x99] sm:$0xff] %vm277, 0.0
      %292 = vst.msk [vmem:[%s243 + $0xa9] sm:$0xff] %vm277, 0.0
      %293 = vst.msk [vmem:[%s243 + $0xb1] sm:$0xff] %vm277, 0.0
      %294 = vst.msk [vmem:[%s243 + $0xc1] sm:$0xff] %vm277, 0.0
      %295 = vst.msk [vmem:[%s243 + $0xc9] sm:$0xff] %vm277, 0.0
      %296 = vst.msk [vmem:[%s243 + $0xd9] sm:$0xff] %vm277, 0.0
      %297 = vst.msk [vmem:[%s243 + $0xe1] sm:$0xff] %vm277, 0.0
      %298 = vst.msk [vmem:[%s243 + $0xf1] sm:$0xff] %vm277, 0.0
      %299 = vst.msk [vmem:[%s243 + $0xf9] sm:$0xff] %vm277, 0.0
      %300 = vst.msk [vmem:[%s243 + $0x109] sm:$0xff] %vm277, 0.0
      %301 = vst.msk [vmem:[%s243 + $0x111] sm:$0xff] %vm277, 0.0
      %302 = vst.msk [vmem:[%s243 + $0x121] sm:$0xff] %vm277, 0.0
      %303 = vst.msk [vmem:[%s243 + $0x129] sm:$0xff] %vm277, 0.0
      %304 = vst.msk [vmem:[%s243 + $0x139] sm:$0xff] %vm277, 0.0
      %305 = vst.msk [vmem:[%s243 + $0x141] sm:$0xff] %vm277, 0.0
      %306 = vst.msk [vmem:[%s243 + $0x151] sm:$0xff] %vm277, 0.0
      %307 = vst.msk [vmem:[%s243 + $0x159] sm:$0xff] %vm277, 0.0
      %308 = vst.msk [vmem:[%s243 + $0x169] sm:$0xff] %vm277, 0.0
      %309 = vst.msk [vmem:[%s243 + $0x171] sm:$0xff] %vm277, 0.0
      %310 = vst [vmem:[#allocation2] sm:$0xff] 0.0
      %311 = vst [vmem:[#allocation2 + $0x8] sm:$0xff] 0.0
      %312 = vst [vmem:[#allocation2 + $0x10] sm:$0x3] 0.0
      %s313 = scalar_lea.vmem [#allocation2], 408
      %314 = vst [vmem:[%s313] sm:$0xff] 0.0
      %315 = vst [vmem:[%s313 + $0x8] sm:$0xff] 0.0
      %316 = vst [vmem:[%s313 + $0x10] sm:$0x3] 0.0
      %317 = vst [vmem:[%s243] sm:$0x1] 0.0
      %318 = vst [vmem:[%s243 + $0x18] sm:$0x1] 0.0
      %319 = vst [vmem:[%s243 + $0x30] sm:$0x1] 0.0
      %320 = vst [vmem:[%s243 + $0x48] sm:$0x1] 0.0
      %321 = vst [vmem:[%s243 + $0x60] sm:$0x1] 0.0
      %322 = vst [vmem:[%s243 + $0x78] sm:$0x1] 0.0
      %323 = vst [vmem:[%s243 + $0x90] sm:$0x1] 0.0
      %324 = vst [vmem:[%s243 + $0xa8] sm:$0x1] 0.0
      %325 = vst [vmem:[%s243 + $0xc0] sm:$0x1] 0.0
      %326 = vst [vmem:[%s243 + $0xd8] sm:$0x1] 0.0
      %327 = vst [vmem:[%s243 + $0xf0] sm:$0x1] 0.0
      %328 = vst [vmem:[%s243 + $0x108] sm:$0x1] 0.0
      %329 = vst [vmem:[%s243 + $0x120] sm:$0x1] 0.0
      %330 = vst [vmem:[%s243 + $0x138] sm:$0x1] 0.0
      %331 = vst [vmem:[%s243 + $0x150] sm:$0x1] 0.0
      %332 = vst [vmem:[%s243 + $0x168] sm:$0x1] 0.0
      %333 = vst [vmem:[%s243 + $0x11] sm:$0x1] 0.0
      %334 = vst [vmem:[%s243 + $0x29] sm:$0x1] 0.0
      %335 = vst [vmem:[%s243 + $0x41] sm:$0x1] 0.0
      %336 = vst [vmem:[%s243 + $0x59] sm:$0x1] 0.0
      %337 = vst [vmem:[%s243 + $0x71] sm:$0x1] 0.0
      %338 = vst [vmem:[%s243 + $0x89] sm:$0x1] 0.0
      %339 = vst [vmem:[%s243 + $0xa1] sm:$0x1] 0.0
      %340 = vst [vmem:[%s243 + $0xb9] sm:$0x1] 0.0
      %341 = vst [vmem:[%s243 + $0xd1] sm:$0x1] 0.0
      %342 = vst [vmem:[%s243 + $0xe9] sm:$0x1] 0.0
      %343 = vst [vmem:[%s243 + $0x101] sm:$0x1] 0.0
      %344 = vst [vmem:[%s243 + $0x119] sm:$0x1] 0.0
      %345 = vst [vmem:[%s243 + $0x131] sm:$0x1] 0.0
      %346 = vst [vmem:[%s243 + $0x149] sm:$0x1] 0.0
      %347 = vst [vmem:[%s243 + $0x161] sm:$0x1] 0.0
      %348 = vst [vmem:[%s243 + $0x179] sm:$0x1] 0.0
      %v349 = vld [vmem:[#allocation2] sm:$0xff]
      %v350 = vld [vmem:[#allocation2 + $0x8] sm:$0xff]
      %v351 = vld [vmem:[#allocation2 + $0x18] sm:$0xff]
      %v352 = vld [vmem:[#allocation2 + $0x20] sm:$0xff]
      %v353 = vld [vmem:[#allocation2 + $0x30] sm:$0xff]
      %v354 = vld [vmem:[#allocation2 + $0x38] sm:$0xff]
      %v355 = vld [vmem:[#allocation2 + $0x48] sm:$0xff]
      %v356 = vld [vmem:[#allocation2 + $0x50] sm:$0xff]
      %v357 = vld [vmem:[#allocation2 + $0x60] sm:$0xff]
      %v358 = vld [vmem:[#allocation2 + $0x68] sm:$0xff]
      %v359 = vld [vmem:[#allocation2 + $0x78] sm:$0xff]
      %v360 = vld [vmem:[#allocation2 + $0x80] sm:$0xff]
      %v361 = vld [vmem:[#allocation2 + $0x90] sm:$0xff]
      %v362 = vld [vmem:[#allocation2 + $0x98] sm:$0xff]
      %v363 = vld [vmem:[#allocation2 + $0xa8] sm:$0xff]
      %v364 = vld [vmem:[#allocation2 + $0xb0] sm:$0xff]
      %v365 = vld [vmem:[#allocation2 + $0xc0] sm:$0xff]
      %v366 = vld [vmem:[#allocation2 + $0xc8] sm:$0xff]
      %v367 = vld [vmem:[#allocation2 + $0xd8] sm:$0xff]
      %v368 = vld [vmem:[#allocation2 + $0xe0] sm:$0xff]
      %v369 = vld [vmem:[#allocation2 + $0xf0] sm:$0xff]
      %v370 = vld [vmem:[#allocation2 + $0xf8] sm:$0xff]
      %v371 = vld [vmem:[#allocation2 + $0x108] sm:$0xff]
      %v372 = vld [vmem:[#allocation2 + $0x110] sm:$0xff]
      %v373 = vld [vmem:[#allocation2 + $0x120] sm:$0xff]
      %v374 = vld [vmem:[#allocation2 + $0x128] sm:$0xff]
      %v375 = vld [vmem:[#allocation2 + $0x138] sm:$0xff]
      %v376 = vld [vmem:[#allocation2 + $0x140] sm:$0xff]
      %v377 = vld [vmem:[#allocation2 + $0x150] sm:$0xff]
      %v378 = vld [vmem:[#allocation2 + $0x158] sm:$0xff]
      %v379 = vld [vmem:[#allocation2 + $0x168] sm:$0xff]
      %v380 = vld [vmem:[#allocation2 + $0x170] sm:$0xff]
      %v381 = vpack.c.bf16 %v350, %v349
      %v382 = vpack.c.bf16 %v352, %v351
      %v383 = vpack.c.bf16 %v354, %v353
      %v384 = vpack.c.bf16 %v356, %v355
      %v385 = vpack.c.bf16 %v358, %v357
      %v386 = vpack.c.bf16 %v360, %v359
      %v387 = vpack.c.bf16 %v362, %v361
      %v388 = vpack.c.bf16 %v364, %v363
      %v389 = vpack.c.bf16 %v366, %v365
      %v390 = vpack.c.bf16 %v368, %v367
      %v391 = vpack.c.bf16 %v370, %v369
      %v392 = vpack.c.bf16 %v372, %v371
      %v393 = vpack.c.bf16 %v374, %v373
      %v394 = vpack.c.bf16 %v376, %v375
      %v395 = vpack.c.bf16 %v378, %v377
      %v396 = vpack.c.bf16 %v380, %v379
      %v397 = vld [vmem:[%s1] sm:$0xf]
      %v398 = vld [vmem:[%s1 + $0x4] sm:$0xf]
      %v399 = vld [vmem:[%s1 + $0x8] sm:$0xf]
      %v400 = vld [vmem:[%s1 + $0xc] sm:$0xf]
      %v401 = vld [vmem:[%s1 + $0x10] sm:$0xf]
      %v402 = vld [vmem:[%s1 + $0x14] sm:$0xf]
      %v403 = vld [vmem:[%s1 + $0x18] sm:$0xf]
      %v404 = vld [vmem:[%s1 + $0x1c] sm:$0xf]
      %v405 = vld [vmem:[%s1 + $0x20] sm:$0xf]
      %v406 = vld [vmem:[%s1 + $0x24] sm:$0xf]
      %v407 = vld [vmem:[%s1 + $0x28] sm:$0xf]
      %v408 = vld [vmem:[%s1 + $0x2c] sm:$0xf]
      %v409 = vld [vmem:[%s1 + $0x30] sm:$0xf]
      %v410 = vld [vmem:[%s1 + $0x34] sm:$0xf]
      %v411 = vld [vmem:[%s1 + $0x38] sm:$0xf]
      %v412 = vld [vmem:[%s1 + $0x3c] sm:$0xf]
      %v413 = vld [vmem:[#allocation2 + $0x1] sm:$0xff]
      %v414 = vld [vmem:[#allocation2 + $0x9] sm:$0xff]
      %v415 = vld [vmem:[#allocation2 + $0x19] sm:$0xff]
      %v416 = vld [vmem:[#allocation2 + $0x21] sm:$0xff]
      %v417 = vld [vmem:[#allocation2 + $0x31] sm:$0xff]
      %v418 = vld [vmem:[#allocation2 + $0x39] sm:$0xff]
      %v419 = vld [vmem:[#allocation2 + $0x49] sm:$0xff]
      %v420 = vld [vmem:[#allocation2 + $0x51] sm:$0xff]
      %v421 = vld [vmem:[#allocation2 + $0x61] sm:$0xff]
      %v422 = vld [vmem:[#allocation2 + $0x69] sm:$0xff]
      %v423 = vld [vmem:[#allocation2 + $0x79] sm:$0xff]
      %v424 = vld [vmem:[#allocation2 + $0x81] sm:$0xff]
      %v425 = vld [vmem:[#allocation2 + $0x91] sm:$0xff]
      %v426 = vld [vmem:[#allocation2 + $0x99] sm:$0xff]
      %v427 = vld [vmem:[#allocation2 + $0xa9] sm:$0xff]
      %v428 = vld [vmem:[#allocation2 + $0xb1] sm:$0xff]
      %v429 = vld [vmem:[#allocation2 + $0xc1] sm:$0xff]
      %v430 = vld [vmem:[#allocation2 + $0xc9] sm:$0xff]
      %v431 = vld [vmem:[#allocation2 + $0xd9] sm:$0xff]
      %v432 = vld [vmem:[#allocation2 + $0xe1] sm:$0xff]
      %v433 = vld [vmem:[#allocation2 + $0xf1] sm:$0xff]
      %v434 = vld [vmem:[#allocation2 + $0xf9] sm:$0xff]
      %v435 = vld [vmem:[#allocation2 + $0x109] sm:$0xff]
      %v436 = vld [vmem:[#allocation2 + $0x111] sm:$0xff]
      %v437 = vld [vmem:[#allocation2 + $0x121] sm:$0xff]
      %v438 = vld [vmem:[#allocation2 + $0x129] sm:$0xff]
      %v439 = vld [vmem:[#allocation2 + $0x139] sm:$0xff]
      %v440 = vld [vmem:[#allocation2 + $0x141] sm:$0xff]
      %v441 = vld [vmem:[#allocation2 + $0x151] sm:$0xff]
      %v442 = vld [vmem:[#allocation2 + $0x159] sm:$0xff]
      %v443 = vld [vmem:[#allocation2 + $0x169] sm:$0xff]
      %v444 = vld [vmem:[#allocation2 + $0x171] sm:$0xff]
      %v445 = vpack.c.bf16 %v414, %v413
      %v446 = vpack.c.bf16 %v416, %v415
      %v447 = vpack.c.bf16 %v418, %v417
      %v448 = vpack.c.bf16 %v420, %v419
      %v449 = vpack.c.bf16 %v422, %v421
      %v450 = vpack.c.bf16 %v424, %v423
      %v451 = vpack.c.bf16 %v426, %v425
      %v452 = vpack.c.bf16 %v428, %v427
      %v453 = vpack.c.bf16 %v430, %v429
      %v454 = vpack.c.bf16 %v432, %v431
      %v455 = vpack.c.bf16 %v434, %v433
      %v456 = vpack.c.bf16 %v436, %v435
      %v457 = vpack.c.bf16 %v438, %v437
      %v458 = vpack.c.bf16 %v440, %v439
      %v459 = vpack.c.bf16 %v442, %v441
      %v460 = vpack.c.bf16 %v444, %v443
      %s461 = scalar_lea.vmem %s1, 64
      %v462 = vld [vmem:[%s461] sm:$0xf]
      %v463 = vld [vmem:[%s461 + $0x4] sm:$0xf]
      %v464 = vld [vmem:[%s461 + $0x8] sm:$0xf]
      %v465 = vld [vmem:[%s461 + $0xc] sm:$0xf]
      %v466 = vld [vmem:[%s461 + $0x10] sm:$0xf]
      %v467 = vld [vmem:[%s461 + $0x14] sm:$0xf]
      %v468 = vld [vmem:[%s461 + $0x18] sm:$0xf]
      %v469 = vld [vmem:[%s461 + $0x1c] sm:$0xf]
      %v470 = vld [vmem:[%s461 + $0x20] sm:$0xf]
      %v471 = vld [vmem:[%s461 + $0x24] sm:$0xf]
      %v472 = vld [vmem:[%s461 + $0x28] sm:$0xf]
      %v473 = vld [vmem:[%s461 + $0x2c] sm:$0xf]
      %v474 = vld [vmem:[%s461 + $0x30] sm:$0xf]
      %v475 = vld [vmem:[%s461 + $0x34] sm:$0xf]
      %v476 = vld [vmem:[%s461 + $0x38] sm:$0xf]
      %v477 = vld [vmem:[%s461 + $0x3c] sm:$0xf]
      %v494 = vunpack.c.l.b16 %v462
      %v495 = vunpack.c.l.b16 %v463
      %v496 = vunpack.c.l.b16 %v464
      %v497 = vunpack.c.l.b16 %v465
      %v498 = vunpack.c.l.b16 %v466
      %v499 = vunpack.c.l.b16 %v467
      %v500 = vunpack.c.l.b16 %v468
      %v501 = vunpack.c.l.b16 %v469
      %v502 = vunpack.c.l.b16 %v470
      %v503 = vunpack.c.l.b16 %v471
      %v504 = vunpack.c.l.b16 %v472
      %v505 = vunpack.c.l.b16 %v473
      %v506 = vunpack.c.l.b16 %v474
      %v507 = vunpack.c.l.b16 %v475
      %v508 = vunpack.c.l.b16 %v476
      %v509 = vunpack.c.l.b16 %v477
      %v510 = vpack.c.b16 %v495, %v494
      %v511 = vpack.c.b16 %v497, %v496
      %v512 = vpack.c.b16 %v499, %v498
      %v513 = vpack.c.b16 %v501, %v500
      %v514 = vpack.c.b16 %v503, %v502
      %v515 = vpack.c.b16 %v505, %v504
      %v516 = vpack.c.b16 %v507, %v506
      %v517 = vpack.c.b16 %v509, %v508
      %526 = vmatprep.subr.bf16.mxu0 0
      %527 = vmatpush1.bf16.msra.mxu0 %v510
      %528 = vmatprep.subr.bf16.mxu0 0
      %529 = vmatpush1.bf16.msra.mxu0 %v511
      %530 = vmatprep.subr.bf16.mxu0 0
      %531 = vmatpush1.bf16.msra.mxu0 %v512
      %532 = vmatprep.subr.bf16.mxu0 0
      %533 = vmatpush1.bf16.msra.mxu0 %v513
      %534 = vmatprep.subr.bf16.mxu0 0
      %535 = vmatpush1.bf16.msra.mxu0 %v514
      %536 = vmatprep.subr.bf16.mxu0 0
      %537 = vmatpush1.bf16.msra.mxu0 %v515
      %538 = vmatprep.subr.bf16.mxu0 0
      %539 = vmatpush1.bf16.msra.mxu0 %v516
      %540 = vmatprep.subr.bf16.mxu0 0
      %541 = vmatpush1.bf16.msra.mxu0 %v517
      %542 = vmatprep.subr.bf16.mxu0 0
      %543 = vmatpush1.bf16.msra.mxu0 0
      %544 = vmatprep.subr.bf16.mxu0 0
      %545 = vmatpush1.bf16.msra.mxu0 0
      %546 = vmatprep.subr.bf16.mxu0 0
      %547 = vmatpush1.bf16.msra.mxu0 0
      %548 = vmatprep.subr.bf16.mxu0 0
      %549 = vmatpush1.bf16.msra.mxu0 0
      %550 = vmatprep.subr.bf16.mxu0 0
      %551 = vmatpush1.bf16.msra.mxu0 0
      %552 = vmatprep.subr.bf16.mxu0 0
      %553 = vmatpush1.bf16.msra.mxu0 0
      %554 = vmatprep.subr.bf16.mxu0 0
      %555 = vmatpush1.bf16.msra.mxu0 0
      %556 = vmatprep.subr.bf16.mxu0 0
      %557 = vmatpush1.bf16.msra.mxu0 0
      %558 = vmatprep.mubr.bf16.mxu0 0
      %559 = vmatmul.mubr.bf16.gmra.mrb[0].mxu0 %v445
      %v560 = vpop.f32.mrb[0].mxu0
      %v561 = vadd.f32 0.0, %v560
      %v562 = vpop.f32.mrb[0].mxu0
      %v563 = vpop.f32.mrb[0].mxu0
      %v564 = vadd.f32 0.0, %v563
      %v565 = vpop.f32.mrb[0].mxu0
      %566 = vmatprep.mubr.bf16.mxu0 0
      %567 = vmatmul.mubr.bf16.gmra.mrb[0].mxu0 %v446
      %v568 = vpop.f32.mrb[0].mxu0
      %v569 = vadd.f32 0.0, %v568
      %v570 = vpop.f32.mrb[0].mxu0
      %v571 = vpop.f32.mrb[0].mxu0
      %v572 = vadd.f32 0.0, %v571
      %v573 = vpop.f32.mrb[0].mxu0
      %574 = vmatprep.mubr.bf16.mxu0 0
      %575 = vmatmul.mubr.bf16.gmra.mrb[0].mxu0 %v447
      %v576 = vpop.f32.mrb[0].mxu0
      %v577 = vadd.f32 0.0, %v576
      %v578 = vpop.f32.mrb[0].mxu0
      %v579 = vpop.f32.mrb[0].mxu0
      %v580 = vadd.f32 0.0, %v579
      %v581 = vpop.f32.mrb[0].mxu0
      %582 = vmatprep.mubr.bf16.mxu0 0
      %583 = vmatmul.mubr.bf16.gmra.mrb[0].mxu0 %v448
      %v584 = vpop.f32.mrb[0].mxu0
      %v585 = vadd.f32 0.0, %v584
      %v586 = vpop.f32.mrb[0].mxu0
      %v587 = vpop.f32.mrb[0].mxu0
      %v588 = vadd.f32 0.0, %v587
      %v589 = vpop.f32.mrb[0].mxu0
      %590 = vmatprep.mubr.bf16.mxu0 0
      %591 = vmatmul.mubr.bf16.gmra.mrb[0].mxu0 %v449
      %v592 = vpop.f32.mrb[0].mxu0
      %v593 = vadd.f32 0.0, %v592
      %v594 = vpop.f32.mrb[0].mxu0
      %v595 = vpop.f32.mrb[0].mxu0
      %v596 = vadd.f32 0.0, %v595
      %v597 = vpop.f32.mrb[0].mxu0
      %598 = vmatprep.mubr.bf16.mxu0 0
      %599 = vmatmul.mubr.bf16.gmra.mrb[0].mxu0 %v450
      %v600 = vpop.f32.mrb[0].mxu0
      %v601 = vadd.f32 0.0, %v600
      %v602 = vpop.f32.mrb[0].mxu0
      %v603 = vpop.f32.mrb[0].mxu0
      %v604 = vadd.f32 0.0, %v603
      %v605 = vpop.f32.mrb[0].mxu0
      %606 = vmatprep.mubr.bf16.mxu0 0
      %607 = vmatmul.mubr.bf16.gmra.mrb[0].mxu0 %v451
      %v608 = vpop.f32.mrb[0].mxu0
      %v609 = vadd.f32 0.0, %v608
      %v610 = vpop.f32.mrb[0].mxu0
      %v611 = vpop.f32.mrb[0].mxu0
      %v612 = vadd.f32 0.0, %v611
      %v613 = vpop.f32.mrb[0].mxu0
      %614 = vmatprep.mubr.bf16.mxu0 0
      %615 = vmatmul.mubr.bf16.gmra.mrb[0].mxu0 %v452
      %v616 = vpop.f32.mrb[0].mxu0
      %v617 = vadd.f32 0.0, %v616
      %v618 = vpop.f32.mrb[0].mxu0
      %v619 = vpop.f32.mrb[0].mxu0
      %v620 = vadd.f32 0.0, %v619
      %v621 = vpop.f32.mrb[0].mxu0
      %622 = vmatprep.mubr.bf16.mxu0 0
      %623 = vmatmul.mubr.bf16.gmra.mrb[0].mxu0 %v453
      %v624 = vpop.f32.mrb[0].mxu0
      %v625 = vadd.f32 0.0, %v624
      %v626 = vpop.f32.mrb[0].mxu0
      %v627 = vpop.f32.mrb[0].mxu0
      %v628 = vadd.f32 0.0, %v627
      %v629 = vpop.f32.mrb[0].mxu0
      %630 = vmatprep.mubr.bf16.mxu0 0
      %631 = vmatmul.mubr.bf16.gmra.mrb[0].mxu0 %v454
      %v632 = vpop.f32.mrb[0].mxu0
      %v633 = vadd.f32 0.0, %v632
      %v634 = vpop.f32.mrb[0].mxu0
      %v635 = vpop.f32.mrb[0].mxu0
      %v636 = vadd.f32 0.0, %v635
      %v637 = vpop.f32.mrb[0].mxu0
      %638 = vmatprep.mubr.bf16.mxu0 0
      %639 = vmatmul.mubr.bf16.gmra.mrb[0].mxu0 %v455
      %v640 = vpop.f32.mrb[0].mxu0
      %v641 = vadd.f32 0.0, %v640
      %v642 = vpop.f32.mrb[0].mxu0
      %v643 = vpop.f32.mrb[0].mxu0
      %v644 = vadd.f32 0.0, %v643
      %v645 = vpop.f32.mrb[0].mxu0
      %646 = vmatprep.mubr.bf16.mxu0 0
      %647 = vmatmul.mubr.bf16.gmra.mrb[0].mxu0 %v456
      %v648 = vpop.f32.mrb[0].mxu0
      %v649 = vadd.f32 0.0, %v648
      %v650 = vpop.f32.mrb[0].mxu0
      %v651 = vpop.f32.mrb[0].mxu0
      %v652 = vadd.f32 0.0, %v651
      %v653 = vpop.f32.mrb[0].mxu0
      %654 = vmatprep.mubr.bf16.mxu0 0
      %655 = vmatmul.mubr.bf16.gmra.mrb[0].mxu0 %v457
      %v656 = vpop.f32.mrb[0].mxu0
      %v657 = vadd.f32 0.0, %v656
      %v658 = vpop.f32.mrb[0].mxu0
      %v659 = vpop.f32.mrb[0].mxu0
      %v660 = vadd.f32 0.0, %v659
      %v661 = vpop.f32.mrb[0].mxu0
      %662 = vmatprep.mubr.bf16.mxu0 0
      %663 = vmatmul.mubr.bf16.gmra.mrb[0].mxu0 %v458
      %v664 = vpop.f32.mrb[0].mxu0
      %v665 = vadd.f32 0.0, %v664
      %v666 = vpop.f32.mrb[0].mxu0
      %v667 = vpop.f32.mrb[0].mxu0
      %v668 = vadd.f32 0.0, %v667
      %v669 = vpop.f32.mrb[0].mxu0
      %670 = vmatprep.mubr.bf16.mxu0 0
      %671 = vmatmul.mubr.bf16.gmra.mrb[0].mxu0 %v459
      %v672 = vpop.f32.mrb[0].mxu0
      %v673 = vadd.f32 0.0, %v672
      %v674 = vpop.f32.mrb[0].mxu0
      %v675 = vpop.f32.mrb[0].mxu0
      %v676 = vadd.f32 0.0, %v675
      %v677 = vpop.f32.mrb[0].mxu0
      %678 = vmatprep.mubr.bf16.mxu0 0
      %679 = vmatmul.mubr.bf16.gmra.mrb[0].mxu0 %v460
      %v680 = vpop.f32.mrb[0].mxu0
      %v681 = vadd.f32 0.0, %v680
      %v682 = vpop.f32.mrb[0].mxu0
      %v683 = vpop.f32.mrb[0].mxu0
      %v684 = vadd.f32 0.0, %v683
      %v685 = vpop.f32.mrb[0].mxu0
      %686 = vdwg.mxu0
      %v703 = vunpack.c.l.b16 %v397
      %v704 = vunpack.c.l.b16 %v398
      %v705 = vunpack.c.l.b16 %v399
      %v706 = vunpack.c.l.b16 %v400
      %v707 = vunpack.c.l.b16 %v401
      %v708 = vunpack.c.l.b16 %v402
      %v709 = vunpack.c.l.b16 %v403
      %v710 = vunpack.c.l.b16 %v404
      %v711 = vunpack.c.l.b16 %v405
      %v712 = vunpack.c.l.b16 %v406
      %v713 = vunpack.c.l.b16 %v407
      %v714 = vunpack.c.l.b16 %v408
      %v715 = vunpack.c.l.b16 %v409
      %v716 = vunpack.c.l.b16 %v410
      %v717 = vunpack.c.l.b16 %v411
      %v718 = vunpack.c.l.b16 %v412
      %v719 = vpack.c.b16 %v704, %v703
      %v720 = vpack.c.b16 %v706, %v705
      %v721 = vpack.c.b16 %v708, %v707
      %v722 = vpack.c.b16 %v710, %v709
      %v723 = vpack.c.b16 %v712, %v711
      %v724 = vpack.c.b16 %v714, %v713
      %v725 = vpack.c.b16 %v716, %v715
      %v726 = vpack.c.b16 %v718, %v717
      %735 = vmatprep.subr.bf16.mxu0 0
      %736 = vmatpush1.bf16.msra.mxu0 %v719
      %737 = vmatprep.subr.bf16.mxu0 0
      %738 = vmatpush1.bf16.msra.mxu0 %v720
      %739 = vmatprep.subr.bf16.mxu0 0
      %740 = vmatpush1.bf16.msra.mxu0 %v721
      %741 = vmatprep.subr.bf16.mxu0 0
      %742 = vmatpush1.bf16.msra.mxu0 %v722
      %743 = vmatprep.subr.bf16.mxu0 0
      %744 = vmatpush1.bf16.msra.mxu0 %v723
      %745 = vmatprep.subr.bf16.mxu0 0
      %746 = vmatpush1.bf16.msra.mxu0 %v724
      %747 = vmatprep.subr.bf16.mxu0 0
      %748 = vmatpush1.bf16.msra.mxu0 %v725
      %749 = vmatprep.subr.bf16.mxu0 0
      %750 = vmatpush1.bf16.msra.mxu0 %v726
      %751 = vmatprep.subr.bf16.mxu0 0
      %752 = vmatpush1.bf16.msra.mxu0 0
      %753 = vmatprep.subr.bf16.mxu0 0
      %754 = vmatpush1.bf16.msra.mxu0 0
      %755 = vmatprep.subr.bf16.mxu0 0
      %756 = vmatpush1.bf16.msra.mxu0 0
      %757 = vmatprep.subr.bf16.mxu0 0
      %758 = vmatpush1.bf16.msra.mxu0 0
      %759 = vmatprep.subr.bf16.mxu0 0
      %760 = vmatpush1.bf16.msra.mxu0 0
      %761 = vmatprep.subr.bf16.mxu0 0
      %762 = vmatpush1.bf16.msra.mxu0 0
      %763 = vmatprep.subr.bf16.mxu0 0
      %764 = vmatpush1.bf16.msra.mxu0 0
      %765 = vmatprep.subr.bf16.mxu0 0
      %766 = vmatpush1.bf16.msra.mxu0 0
      %767 = vmatprep.mubr.bf16.mxu0 0
      %768 = vmatmul.mubr.bf16.gmra.mrb[0].mxu0 %v381
      %v769 = vpop.f32.mrb[0].mxu0
      %v770 = vadd.f32 %v561, %v769
      %v771 = vpop.f32.mrb[0].mxu0
      %v772 = vpop.f32.mrb[0].mxu0
      %v773 = vadd.f32 %v564, %v772
      %v774 = vpop.f32.mrb[0].mxu0
      %775 = vmatprep.mubr.bf16.mxu0 0
      %776 = vmatmul.mubr.bf16.gmra.mrb[0].mxu0 %v382
      %v777 = vpop.f32.mrb[0].mxu0
      %v778 = vadd.f32 %v569, %v777
      %v779 = vpop.f32.mrb[0].mxu0
      %v780 = vpop.f32.mrb[0].mxu0
      %v781 = vadd.f32 %v572, %v780
      %v782 = vpop.f32.mrb[0].mxu0
      %783 = vmatprep.mubr.bf16.mxu0 0
      %784 = vmatmul.mubr.bf16.gmra.mrb[0].mxu0 %v383
      %v785 = vpop.f32.mrb[0].mxu0
      %v786 = vadd.f32 %v577, %v785
      %v787 = vpop.f32.mrb[0].mxu0
      %v788 = vpop.f32.mrb[0].mxu0
      %v789 = vadd.f32 %v580, %v788
      %v790 = vpop.f32.mrb[0].mxu0
      %791 = vmatprep.mubr.bf16.mxu0 0
      %792 = vmatmul.mubr.bf16.gmra.mrb[0].mxu0 %v384
      %v793 = vpop.f32.mrb[0].mxu0
      %v794 = vadd.f32 %v585, %v793
      %v795 = vpop.f32.mrb[0].mxu0
      %v796 = vpop.f32.mrb[0].mxu0
      %v797 = vadd.f32 %v588, %v796
      %v798 = vpop.f32.mrb[0].mxu0
      %799 = vmatprep.mubr.bf16.mxu0 0
      %800 = vmatmul.mubr.bf16.gmra.mrb[0].mxu0 %v385
      %v801 = vpop.f32.mrb[0].mxu0
      %v802 = vadd.f32 %v593, %v801
      %v803 = vpop.f32.mrb[0].mxu0
      %v804 = vpop.f32.mrb[0].mxu0
      %v805 = vadd.f32 %v596, %v804
      %v806 = vpop.f32.mrb[0].mxu0
      %807 = vmatprep.mubr.bf16.mxu0 0
      %808 = vmatmul.mubr.bf16.gmra.mrb[0].mxu0 %v386
      %v809 = vpop.f32.mrb[0].mxu0
      %v810 = vadd.f32 %v601, %v809
      %v811 = vpop.f32.mrb[0].mxu0
      %v812 = vpop.f32.mrb[0].mxu0
      %v813 = vadd.f32 %v604, %v812
      %v814 = vpop.f32.mrb[0].mxu0
      %815 = vmatprep.mubr.bf16.mxu0 0
      %816 = vmatmul.mubr.bf16.gmra.mrb[0].mxu0 %v387
      %v817 = vpop.f32.mrb[0].mxu0
      %v818 = vadd.f32 %v609, %v817
      %v819 = vpop.f32.mrb[0].mxu0
      %v820 = vpop.f32.mrb[0].mxu0
      %v821 = vadd.f32 %v612, %v820
      %v822 = vpop.f32.mrb[0].mxu0
      %823 = vmatprep.mubr.bf16.mxu0 0
      %824 = vmatmul.mubr.bf16.gmra.mrb[0].mxu0 %v388
      %v825 = vpop.f32.mrb[0].mxu0
      %v826 = vadd.f32 %v617, %v825
      %v827 = vpop.f32.mrb[0].mxu0
      %v828 = vpop.f32.mrb[0].mxu0
      %v829 = vadd.f32 %v620, %v828
      %v830 = vpop.f32.mrb[0].mxu0
      %831 = vmatprep.mubr.bf16.mxu0 0
      %832 = vmatmul.mubr.bf16.gmra.mrb[0].mxu0 %v389
      %v833 = vpop.f32.mrb[0].mxu0
      %v834 = vadd.f32 %v625, %v833
      %v835 = vpop.f32.mrb[0].mxu0
      %v836 = vpop.f32.mrb[0].mxu0
      %v837 = vadd.f32 %v628, %v836
      %v838 = vpop.f32.mrb[0].mxu0
      %839 = vmatprep.mubr.bf16.mxu0 0
      %840 = vmatmul.mubr.bf16.gmra.mrb[0].mxu0 %v390
      %v841 = vpop.f32.mrb[0].mxu0
      %v842 = vadd.f32 %v633, %v841
      %v843 = vpop.f32.mrb[0].mxu0
      %v844 = vpop.f32.mrb[0].mxu0
      %v845 = vadd.f32 %v636, %v844
      %v846 = vpop.f32.mrb[0].mxu0
      %847 = vmatprep.mubr.bf16.mxu0 0
      %848 = vmatmul.mubr.bf16.gmra.mrb[0].mxu0 %v391
      %v849 = vpop.f32.mrb[0].mxu0
      %v850 = vadd.f32 %v641, %v849
      %v851 = vpop.f32.mrb[0].mxu0
      %v852 = vpop.f32.mrb[0].mxu0
      %v853 = vadd.f32 %v644, %v852
      %v854 = vpop.f32.mrb[0].mxu0
      %855 = vmatprep.mubr.bf16.mxu0 0
      %856 = vmatmul.mubr.bf16.gmra.mrb[0].mxu0 %v392
      %v857 = vpop.f32.mrb[0].mxu0
      %v858 = vadd.f32 %v649, %v857
      %v859 = vpop.f32.mrb[0].mxu0
      %v860 = vpop.f32.mrb[0].mxu0
      %v861 = vadd.f32 %v652, %v860
      %v862 = vpop.f32.mrb[0].mxu0
      %863 = vmatprep.mubr.bf16.mxu0 0
      %864 = vmatmul.mubr.bf16.gmra.mrb[0].mxu0 %v393
      %v865 = vpop.f32.mrb[0].mxu0
      %v866 = vadd.f32 %v657, %v865
      %v867 = vpop.f32.mrb[0].mxu0
      %v868 = vpop.f32.mrb[0].mxu0
      %v869 = vadd.f32 %v660, %v868
      %v870 = vpop.f32.mrb[0].mxu0
      %871 = vmatprep.mubr.bf16.mxu0 0
      %872 = vmatmul.mubr.bf16.gmra.mrb[0].mxu0 %v394
      %v873 = vpop.f32.mrb[0].mxu0
      %v874 = vadd.f32 %v665, %v873
      %v875 = vpop.f32.mrb[0].mxu0
      %v876 = vpop.f32.mrb[0].mxu0
      %v877 = vadd.f32 %v668, %v876
      %v878 = vpop.f32.mrb[0].mxu0
      %879 = vmatprep.mubr.bf16.mxu0 0
      %880 = vmatmul.mubr.bf16.gmra.mrb[0].mxu0 %v395
      %v881 = vpop.f32.mrb[0].mxu0
      %v882 = vadd.f32 %v673, %v881
      %v883 = vpop.f32.mrb[0].mxu0
      %v884 = vpop.f32.mrb[0].mxu0
      %v885 = vadd.f32 %v676, %v884
      %v886 = vpop.f32.mrb[0].mxu0
      %887 = vmatprep.mubr.bf16.mxu0 0
      %888 = vmatmul.mubr.bf16.gmra.mrb[0].mxu0 %v396
      %v889 = vpop.f32.mrb[0].mxu0
      %v890 = vadd.f32 %v681, %v889
      %v891 = vpop.f32.mrb[0].mxu0
      %v892 = vpop.f32.mrb[0].mxu0
      %v893 = vadd.f32 %v684, %v892
      %v894 = vpop.f32.mrb[0].mxu0
      %895 = vdwg.mxu0
      %v896 = vld [vmem:[#allocation2 + $0x2] sm:$0xff]
      %v897 = vld [vmem:[#allocation2 + $0xa] sm:$0xff]
      %v898 = vld [vmem:[#allocation2 + $0x1a] sm:$0xff]
      %v899 = vld [vmem:[#allocation2 + $0x22] sm:$0xff]
      %v900 = vld [vmem:[#allocation2 + $0x32] sm:$0xff]
      %v901 = vld [vmem:[#allocation2 + $0x3a] sm:$0xff]
      %v902 = vld [vmem:[#allocation2 + $0x4a] sm:$0xff]
      %v903 = vld [vmem:[#allocation2 + $0x52] sm:$0xff]
      %v904 = vld [vmem:[#allocation2 + $0x62] sm:$0xff]
      %v905 = vld [vmem:[#allocation2 + $0x6a] sm:$0xff]
      %v906 = vld [vmem:[#allocation2 + $0x7a] sm:$0xff]
      %v907 = vld [vmem:[#allocation2 + $0x82] sm:$0xff]
      %v908 = vld [vmem:[#allocation2 + $0x92] sm:$0xff]
      %v909 = vld [vmem:[#allocation2 + $0x9a] sm:$0xff]
      %v910 = vld [vmem:[#allocation2 + $0xaa] sm:$0xff]
      %v911 = vld [vmem:[#allocation2 + $0xb2] sm:$0xff]
      %v912 = vld [vmem:[#allocation2 + $0xc2] sm:$0xff]
      %v913 = vld [vmem:[#allocation2 + $0xca] sm:$0xff]
      %v914 = vld [vmem:[#allocation2 + $0xda] sm:$0xff]
      %v915 = vld [vmem:[#allocation2 + $0xe2] sm:$0xff]
      %v916 = vld [vmem:[#allocation2 + $0xf2] sm:$0xff]
      %v917 = vld [vmem:[#allocation2 + $0xfa] sm:$0xff]
      %v918 = vld [vmem:[#allocation2 + $0x10a] sm:$0xff]
      %v919 = vld [vmem:[#allocation2 + $0x112] sm:$0xff]
      %v920 = vld [vmem:[#allocation2 + $0x122] sm:$0xff]
      %v921 = vld [vmem:[#allocation2 + $0x12a] sm:$0xff]
      %v922 = vld [vmem:[#allocation2 + $0x13a] sm:$0xff]
      %v923 = vld [vmem:[#allocation2 + $0x142] sm:$0xff]
      %v924 = vld [vmem:[#allocation2 + $0x152] sm:$0xff]
      %v925 = vld [vmem:[#allocation2 + $0x15a] sm:$0xff]
      %v926 = vld [vmem:[#allocation2 + $0x16a] sm:$0xff]
      %v927 = vld [vmem:[#allocation2 + $0x172] sm:$0xff]
      %v928 = vpack.c.bf16 %v897, %v896
      %v929 = vpack.c.bf16 %v899, %v898
      %v930 = vpack.c.bf16 %v901, %v900
      %v931 = vpack.c.bf16 %v903, %v902
      %v932 = vpack.c.bf16 %v905, %v904
      %v933 = vpack.c.bf16 %v907, %v906
      %v934 = vpack.c.bf16 %v909, %v908
      %v935 = vpack.c.bf16 %v911, %v910
      %v936 = vpack.c.bf16 %v913, %v912
      %v937 = vpack.c.bf16 %v915, %v914
      %v938 = vpack.c.bf16 %v917, %v916
      %v939 = vpack.c.bf16 %v919, %v918
      %v940 = vpack.c.bf16 %v921, %v920
      %v941 = vpack.c.bf16 %v923, %v922
      %v942 = vpack.c.bf16 %v925, %v924
      %v943 = vpack.c.bf16 %v927, %v926
      %s944 = scalar_lea.vmem %s1, 128
      %v945 = vld [vmem:[%s944] sm:$0xf]
      %v946 = vld [vmem:[%s944 + $0x4] sm:$0xf]
      %v947 = vld [vmem:[%s944 + $0x8] sm:$0xf]
      %v948 = vld [vmem:[%s944 + $0xc] sm:$0xf]
      %v949 = vld [vmem:[%s944 + $0x10] sm:$0xf]
      %v950 = vld [vmem:[%s944 + $0x14] sm:$0xf]
      %v951 = vld [vmem:[%s944 + $0x18] sm:$0xf]
      %v952 = vld [vmem:[%s944 + $0x1c] sm:$0xf]
      %v953 = vld [vmem:[%s944 + $0x20] sm:$0xf]
      %v954 = vld [vmem:[%s944 + $0x24] sm:$0xf]
      %v955 = vld [vmem:[%s944 + $0x28] sm:$0xf]
      %v956 = vld [vmem:[%s944 + $0x2c] sm:$0xf]
      %v957 = vld [vmem:[%s944 + $0x30] sm:$0xf]
      %v958 = vld [vmem:[%s944 + $0x34] sm:$0xf]
      %v959 = vld [vmem:[%s944 + $0x38] sm:$0xf]
      %v960 = vld [vmem:[%s944 + $0x3c] sm:$0xf]
      %v977 = vunpack.c.l.b16 %v945
      %v978 = vunpack.c.l.b16 %v946
      %v979 = vunpack.c.l.b16 %v947
      %v980 = vunpack.c.l.b16 %v948
      %v981 = vunpack.c.l.b16 %v949
      %v982 = vunpack.c.l.b16 %v950
      %v983 = vunpack.c.l.b16 %v951
      %v984 = vunpack.c.l.b16 %v952
      %v985 = vunpack.c.l.b16 %v953
      %v986 = vunpack.c.l.b16 %v954
      %v987 = vunpack.c.l.b16 %v955
      %v988 = vunpack.c.l.b16 %v956
      %v989 = vunpack.c.l.b16 %v957
      %v990 = vunpack.c.l.b16 %v958
      %v991 = vunpack.c.l.b16 %v959
      %v992 = vunpack.c.l.b16 %v960
      %v993 = vpack.c.b16 %v978, %v977
      %v994 = vpack.c.b16 %v980, %v979
      %v995 = vpack.c.b16 %v982, %v981
      %v996 = vpack.c.b16 %v984, %v983
      %v997 = vpack.c.b16 %v986, %v985
      %v998 = vpack.c.b16 %v988, %v987
      %v999 = vpack.c.b16 %v990, %v989
      %v1000 = vpack.c.b16 %v992, %v991
      %1009 = vmatprep.subr.bf16.mxu0 0
      %1010 = vmatpush1.bf16.msra.mxu0 %v993
      %1011 = vmatprep.subr.bf16.mxu0 0
      %1012 = vmatpush1.bf16.msra.mxu0 %v994
      %1013 = vmatprep.subr.bf16.mxu0 0
      %1014 = vmatpush1.bf16.msra.mxu0 %v995
      %1015 = vmatprep.subr.bf16.mxu0 0
      %1016 = vmatpush1.bf16.msra.mxu0 %v996
      %1017 = vmatprep.subr.bf16.mxu0 0
      %1018 = vmatpush1.bf16.msra.mxu0 %v997
      %1019 = vmatprep.subr.bf16.mxu0 0
      %1020 = vmatpush1.bf16.msra.mxu0 %v998
      %1021 = vmatprep.subr.bf16.mxu0 0
      %1022 = vmatpush1.bf16.msra.mxu0 %v999
      %1023 = vmatprep.subr.bf16.mxu0 0
      %1024 = vmatpush1.bf16.msra.mxu0 %v1000
      %1025 = vmatprep.subr.bf16.mxu0 0
      %1026 = vmatpush1.bf16.msra.mxu0 0
      %1027 = vmatprep.subr.bf16.mxu0 0
      %1028 = vmatpush1.bf16.msra.mxu0 0
      %1029 = vmatprep.subr.bf16.mxu0 0
      %1030 = vmatpush1.bf16.msra.mxu0 0
      %1031 = vmatprep.subr.bf16.mxu0 0
      %1032 = vmatpush1.bf16.msra.mxu0 0
      %1033 = vmatprep.subr.bf16.mxu0 0
      %1034 = vmatpush1.bf16.msra.mxu0 0
      %1035 = vmatprep.subr.bf16.mxu0 0
      %1036 = vmatpush1.bf16.msra.mxu0 0
      %1037 = vmatprep.subr.bf16.mxu0 0
      %1038 = vmatpush1.bf16.msra.mxu0 0
      %1039 = vmatprep.subr.bf16.mxu0 0
      %1040 = vmatpush1.bf16.msra.mxu0 0
      %1041 = vmatprep.mubr.bf16.mxu0 0
      %1042 = vmatmul.mubr.bf16.gmra.mrb[0].mxu0 %v928
      %v1043 = vpop.f32.mrb[0].mxu0
      %v1044 = vadd.f32 0.0, %v1043
      %v1045 = vpop.f32.mrb[0].mxu0
      %v1046 = vpop.f32.mrb[0].mxu0
      %v1047 = vadd.f32 0.0, %v1046
      %v1048 = vpop.f32.mrb[0].mxu0
      %1049 = vmatprep.mubr.bf16.mxu0 0
      %1050 = vmatmul.mubr.bf16.gmra.mrb[0].mxu0 %v929
      %v1051 = vpop.f32.mrb[0].mxu0
      %v1052 = vadd.f32 0.0, %v1051
      %v1053 = vpop.f32.mrb[0].mxu0
      %v1054 = vpop.f32.mrb[0].mxu0
      %v1055 = vadd.f32 0.0, %v1054
      %v1056 = vpop.f32.mrb[0].mxu0
      %1057 = vmatprep.mubr.bf16.mxu0 0
      %1058 = vmatmul.mubr.bf16.gmra.mrb[0].mxu0 %v930
      %v1059 = vpop.f32.mrb[0].mxu0
      %v1060 = vadd.f32 0.0, %v1059
      %v1061 = vpop.f32.mrb[0].mxu0
      %v1062 = vpop.f32.mrb[0].mxu0
      %v1063 = vadd.f32 0.0, %v1062
      %v1064 = vpop.f32.mrb[0].mxu0
      %1065 = vmatprep.mubr.bf16.mxu0 0
      %1066 = vmatmul.mubr.bf16.gmra.mrb[0].mxu0 %v931
      %v1067 = vpop.f32.mrb[0].mxu0
      %v1068 = vadd.f32 0.0, %v1067
      %v1069 = vpop.f32.mrb[0].mxu0
      %v1070 = vpop.f32.mrb[0].mxu0
      %v1071 = vadd.f32 0.0, %v1070
      %v1072 = vpop.f32.mrb[0].mxu0
      %1073 = vmatprep.mubr.bf16.mxu0 0
      %1074 = vmatmul.mubr.bf16.gmra.mrb[0].mxu0 %v932
      %v1075 = vpop.f32.mrb[0].mxu0
      %v1076 = vadd.f32 0.0, %v1075
      %v1077 = vpop.f32.mrb[0].mxu0
      %v1078 = vpop.f32.mrb[0].mxu0
      %v1079 = vadd.f32 0.0, %v1078
      %v1080 = vpop.f32.mrb[0].mxu0
      %1081 = vmatprep.mubr.bf16.mxu0 0
      %1082 = vmatmul.mubr.bf16.gmra.mrb[0].mxu0 %v933
      %v1083 = vpop.f32.mrb[0].mxu0
      %v1084 = vadd.f32 0.0, %v1083
      %v1085 = vpop.f32.mrb[0].mxu0
      %v1086 = vpop.f32.mrb[0].mxu0
      %v1087 = vadd.f32 0.0, %v1086
      %v1088 = vpop.f32.mrb[0].mxu0
      %1089 = vmatprep.mubr.bf16.mxu0 0
      %1090 = vmatmul.mubr.bf16.gmra.mrb[0].mxu0 %v934
      %v1091 = vpop.f32.mrb[0].mxu0
      %v1092 = vadd.f32 0.0, %v1091
      %v1093 = vpop.f32.mrb[0].mxu0
      %v1094 = vpop.f32.mrb[0].mxu0
      %v1095 = vadd.f32 0.0, %v1094
      %v1096 = vpop.f32.mrb[0].mxu0
      %1097 = vmatprep.mubr.bf16.mxu0 0
      %1098 = vmatmul.mubr.bf16.gmra.mrb[0].mxu0 %v935
      %v1099 = vpop.f32.mrb[0].mxu0
      %v1100 = vadd.f32 0.0, %v1099
      %v1101 = vpop.f32.mrb[0].mxu0
      %v1102 = vpop.f32.mrb[0].mxu0
      %v1103 = vadd.f32 0.0, %v1102
      %v1104 = vpop.f32.mrb[0].mxu0
      %1105 = vmatprep.mubr.bf16.mxu0 0
      %1106 = vmatmul.mubr.bf16.gmra.mrb[0].mxu0 %v936
      %v1107 = vpop.f32.mrb[0].mxu0
      %v1108 = vadd.f32 0.0, %v1107
      %v1109 = vpop.f32.mrb[0].mxu0
      %v1110 = vpop.f32.mrb[0].mxu0
      %v1111 = vadd.f32 0.0, %v1110
      %v1112 = vpop.f32.mrb[0].mxu0
      %1113 = vmatprep.mubr.bf16.mxu0 0
      %1114 = vmatmul.mubr.bf16.gmra.mrb[0].mxu0 %v937
      %v1115 = vpop.f32.mrb[0].mxu0
      %v1116 = vadd.f32 0.0, %v1115
      %v1117 = vpop.f32.mrb[0].mxu0
      %v1118 = vpop.f32.mrb[0].mxu0
      %v1119 = vadd.f32 0.0, %v1118
      %v1120 = vpop.f32.mrb[0].mxu0
      %1121 = vmatprep.mubr.bf16.mxu0 0
      %1122 = vmatmul.mubr.bf16.gmra.mrb[0].mxu0 %v938
      %v1123 = vpop.f32.mrb[0].mxu0
      %v1124 = vadd.f32 0.0, %v1123
      %v1125 = vpop.f32.mrb[0].mxu0
      %v1126 = vpop.f32.mrb[0].mxu0
      %v1127 = vadd.f32 0.0, %v1126
      %v1128 = vpop.f32.mrb[0].mxu0
      %1129 = vmatprep.mubr.bf16.mxu0 0
      %1130 = vmatmul.mubr.bf16.gmra.mrb[0].mxu0 %v939
      %v1131 = vpop.f32.mrb[0].mxu0
      %v1132 = vadd.f32 0.0, %v1131
      %v1133 = vpop.f32.mrb[0].mxu0
      %v1134 = vpop.f32.mrb[0].mxu0
      %v1135 = vadd.f32 0.0, %v1134
      %v1136 = vpop.f32.mrb[0].mxu0
      %1137 = vmatprep.mubr.bf16.mxu0 0
      %1138 = vmatmul.mubr.bf16.gmra.mrb[0].mxu0 %v940
      %v1139 = vpop.f32.mrb[0].mxu0
      %v1140 = vadd.f32 0.0, %v1139
      %v1141 = vpop.f32.mrb[0].mxu0
      %v1142 = vpop.f32.mrb[0].mxu0
      %v1143 = vadd.f32 0.0, %v1142
      %v1144 = vpop.f32.mrb[0].mxu0
      %1145 = vmatprep.mubr.bf16.mxu0 0
      %1146 = vmatmul.mubr.bf16.gmra.mrb[0].mxu0 %v941
      %v1147 = vpop.f32.mrb[0].mxu0
      %v1148 = vadd.f32 0.0, %v1147
      %v1149 = vpop.f32.mrb[0].mxu0
      %v1150 = vpop.f32.mrb[0].mxu0
      %v1151 = vadd.f32 0.0, %v1150
      %v1152 = vpop.f32.mrb[0].mxu0
      %1153 = vmatprep.mubr.bf16.mxu0 0
      %1154 = vmatmul.mubr.bf16.gmra.mrb[0].mxu0 %v942
      %v1155 = vpop.f32.mrb[0].mxu0
      %v1156 = vadd.f32 0.0, %v1155
      %v1157 = vpop.f32.mrb[0].mxu0
      %v1158 = vpop.f32.mrb[0].mxu0
      %v1159 = vadd.f32 0.0, %v1158
      %v1160 = vpop.f32.mrb[0].mxu0
      %1161 = vmatprep.mubr.bf16.mxu0 0
      %1162 = vmatmul.mubr.bf16.gmra.mrb[0].mxu0 %v943
      %v1163 = vpop.f32.mrb[0].mxu0
      %v1164 = vadd.f32 0.0, %v1163
      %v1165 = vpop.f32.mrb[0].mxu0
      %v1166 = vpop.f32.mrb[0].mxu0
      %v1167 = vadd.f32 0.0, %v1166
      %v1168 = vpop.f32.mrb[0].mxu0
      %1169 = vdwg.mxu0
      %v1170 = vadd.f32 %v770, %v1044
      %v1171 = vadd.f32 %v773, %v1047
      %v1172 = vadd.f32 %v778, %v1052
      %v1173 = vadd.f32 %v781, %v1055
      %v1174 = vadd.f32 %v786, %v1060
      %v1175 = vadd.f32 %v789, %v1063
      %v1176 = vadd.f32 %v794, %v1068
      %v1177 = vadd.f32 %v797, %v1071
      %v1178 = vadd.f32 %v802, %v1076
      %v1179 = vadd.f32 %v805, %v1079
      %v1180 = vadd.f32 %v810, %v1084
      %v1181 = vadd.f32 %v813, %v1087
      %v1182 = vadd.f32 %v818, %v1092
      %v1183 = vadd.f32 %v821, %v1095
      %v1184 = vadd.f32 %v826, %v1100
      %v1185 = vadd.f32 %v829, %v1103
      %v1186 = vadd.f32 %v834, %v1108
      %v1187 = vadd.f32 %v837, %v1111
      %v1188 = vadd.f32 %v842, %v1116
      %v1189 = vadd.f32 %v845, %v1119
      %v1190 = vadd.f32 %v850, %v1124
      %v1191 = vadd.f32 %v853, %v1127
      %v1192 = vadd.f32 %v858, %v1132
      %v1193 = vadd.f32 %v861, %v1135
      %v1194 = vadd.f32 %v866, %v1140
      %v1195 = vadd.f32 %v869, %v1143
      %v1196 = vadd.f32 %v874, %v1148
      %v1197 = vadd.f32 %v877, %v1151
      %v1198 = vadd.f32 %v882, %v1156
      %v1199 = vadd.f32 %v885, %v1159
      %v1200 = vadd.f32 %v890, %v1164
      %v1201 = vadd.f32 %v893, %v1167
      %v1202 = vld [vmem:[%s243] sm:$0xff]
      %v1203 = vld [vmem:[%s243 + $0x8] sm:$0xff]
      %v1204 = vld [vmem:[%s243 + $0x18] sm:$0xff]
      %v1205 = vld [vmem:[%s243 + $0x20] sm:$0xff]
      %v1206 = vld [vmem:[%s243 + $0x30] sm:$0xff]
      %v1207 = vld [vmem:[%s243 + $0x38] sm:$0xff]
      %v1208 = vld [vmem:[%s243 + $0x48] sm:$0xff]
      %v1209 = vld [vmem:[%s243 + $0x50] sm:$0xff]
      %v1210 = vld [vmem:[%s243 + $0x60] sm:$0xff]
      %v1211 = vld [vmem:[%s243 + $0x68] sm:$0xff]
      %v1212 = vld [vmem:[%s243 + $0x78] sm:$0xff]
      %v1213 = vld [vmem:[%s243 + $0x80] sm:$0xff]
      %v1214 = vld [vmem:[%s243 + $0x90] sm:$0xff]
      %v1215 = vld [vmem:[%s243 + $0x98] sm:$0xff]
      %v1216 = vld [vmem:[%s243 + $0xa8] sm:$0xff]
      %v1217 = vld [vmem:[%s243 + $0xb0] sm:$0xff]
      %v1218 = vld [vmem:[%s243 + $0xc0] sm:$0xff]
      %v1219 = vld [vmem:[%s243 + $0xc8] sm:$0xff]
      %v1220 = vld [vmem:[%s243 + $0xd8] sm:$0xff]
      %v1221 = vld [vmem:[%s243 + $0xe0] sm:$0xff]
      %v1222 = vld [vmem:[%s243 + $0xf0] sm:$0xff]
      %v1223 = vld [vmem:[%s243 + $0xf8] sm:$0xff]
      %v1224 = vld [vmem:[%s243 + $0x108] sm:$0xff]
      %v1225 = vld [vmem:[%s243 + $0x110] sm:$0xff]
      %v1226 = vld [vmem:[%s243 + $0x120] sm:$0xff]
      %v1227 = vld [vmem:[%s243 + $0x128] sm:$0xff]
      %v1228 = vld [vmem:[%s243 + $0x138] sm:$0xff]
      %v1229 = vld [vmem:[%s243 + $0x140] sm:$0xff]
      %v1230 = vld [vmem:[%s243 + $0x150] sm:$0xff]
      %v1231 = vld [vmem:[%s243 + $0x158] sm:$0xff]
      %v1232 = vld [vmem:[%s243 + $0x168] sm:$0xff]
      %v1233 = vld [vmem:[%s243 + $0x170] sm:$0xff]
      %v1234 = vpack.c.bf16 %v1203, %v1202
      %v1235 = vpack.c.bf16 %v1205, %v1204
      %v1236 = vpack.c.bf16 %v1207, %v1206
      %v1237 = vpack.c.bf16 %v1209, %v1208
      %v1238 = vpack.c.bf16 %v1211, %v1210
      %v1239 = vpack.c.bf16 %v1213, %v1212
      %v1240 = vpack.c.bf16 %v1215, %v1214
      %v1241 = vpack.c.bf16 %v1217, %v1216
      %v1242 = vpack.c.bf16 %v1219, %v1218
      %v1243 = vpack.c.bf16 %v1221, %v1220
      %v1244 = vpack.c.bf16 %v1223, %v1222
      %v1245 = vpack.c.bf16 %v1225, %v1224
      %v1246 = vpack.c.bf16 %v1227, %v1226
      %v1247 = vpack.c.bf16 %v1229, %v1228
      %v1248 = vpack.c.bf16 %v1231, %v1230
      %v1249 = vpack.c.bf16 %v1233, %v1232
      %s1250 = scalar_lea.vmem %s1, 192
      %v1251 = vld [vmem:[%s1250] sm:$0xf]
      %v1252 = vld [vmem:[%s1250 + $0x4] sm:$0xf]
      %v1253 = vld [vmem:[%s1250 + $0x8] sm:$0xf]
      %v1254 = vld [vmem:[%s1250 + $0xc] sm:$0xf]
      %v1255 = vld [vmem:[%s1250 + $0x10] sm:$0xf]
      %v1256 = vld [vmem:[%s1250 + $0x14] sm:$0xf]
      %v1257 = vld [vmem:[%s1250 + $0x18] sm:$0xf]
      %v1258 = vld [vmem:[%s1250 + $0x1c] sm:$0xf]
      %v1259 = vld [vmem:[%s1250 + $0x20] sm:$0xf]
      %v1260 = vld [vmem:[%s1250 + $0x24] sm:$0xf]
      %v1261 = vld [vmem:[%s1250 + $0x28] sm:$0xf]
      %v1262 = vld [vmem:[%s1250 + $0x2c] sm:$0xf]
      %v1263 = vld [vmem:[%s1250 + $0x30] sm:$0xf]
      %v1264 = vld [vmem:[%s1250 + $0x34] sm:$0xf]
      %v1265 = vld [vmem:[%s1250 + $0x38] sm:$0xf]
      %v1266 = vld [vmem:[%s1250 + $0x3c] sm:$0xf]
      %v1283 = vunpack.c.l.b16 %v1251
      %v1284 = vunpack.c.l.b16 %v1252
      %v1285 = vunpack.c.l.b16 %v1253
      %v1286 = vunpack.c.l.b16 %v1254
      %v1287 = vunpack.c.l.b16 %v1255
      %v1288 = vunpack.c.l.b16 %v1256
      %v1289 = vunpack.c.l.b16 %v1257
      %v1290 = vunpack.c.l.b16 %v1258
      %v1291 = vunpack.c.l.b16 %v1259
      %v1292 = vunpack.c.l.b16 %v1260
      %v1293 = vunpack.c.l.b16 %v1261
      %v1294 = vunpack.c.l.b16 %v1262
      %v1295 = vunpack.c.l.b16 %v1263
      %v1296 = vunpack.c.l.b16 %v1264
      %v1297 = vunpack.c.l.b16 %v1265
      %v1298 = vunpack.c.l.b16 %v1266
      %v1299 = vpack.c.b16 %v1284, %v1283
      %v1300 = vpack.c.b16 %v1286, %v1285
      %v1301 = vpack.c.b16 %v1288, %v1287
      %v1302 = vpack.c.b16 %v1290, %v1289
      %v1303 = vpack.c.b16 %v1292, %v1291
      %v1304 = vpack.c.b16 %v1294, %v1293
      %v1305 = vpack.c.b16 %v1296, %v1295
      %v1306 = vpack.c.b16 %v1298, %v1297
      %1315 = vmatprep.subr.bf16.mxu0 0
      %1316 = vmatpush1.bf16.msra.mxu0 %v1299
      %1317 = vmatprep.subr.bf16.mxu0 0
      %1318 = vmatpush1.bf16.msra.mxu0 %v1300
      %1319 = vmatprep.subr.bf16.mxu0 0
      %1320 = vmatpush1.bf16.msra.mxu0 %v1301
      %1321 = vmatprep.subr.bf16.mxu0 0
      %1322 = vmatpush1.bf16.msra.mxu0 %v1302
      %1323 = vmatprep.subr.bf16.mxu0 0
      %1324 = vmatpush1.bf16.msra.mxu0 %v1303
      %1325 = vmatprep.subr.bf16.mxu0 0
      %1326 = vmatpush1.bf16.msra.mxu0 %v1304
      %1327 = vmatprep.subr.bf16.mxu0 0
      %1328 = vmatpush1.bf16.msra.mxu0 %v1305
      %1329 = vmatprep.subr.bf16.mxu0 0
      %1330 = vmatpush1.bf16.msra.mxu0 %v1306
      %1331 = vmatprep.subr.bf16.mxu0 0
      %1332 = vmatpush1.bf16.msra.mxu0 0
      %1333 = vmatprep.subr.bf16.mxu0 0
      %1334 = vmatpush1.bf16.msra.mxu0 0
      %1335 = vmatprep.subr.bf16.mxu0 0
      %1336 = vmatpush1.bf16.msra.mxu0 0
      %1337 = vmatprep.subr.bf16.mxu0 0
      %1338 = vmatpush1.bf16.msra.mxu0 0
      %1339 = vmatprep.subr.bf16.mxu0 0
      %1340 = vmatpush1.bf16.msra.mxu0 0
      %1341 = vmatprep.subr.bf16.mxu0 0
      %1342 = vmatpush1.bf16.msra.mxu0 0
      %1343 = vmatprep.subr.bf16.mxu0 0
      %1344 = vmatpush1.bf16.msra.mxu0 0
      %1345 = vmatprep.subr.bf16.mxu0 0
      %1346 = vmatpush1.bf16.msra.mxu0 0
      %1347 = vmatprep.mubr.bf16.mxu0 0
      %1348 = vmatmul.mubr.bf16.gmra.mrb[0].mxu0 %v1234
      %v1349 = vpop.f32.mrb[0].mxu0
      %v1350 = vadd.f32 0.0, %v1349
      %v1351 = vpop.f32.mrb[0].mxu0
      %v1352 = vpop.f32.mrb[0].mxu0
      %v1353 = vadd.f32 0.0, %v1352
      %v1354 = vpop.f32.mrb[0].mxu0
      %1355 = vmatprep.mubr.bf16.mxu0 0
      %1356 = vmatmul.mubr.bf16.gmra.mrb[0].mxu0 %v1235
      %v1357 = vpop.f32.mrb[0].mxu0
      %v1358 = vadd.f32 0.0, %v1357
      %v1359 = vpop.f32.mrb[0].mxu0
      %v1360 = vpop.f32.mrb[0].mxu0
      %v1361 = vadd.f32 0.0, %v1360
      %v1362 = vpop.f32.mrb[0].mxu0
      %1363 = vmatprep.mubr.bf16.mxu0 0
      %1364 = vmatmul.mubr.bf16.gmra.mrb[0].mxu0 %v1236
      %v1365 = vpop.f32.mrb[0].mxu0
      %v1366 = vadd.f32 0.0, %v1365
      %v1367 = vpop.f32.mrb[0].mxu0
      %v1368 = vpop.f32.mrb[0].mxu0
      %v1369 = vadd.f32 0.0, %v1368
      %v1370 = vpop.f32.mrb[0].mxu0
      %1371 = vmatprep.mubr.bf16.mxu0 0
      %1372 = vmatmul.mubr.bf16.gmra.mrb[0].mxu0 %v1237
      %v1373 = vpop.f32.mrb[0].mxu0
      %v1374 = vadd.f32 0.0, %v1373
      %v1375 = vpop.f32.mrb[0].mxu0
      %v1376 = vpop.f32.mrb[0].mxu0
      %v1377 = vadd.f32 0.0, %v1376
      %v1378 = vpop.f32.mrb[0].mxu0
      %1379 = vmatprep.mubr.bf16.mxu0 0
      %1380 = vmatmul.mubr.bf16.gmra.mrb[0].mxu0 %v1238
      %v1381 = vpop.f32.mrb[0].mxu0
      %v1382 = vadd.f32 0.0, %v1381
      %v1383 = vpop.f32.mrb[0].mxu0
      %v1384 = vpop.f32.mrb[0].mxu0
      %v1385 = vadd.f32 0.0, %v1384
      %v1386 = vpop.f32.mrb[0].mxu0
      %1387 = vmatprep.mubr.bf16.mxu0 0
      %1388 = vmatmul.mubr.bf16.gmra.mrb[0].mxu0 %v1239
      %v1389 = vpop.f32.mrb[0].mxu0
      %v1390 = vadd.f32 0.0, %v1389
      %v1391 = vpop.f32.mrb[0].mxu0
      %v1392 = vpop.f32.mrb[0].mxu0
      %v1393 = vadd.f32 0.0, %v1392
      %v1394 = vpop.f32.mrb[0].mxu0
      %1395 = vmatprep.mubr.bf16.mxu0 0
      %1396 = vmatmul.mubr.bf16.gmra.mrb[0].mxu0 %v1240
      %v1397 = vpop.f32.mrb[0].mxu0
      %v1398 = vadd.f32 0.0, %v1397
      %v1399 = vpop.f32.mrb[0].mxu0
      %v1400 = vpop.f32.mrb[0].mxu0
      %v1401 = vadd.f32 0.0, %v1400
      %v1402 = vpop.f32.mrb[0].mxu0
      %1403 = vmatprep.mubr.bf16.mxu0 0
      %1404 = vmatmul.mubr.bf16.gmra.mrb[0].mxu0 %v1241
      %v1405 = vpop.f32.mrb[0].mxu0
      %v1406 = vadd.f32 0.0, %v1405
      %v1407 = vpop.f32.mrb[0].mxu0
      %v1408 = vpop.f32.mrb[0].mxu0
      %v1409 = vadd.f32 0.0, %v1408
      %v1410 = vpop.f32.mrb[0].mxu0
      %1411 = vmatprep.mubr.bf16.mxu0 0
      %1412 = vmatmul.mubr.bf16.gmra.mrb[0].mxu0 %v1242
      %v1413 = vpop.f32.mrb[0].mxu0
      %v1414 = vadd.f32 0.0, %v1413
      %v1415 = vpop.f32.mrb[0].mxu0
      %v1416 = vpop.f32.mrb[0].mxu0
      %v1417 = vadd.f32 0.0, %v1416
      %v1418 = vpop.f32.mrb[0].mxu0
      %1419 = vmatprep.mubr.bf16.mxu0 0
      %1420 = vmatmul.mubr.bf16.gmra.mrb[0].mxu0 %v1243
      %v1421 = vpop.f32.mrb[0].mxu0
      %v1422 = vadd.f32 0.0, %v1421
      %v1423 = vpop.f32.mrb[0].mxu0
      %v1424 = vpop.f32.mrb[0].mxu0
      %v1425 = vadd.f32 0.0, %v1424
      %v1426 = vpop.f32.mrb[0].mxu0
      %1427 = vmatprep.mubr.bf16.mxu0 0
      %1428 = vmatmul.mubr.bf16.gmra.mrb[0].mxu0 %v1244
      %v1429 = vpop.f32.mrb[0].mxu0
      %v1430 = vadd.f32 0.0, %v1429
      %v1431 = vpop.f32.mrb[0].mxu0
      %v1432 = vpop.f32.mrb[0].mxu0
      %v1433 = vadd.f32 0.0, %v1432
      %v1434 = vpop.f32.mrb[0].mxu0
      %1435 = vmatprep.mubr.bf16.mxu0 0
      %1436 = vmatmul.mubr.bf16.gmra.mrb[0].mxu0 %v1245
      %v1437 = vpop.f32.mrb[0].mxu0
      %v1438 = vadd.f32 0.0, %v1437
      %v1439 = vpop.f32.mrb[0].mxu0
      %v1440 = vpop.f32.mrb[0].mxu0
      %v1441 = vadd.f32 0.0, %v1440
      %v1442 = vpop.f32.mrb[0].mxu0
      %1443 = vmatprep.mubr.bf16.mxu0 0
      %1444 = vmatmul.mubr.bf16.gmra.mrb[0].mxu0 %v1246
      %v1445 = vpop.f32.mrb[0].mxu0
      %v1446 = vadd.f32 0.0, %v1445
      %v1447 = vpop.f32.mrb[0].mxu0
      %v1448 = vpop.f32.mrb[0].mxu0
      %v1449 = vadd.f32 0.0, %v1448
      %v1450 = vpop.f32.mrb[0].mxu0
      %1451 = vmatprep.mubr.bf16.mxu0 0
      %1452 = vmatmul.mubr.bf16.gmra.mrb[0].mxu0 %v1247
      %v1453 = vpop.f32.mrb[0].mxu0
      %v1454 = vadd.f32 0.0, %v1453
      %v1455 = vpop.f32.mrb[0].mxu0
      %v1456 = vpop.f32.mrb[0].mxu0
      %v1457 = vadd.f32 0.0, %v1456
      %v1458 = vpop.f32.mrb[0].mxu0
      %1459 = vmatprep.mubr.bf16.mxu0 0
      %1460 = vmatmul.mubr.bf16.gmra.mrb[0].mxu0 %v1248
      %v1461 = vpop.f32.mrb[0].mxu0
      %v1462 = vadd.f32 0.0, %v1461
      %v1463 = vpop.f32.mrb[0].mxu0
      %v1464 = vpop.f32.mrb[0].mxu0
      %v1465 = vadd.f32 0.0, %v1464
      %v1466 = vpop.f32.mrb[0].mxu0
      %1467 = vmatprep.mubr.bf16.mxu0 0
      %1468 = vmatmul.mubr.bf16.gmra.mrb[0].mxu0 %v1249
      %v1469 = vpop.f32.mrb[0].mxu0
      %v1470 = vadd.f32 0.0, %v1469
      %v1471 = vpop.f32.mrb[0].mxu0
      %v1472 = vpop.f32.mrb[0].mxu0
      %v1473 = vadd.f32 0.0, %v1472
      %v1474 = vpop.f32.mrb[0].mxu0
      %1475 = vdwg.mxu0
      %v1476 = vadd.f32 %v1170, %v1350
      %v1477 = vadd.f32 %v1171, %v1353
      %v1478 = vadd.f32 %v1172, %v1358
      %v1479 = vadd.f32 %v1173, %v1361
      %v1480 = vadd.f32 %v1174, %v1366
      %v1481 = vadd.f32 %v1175, %v1369
      %v1482 = vadd.f32 %v1176, %v1374
      %v1483 = vadd.f32 %v1177, %v1377
      %v1484 = vadd.f32 %v1178, %v1382
      %v1485 = vadd.f32 %v1179, %v1385
      %v1486 = vadd.f32 %v1180, %v1390
      %v1487 = vadd.f32 %v1181, %v1393
      %v1488 = vadd.f32 %v1182, %v1398
      %v1489 = vadd.f32 %v1183, %v1401
      %v1490 = vadd.f32 %v1184, %v1406
      %v1491 = vadd.f32 %v1185, %v1409
      %v1492 = vadd.f32 %v1186, %v1414
      %v1493 = vadd.f32 %v1187, %v1417
      %v1494 = vadd.f32 %v1188, %v1422
      %v1495 = vadd.f32 %v1189, %v1425
      %v1496 = vadd.f32 %v1190, %v1430
      %v1497 = vadd.f32 %v1191, %v1433
      %v1498 = vadd.f32 %v1192, %v1438
      %v1499 = vadd.f32 %v1193, %v1441
      %v1500 = vadd.f32 %v1194, %v1446
      %v1501 = vadd.f32 %v1195, %v1449
      %v1502 = vadd.f32 %v1196, %v1454
      %v1503 = vadd.f32 %v1197, %v1457
      %v1504 = vadd.f32 %v1198, %v1462
      %v1505 = vadd.f32 %v1199, %v1465
      %v1506 = vadd.f32 %v1200, %v1470
      %v1507 = vadd.f32 %v1201, %v1473
      %v1508 = vld [vmem:[%s243 + $0x1] sm:$0xff]
      %v1509 = vld [vmem:[%s243 + $0x9] sm:$0xff]
      %v1510 = vld [vmem:[%s243 + $0x19] sm:$0xff]
      %v1511 = vld [vmem:[%s243 + $0x21] sm:$0xff]
      %v1512 = vld [vmem:[%s243 + $0x31] sm:$0xff]
      %v1513 = vld [vmem:[%s243 + $0x39] sm:$0xff]
      %v1514 = vld [vmem:[%s243 + $0x49] sm:$0xff]
      %v1515 = vld [vmem:[%s243 + $0x51] sm:$0xff]
      %v1516 = vld [vmem:[%s243 + $0x61] sm:$0xff]
      %v1517 = vld [vmem:[%s243 + $0x69] sm:$0xff]
      %v1518 = vld [vmem:[%s243 + $0x79] sm:$0xff]
      %v1519 = vld [vmem:[%s243 + $0x81] sm:$0xff]
      %v1520 = vld [vmem:[%s243 + $0x91] sm:$0xff]
      %v1521 = vld [vmem:[%s243 + $0x99] sm:$0xff]
      %v1522 = vld [vmem:[%s243 + $0xa9] sm:$0xff]
      %v1523 = vld [vmem:[%s243 + $0xb1] sm:$0xff]
      %v1524 = vld [vmem:[%s243 + $0xc1] sm:$0xff]
      %v1525 = vld [vmem:[%s243 + $0xc9] sm:$0xff]
      %v1526 = vld [vmem:[%s243 + $0xd9] sm:$0xff]
      %v1527 = vld [vmem:[%s243 + $0xe1] sm:$0xff]
      %v1528 = vld [vmem:[%s243 + $0xf1] sm:$0xff]
      %v1529 = vld [vmem:[%s243 + $0xf9] sm:$0xff]
      %v1530 = vld [vmem:[%s243 + $0x109] sm:$0xff]
      %v1531 = vld [vmem:[%s243 + $0x111] sm:$0xff]
      %v1532 = vld [vmem:[%s243 + $0x121] sm:$0xff]
      %v1533 = vld [vmem:[%s243 + $0x129] sm:$0xff]
      %v1534 = vld [vmem:[%s243 + $0x139] sm:$0xff]
      %v1535 = vld [vmem:[%s243 + $0x141] sm:$0xff]
      %v1536 = vld [vmem:[%s243 + $0x151] sm:$0xff]
      %v1537 = vld [vmem:[%s243 + $0x159] sm:$0xff]
      %v1538 = vld [vmem:[%s243 + $0x169] sm:$0xff]
      %v1539 = vld [vmem:[%s243 + $0x171] sm:$0xff]
      %v1540 = vpack.c.bf16 %v1509, %v1508
      %v1541 = vpack.c.bf16 %v1511, %v1510
      %v1542 = vpack.c.bf16 %v1513, %v1512
      %v1543 = vpack.c.bf16 %v1515, %v1514
      %v1544 = vpack.c.bf16 %v1517, %v1516
      %v1545 = vpack.c.bf16 %v1519, %v1518
      %v1546 = vpack.c.bf16 %v1521, %v1520
      %v1547 = vpack.c.bf16 %v1523, %v1522
      %v1548 = vpack.c.bf16 %v1525, %v1524
      %v1549 = vpack.c.bf16 %v1527, %v1526
      %v1550 = vpack.c.bf16 %v1529, %v1528
      %v1551 = vpack.c.bf16 %v1531, %v1530
      %v1552 = vpack.c.bf16 %v1533, %v1532
      %v1553 = vpack.c.bf16 %v1535, %v1534
      %v1554 = vpack.c.bf16 %v1537, %v1536
      %v1555 = vpack.c.bf16 %v1539, %v1538
      %s1556 = scalar_lea.vmem %s1, 256
      %v1557 = vld [vmem:[%s1556] sm:$0xf]
      %v1558 = vld [vmem:[%s1556 + $0x4] sm:$0xf]
      %v1559 = vld [vmem:[%s1556 + $0x8] sm:$0xf]
      %v1560 = vld [vmem:[%s1556 + $0xc] sm:$0xf]
      %v1561 = vld [vmem:[%s1556 + $0x10] sm:$0xf]
      %v1562 = vld [vmem:[%s1556 + $0x14] sm:$0xf]
      %v1563 = vld [vmem:[%s1556 + $0x18] sm:$0xf]
      %v1564 = vld [vmem:[%s1556 + $0x1c] sm:$0xf]
      %v1565 = vld [vmem:[%s1556 + $0x20] sm:$0xf]
      %v1566 = vld [vmem:[%s1556 + $0x24] sm:$0xf]
      %v1567 = vld [vmem:[%s1556 + $0x28] sm:$0xf]
      %v1568 = vld [vmem:[%s1556 + $0x2c] sm:$0xf]
      %v1569 = vld [vmem:[%s1556 + $0x30] sm:$0xf]
      %v1570 = vld [vmem:[%s1556 + $0x34] sm:$0xf]
      %v1571 = vld [vmem:[%s1556 + $0x38] sm:$0xf]
      %v1572 = vld [vmem:[%s1556 + $0x3c] sm:$0xf]
      %v1589 = vunpack.c.l.b16 %v1557
      %v1590 = vunpack.c.l.b16 %v1558
      %v1591 = vunpack.c.l.b16 %v1559
      %v1592 = vunpack.c.l.b16 %v1560
      %v1593 = vunpack.c.l.b16 %v1561
      %v1594 = vunpack.c.l.b16 %v1562
      %v1595 = vunpack.c.l.b16 %v1563
      %v1596 = vunpack.c.l.b16 %v1564
      %v1597 = vunpack.c.l.b16 %v1565
      %v1598 = vunpack.c.l.b16 %v1566
      %v1599 = vunpack.c.l.b16 %v1567
      %v1600 = vunpack.c.l.b16 %v1568
      %v1601 = vunpack.c.l.b16 %v1569
      %v1602 = vunpack.c.l.b16 %v1570
      %v1603 = vunpack.c.l.b16 %v1571
      %v1604 = vunpack.c.l.b16 %v1572
      %v1605 = vpack.c.b16 %v1590, %v1589
      %v1606 = vpack.c.b16 %v1592, %v1591
      %v1607 = vpack.c.b16 %v1594, %v1593
      %v1608 = vpack.c.b16 %v1596, %v1595
      %v1609 = vpack.c.b16 %v1598, %v1597
      %v1610 = vpack.c.b16 %v1600, %v1599
      %v1611 = vpack.c.b16 %v1602, %v1601
      %v1612 = vpack.c.b16 %v1604, %v1603
      %1621 = vmatprep.subr.bf16.mxu0 0
      %1622 = vmatpush1.bf16.msra.mxu0 %v1605
      %1623 = vmatprep.subr.bf16.mxu0 0
      %1624 = vmatpush1.bf16.msra.mxu0 %v1606
      %1625 = vmatprep.subr.bf16.mxu0 0
      %1626 = vmatpush1.bf16.msra.mxu0 %v1607
      %1627 = vmatprep.subr.bf16.mxu0 0
      %1628 = vmatpush1.bf16.msra.mxu0 %v1608
      %1629 = vmatprep.subr.bf16.mxu0 0
      %1630 = vmatpush1.bf16.msra.mxu0 %v1609
      %1631 = vmatprep.subr.bf16.mxu0 0
      %1632 = vmatpush1.bf16.msra.mxu0 %v1610
      %1633 = vmatprep.subr.bf16.mxu0 0
      %1634 = vmatpush1.bf16.msra.mxu0 %v1611
      %1635 = vmatprep.subr.bf16.mxu0 0
      %1636 = vmatpush1.bf16.msra.mxu0 %v1612
      %1637 = vmatprep.subr.bf16.mxu0 0
      %1638 = vmatpush1.bf16.msra.mxu0 0
      %1639 = vmatprep.subr.bf16.mxu0 0
      %1640 = vmatpush1.bf16.msra.mxu0 0
      %1641 = vmatprep.subr.bf16.mxu0 0
      %1642 = vmatpush1.bf16.msra.mxu0 0
      %1643 = vmatprep.subr.bf16.mxu0 0
      %1644 = vmatpush1.bf16.msra.mxu0 0
      %1645 = vmatprep.subr.bf16.mxu0 0
      %1646 = vmatpush1.bf16.msra.mxu0 0
      %1647 = vmatprep.subr.bf16.mxu0 0
      %1648 = vmatpush1.bf16.msra.mxu0 0
      %1649 = vmatprep.subr.bf16.mxu0 0
      %1650 = vmatpush1.bf16.msra.mxu0 0
      %1651 = vmatprep.subr.bf16.mxu0 0
      %1652 = vmatpush1.bf16.msra.mxu0 0
      %1653 = vmatprep.mubr.bf16.mxu0 0
      %1654 = vmatmul.mubr.bf16.gmra.mrb[0].mxu0 %v1540
      %v1655 = vpop.f32.mrb[0].mxu0
      %v1656 = vadd.f32 0.0, %v1655
      %v1657 = vpop.f32.mrb[0].mxu0
      %v1658 = vpop.f32.mrb[0].mxu0
      %v1659 = vadd.f32 0.0, %v1658
      %v1660 = vpop.f32.mrb[0].mxu0
      %1661 = vmatprep.mubr.bf16.mxu0 0
      %1662 = vmatmul.mubr.bf16.gmra.mrb[0].mxu0 %v1541
      %v1663 = vpop.f32.mrb[0].mxu0
      %v1664 = vadd.f32 0.0, %v1663
      %v1665 = vpop.f32.mrb[0].mxu0
      %v1666 = vpop.f32.mrb[0].mxu0
      %v1667 = vadd.f32 0.0, %v1666
      %v1668 = vpop.f32.mrb[0].mxu0
      %1669 = vmatprep.mubr.bf16.mxu0 0
      %1670 = vmatmul.mubr.bf16.gmra.mrb[0].mxu0 %v1542
      %v1671 = vpop.f32.mrb[0].mxu0
      %v1672 = vadd.f32 0.0, %v1671
      %v1673 = vpop.f32.mrb[0].mxu0
      %v1674 = vpop.f32.mrb[0].mxu0
      %v1675 = vadd.f32 0.0, %v1674
      %v1676 = vpop.f32.mrb[0].mxu0
      %1677 = vmatprep.mubr.bf16.mxu0 0
      %1678 = vmatmul.mubr.bf16.gmra.mrb[0].mxu0 %v1543
      %v1679 = vpop.f32.mrb[0].mxu0
      %v1680 = vadd.f32 0.0, %v1679
      %v1681 = vpop.f32.mrb[0].mxu0
      %v1682 = vpop.f32.mrb[0].mxu0
      %v1683 = vadd.f32 0.0, %v1682
      %v1684 = vpop.f32.mrb[0].mxu0
      %1685 = vmatprep.mubr.bf16.mxu0 0
      %1686 = vmatmul.mubr.bf16.gmra.mrb[0].mxu0 %v1544
      %v1687 = vpop.f32.mrb[0].mxu0
      %v1688 = vadd.f32 0.0, %v1687
      %v1689 = vpop.f32.mrb[0].mxu0
      %v1690 = vpop.f32.mrb[0].mxu0
      %v1691 = vadd.f32 0.0, %v1690
      %v1692 = vpop.f32.mrb[0].mxu0
      %1693 = vmatprep.mubr.bf16.mxu0 0
      %1694 = vmatmul.mubr.bf16.gmra.mrb[0].mxu0 %v1545
      %v1695 = vpop.f32.mrb[0].mxu0
      %v1696 = vadd.f32 0.0, %v1695
      %v1697 = vpop.f32.mrb[0].mxu0
      %v1698 = vpop.f32.mrb[0].mxu0
      %v1699 = vadd.f32 0.0, %v1698
      %v1700 = vpop.f32.mrb[0].mxu0
      %1701 = vmatprep.mubr.bf16.mxu0 0
      %1702 = vmatmul.mubr.bf16.gmra.mrb[0].mxu0 %v1546
      %v1703 = vpop.f32.mrb[0].mxu0
      %v1704 = vadd.f32 0.0, %v1703
      %v1705 = vpop.f32.mrb[0].mxu0
      %v1706 = vpop.f32.mrb[0].mxu0
      %v1707 = vadd.f32 0.0, %v1706
      %v1708 = vpop.f32.mrb[0].mxu0
      %1709 = vmatprep.mubr.bf16.mxu0 0
      %1710 = vmatmul.mubr.bf16.gmra.mrb[0].mxu0 %v1547
      %v1711 = vpop.f32.mrb[0].mxu0
      %v1712 = vadd.f32 0.0, %v1711
      %v1713 = vpop.f32.mrb[0].mxu0
      %v1714 = vpop.f32.mrb[0].mxu0
      %v1715 = vadd.f32 0.0, %v1714
      %v1716 = vpop.f32.mrb[0].mxu0
      %1717 = vmatprep.mubr.bf16.mxu0 0
      %1718 = vmatmul.mubr.bf16.gmra.mrb[0].mxu0 %v1548
      %v1719 = vpop.f32.mrb[0].mxu0
      %v1720 = vadd.f32 0.0, %v1719
      %v1721 = vpop.f32.mrb[0].mxu0
      %v1722 = vpop.f32.mrb[0].mxu0
      %v1723 = vadd.f32 0.0, %v1722
      %v1724 = vpop.f32.mrb[0].mxu0
      %1725 = vmatprep.mubr.bf16.mxu0 0
      %1726 = vmatmul.mubr.bf16.gmra.mrb[0].mxu0 %v1549
      %v1727 = vpop.f32.mrb[0].mxu0
      %v1728 = vadd.f32 0.0, %v1727
      %v1729 = vpop.f32.mrb[0].mxu0
      %v1730 = vpop.f32.mrb[0].mxu0
      %v1731 = vadd.f32 0.0, %v1730
      %v1732 = vpop.f32.mrb[0].mxu0
      %1733 = vmatprep.mubr.bf16.mxu0 0
      %1734 = vmatmul.mubr.bf16.gmra.mrb[0].mxu0 %v1550
      %v1735 = vpop.f32.mrb[0].mxu0
      %v1736 = vadd.f32 0.0, %v1735
      %v1737 = vpop.f32.mrb[0].mxu0
      %v1738 = vpop.f32.mrb[0].mxu0
      %v1739 = vadd.f32 0.0, %v1738
      %v1740 = vpop.f32.mrb[0].mxu0
      %1741 = vmatprep.mubr.bf16.mxu0 0
      %1742 = vmatmul.mubr.bf16.gmra.mrb[0].mxu0 %v1551
      %v1743 = vpop.f32.mrb[0].mxu0
      %v1744 = vadd.f32 0.0, %v1743
      %v1745 = vpop.f32.mrb[0].mxu0
      %v1746 = vpop.f32.mrb[0].mxu0
      %v1747 = vadd.f32 0.0, %v1746
      %v1748 = vpop.f32.mrb[0].mxu0
      %1749 = vmatprep.mubr.bf16.mxu0 0
      %1750 = vmatmul.mubr.bf16.gmra.mrb[0].mxu0 %v1552
      %v1751 = vpop.f32.mrb[0].mxu0
      %v1752 = vadd.f32 0.0, %v1751
      %v1753 = vpop.f32.mrb[0].mxu0
      %v1754 = vpop.f32.mrb[0].mxu0
      %v1755 = vadd.f32 0.0, %v1754
      %v1756 = vpop.f32.mrb[0].mxu0
      %1757 = vmatprep.mubr.bf16.mxu0 0
      %1758 = vmatmul.mubr.bf16.gmra.mrb[0].mxu0 %v1553
      %v1759 = vpop.f32.mrb[0].mxu0
      %v1760 = vadd.f32 0.0, %v1759
      %v1761 = vpop.f32.mrb[0].mxu0
      %v1762 = vpop.f32.mrb[0].mxu0
      %v1763 = vadd.f32 0.0, %v1762
      %v1764 = vpop.f32.mrb[0].mxu0
      %1765 = vmatprep.mubr.bf16.mxu0 0
      %1766 = vmatmul.mubr.bf16.gmra.mrb[0].mxu0 %v1554
      %v1767 = vpop.f32.mrb[0].mxu0
      %v1768 = vadd.f32 0.0, %v1767
      %v1769 = vpop.f32.mrb[0].mxu0
      %v1770 = vpop.f32.mrb[0].mxu0
      %v1771 = vadd.f32 0.0, %v1770
      %v1772 = vpop.f32.mrb[0].mxu0
      %1773 = vmatprep.mubr.bf16.mxu0 0
      %1774 = vmatmul.mubr.bf16.gmra.mrb[0].mxu0 %v1555
      %v1775 = vpop.f32.mrb[0].mxu0
      %v1776 = vadd.f32 0.0, %v1775
      %v1777 = vpop.f32.mrb[0].mxu0
      %v1778 = vpop.f32.mrb[0].mxu0
      %v1779 = vadd.f32 0.0, %v1778
      %v1780 = vpop.f32.mrb[0].mxu0
      %1781 = vdwg.mxu0
      %v1782 = vadd.f32 %v1476, %v1656
      %v1783 = vadd.f32 %v1477, %v1659
      %v1784 = vadd.f32 %v1478, %v1664
      %v1785 = vadd.f32 %v1479, %v1667
      %v1786 = vadd.f32 %v1480, %v1672
      %v1787 = vadd.f32 %v1481, %v1675
      %v1788 = vadd.f32 %v1482, %v1680
      %v1789 = vadd.f32 %v1483, %v1683
      %v1790 = vadd.f32 %v1484, %v1688
      %v1791 = vadd.f32 %v1485, %v1691
      %v1792 = vadd.f32 %v1486, %v1696
      %v1793 = vadd.f32 %v1487, %v1699
      %v1794 = vadd.f32 %v1488, %v1704
      %v1795 = vadd.f32 %v1489, %v1707
      %v1796 = vadd.f32 %v1490, %v1712
      %v1797 = vadd.f32 %v1491, %v1715
      %v1798 = vadd.f32 %v1492, %v1720
      %v1799 = vadd.f32 %v1493, %v1723
      %v1800 = vadd.f32 %v1494, %v1728
      %v1801 = vadd.f32 %v1495, %v1731
      %v1802 = vadd.f32 %v1496, %v1736
      %v1803 = vadd.f32 %v1497, %v1739
      %v1804 = vadd.f32 %v1498, %v1744
      %v1805 = vadd.f32 %v1499, %v1747
      %v1806 = vadd.f32 %v1500, %v1752
      %v1807 = vadd.f32 %v1501, %v1755
      %v1808 = vadd.f32 %v1502, %v1760
      %v1809 = vadd.f32 %v1503, %v1763
      %v1810 = vadd.f32 %v1504, %v1768
      %v1811 = vadd.f32 %v1505, %v1771
      %v1812 = vadd.f32 %v1506, %v1776
      %v1813 = vadd.f32 %v1507, %v1779
      %v1814 = vld [vmem:[%s243 + $0x2] sm:$0xff]
      %v1815 = vld [vmem:[%s243 + $0xa] sm:$0xff]
      %v1816 = vld [vmem:[%s243 + $0x1a] sm:$0xff]
      %v1817 = vld [vmem:[%s243 + $0x22] sm:$0xff]
      %v1818 = vld [vmem:[%s243 + $0x32] sm:$0xff]
      %v1819 = vld [vmem:[%s243 + $0x3a] sm:$0xff]
      %v1820 = vld [vmem:[%s243 + $0x4a] sm:$0xff]
      %v1821 = vld [vmem:[%s243 + $0x52] sm:$0xff]
      %v1822 = vld [vmem:[%s243 + $0x62] sm:$0xff]
      %v1823 = vld [vmem:[%s243 + $0x6a] sm:$0xff]
      %v1824 = vld [vmem:[%s243 + $0x7a] sm:$0xff]
      %v1825 = vld [vmem:[%s243 + $0x82] sm:$0xff]
      %v1826 = vld [vmem:[%s243 + $0x92] sm:$0xff]
      %v1827 = vld [vmem:[%s243 + $0x9a] sm:$0xff]
      %v1828 = vld [vmem:[%s243 + $0xaa] sm:$0xff]
      %v1829 = vld [vmem:[%s243 + $0xb2] sm:$0xff]
      %v1830 = vld [vmem:[%s243 + $0xc2] sm:$0xff]
      %v1831 = vld [vmem:[%s243 + $0xca] sm:$0xff]
      %v1832 = vld [vmem:[%s243 + $0xda] sm:$0xff]
      %v1833 = vld [vmem:[%s243 + $0xe2] sm:$0xff]
      %v1834 = vld [vmem:[%s243 + $0xf2] sm:$0xff]
      %v1835 = vld [vmem:[%s243 + $0xfa] sm:$0xff]
      %v1836 = vld [vmem:[%s243 + $0x10a] sm:$0xff]
      %v1837 = vld [vmem:[%s243 + $0x112] sm:$0xff]
      %v1838 = vld [vmem:[%s243 + $0x122] sm:$0xff]
      %v1839 = vld [vmem:[%s243 + $0x12a] sm:$0xff]
      %v1840 = vld [vmem:[%s243 + $0x13a] sm:$0xff]
      %v1841 = vld [vmem:[%s243 + $0x142] sm:$0xff]
      %v1842 = vld [vmem:[%s243 + $0x152] sm:$0xff]
      %v1843 = vld [vmem:[%s243 + $0x15a] sm:$0xff]
      %v1844 = vld [vmem:[%s243 + $0x16a] sm:$0xff]
      %v1845 = vld [vmem:[%s243 + $0x172] sm:$0xff]
      %v1846 = vpack.c.bf16 %v1815, %v1814
      %v1847 = vpack.c.bf16 %v1817, %v1816
      %v1848 = vpack.c.bf16 %v1819, %v1818
      %v1849 = vpack.c.bf16 %v1821, %v1820
      %v1850 = vpack.c.bf16 %v1823, %v1822
      %v1851 = vpack.c.bf16 %v1825, %v1824
      %v1852 = vpack.c.bf16 %v1827, %v1826
      %v1853 = vpack.c.bf16 %v1829, %v1828
      %v1854 = vpack.c.bf16 %v1831, %v1830
      %v1855 = vpack.c.bf16 %v1833, %v1832
      %v1856 = vpack.c.bf16 %v1835, %v1834
      %v1857 = vpack.c.bf16 %v1837, %v1836
      %v1858 = vpack.c.bf16 %v1839, %v1838
      %v1859 = vpack.c.bf16 %v1841, %v1840
      %v1860 = vpack.c.bf16 %v1843, %v1842
      %v1861 = vpack.c.bf16 %v1845, %v1844
      %s1862 = scalar_lea.vmem %s1, 320
      %v1863 = vld [vmem:[%s1862] sm:$0xf]
      %v1864 = vld [vmem:[%s1862 + $0x4] sm:$0xf]
      %v1865 = vld [vmem:[%s1862 + $0x8] sm:$0xf]
      %v1866 = vld [vmem:[%s1862 + $0xc] sm:$0xf]
      %v1867 = vld [vmem:[%s1862 + $0x10] sm:$0xf]
      %v1868 = vld [vmem:[%s1862 + $0x14] sm:$0xf]
      %v1869 = vld [vmem:[%s1862 + $0x18] sm:$0xf]
      %v1870 = vld [vmem:[%s1862 + $0x1c] sm:$0xf]
      %v1871 = vld [vmem:[%s1862 + $0x20] sm:$0xf]
      %v1872 = vld [vmem:[%s1862 + $0x24] sm:$0xf]
      %v1873 = vld [vmem:[%s1862 + $0x28] sm:$0xf]
      %v1874 = vld [vmem:[%s1862 + $0x2c] sm:$0xf]
      %v1875 = vld [vmem:[%s1862 + $0x30] sm:$0xf]
      %v1876 = vld [vmem:[%s1862 + $0x34] sm:$0xf]
      %v1877 = vld [vmem:[%s1862 + $0x38] sm:$0xf]
      %v1878 = vld [vmem:[%s1862 + $0x3c] sm:$0xf]
      %v1895 = vunpack.c.l.b16 %v1863
      %v1896 = vunpack.c.l.b16 %v1864
      %v1897 = vunpack.c.l.b16 %v1865
      %v1898 = vunpack.c.l.b16 %v1866
      %v1899 = vunpack.c.l.b16 %v1867
      %v1900 = vunpack.c.l.b16 %v1868
      %v1901 = vunpack.c.l.b16 %v1869
      %v1902 = vunpack.c.l.b16 %v1870
      %v1903 = vunpack.c.l.b16 %v1871
      %v1904 = vunpack.c.l.b16 %v1872
      %v1905 = vunpack.c.l.b16 %v1873
      %v1906 = vunpack.c.l.b16 %v1874
      %v1907 = vunpack.c.l.b16 %v1875
      %v1908 = vunpack.c.l.b16 %v1876
      %v1909 = vunpack.c.l.b16 %v1877
      %v1910 = vunpack.c.l.b16 %v1878
      %v1911 = vpack.c.b16 %v1896, %v1895
      %v1912 = vpack.c.b16 %v1898, %v1897
      %v1913 = vpack.c.b16 %v1900, %v1899
      %v1914 = vpack.c.b16 %v1902, %v1901
      %v1915 = vpack.c.b16 %v1904, %v1903
      %v1916 = vpack.c.b16 %v1906, %v1905
      %v1917 = vpack.c.b16 %v1908, %v1907
      %v1918 = vpack.c.b16 %v1910, %v1909
      %1927 = vmatprep.subr.bf16.mxu0 0
      %1928 = vmatpush1.bf16.msra.mxu0 %v1911
      %1929 = vmatprep.subr.bf16.mxu0 0
      %1930 = vmatpush1.bf16.msra.mxu0 %v1912
      %1931 = vmatprep.subr.bf16.mxu0 0
      %1932 = vmatpush1.bf16.msra.mxu0 %v1913
      %1933 = vmatprep.subr.bf16.mxu0 0
      %1934 = vmatpush1.bf16.msra.mxu0 %v1914
      %1935 = vmatprep.subr.bf16.mxu0 0
      %1936 = vmatpush1.bf16.msra.mxu0 %v1915
      %1937 = vmatprep.subr.bf16.mxu0 0
      %1938 = vmatpush1.bf16.msra.mxu0 %v1916
      %1939 = vmatprep.subr.bf16.mxu0 0
      %1940 = vmatpush1.bf16.msra.mxu0 %v1917
      %1941 = vmatprep.subr.bf16.mxu0 0
      %1942 = vmatpush1.bf16.msra.mxu0 %v1918
      %1943 = vmatprep.subr.bf16.mxu0 0
      %1944 = vmatpush1.bf16.msra.mxu0 0
      %1945 = vmatprep.subr.bf16.mxu0 0
      %1946 = vmatpush1.bf16.msra.mxu0 0
      %1947 = vmatprep.subr.bf16.mxu0 0
      %1948 = vmatpush1.bf16.msra.mxu0 0
      %1949 = vmatprep.subr.bf16.mxu0 0
      %1950 = vmatpush1.bf16.msra.mxu0 0
      %1951 = vmatprep.subr.bf16.mxu0 0
      %1952 = vmatpush1.bf16.msra.mxu0 0
      %1953 = vmatprep.subr.bf16.mxu0 0
      %1954 = vmatpush1.bf16.msra.mxu0 0
      %1955 = vmatprep.subr.bf16.mxu0 0
      %1956 = vmatpush1.bf16.msra.mxu0 0
      %1957 = vmatprep.subr.bf16.mxu0 0
      %1958 = vmatpush1.bf16.msra.mxu0 0
      %1959 = vmatprep.mubr.bf16.mxu0 0
      %1960 = vmatmul.mubr.bf16.gmra.mrb[0].mxu0 %v1846
      %v1961 = vpop.f32.mrb[0].mxu0
      %v1962 = vadd.f32 0.0, %v1961
      %v1963 = vpop.f32.mrb[0].mxu0
      %v1964 = vpop.f32.mrb[0].mxu0
      %v1965 = vadd.f32 0.0, %v1964
      %v1966 = vpop.f32.mrb[0].mxu0
      %1967 = vmatprep.mubr.bf16.mxu0 0
      %1968 = vmatmul.mubr.bf16.gmra.mrb[0].mxu0 %v1847
      %v1969 = vpop.f32.mrb[0].mxu0
      %v1970 = vadd.f32 0.0, %v1969
      %v1971 = vpop.f32.mrb[0].mxu0
      %v1972 = vpop.f32.mrb[0].mxu0
      %v1973 = vadd.f32 0.0, %v1972
      %v1974 = vpop.f32.mrb[0].mxu0
      %1975 = vmatprep.mubr.bf16.mxu0 0
      %1976 = vmatmul.mubr.bf16.gmra.mrb[0].mxu0 %v1848
      %v1977 = vpop.f32.mrb[0].mxu0
      %v1978 = vadd.f32 0.0, %v1977
      %v1979 = vpop.f32.mrb[0].mxu0
      %v1980 = vpop.f32.mrb[0].mxu0
      %v1981 = vadd.f32 0.0, %v1980
      %v1982 = vpop.f32.mrb[0].mxu0
      %1983 = vmatprep.mubr.bf16.mxu0 0
      %1984 = vmatmul.mubr.bf16.gmra.mrb[0].mxu0 %v1849
      %v1985 = vpop.f32.mrb[0].mxu0
      %v1986 = vadd.f32 0.0, %v1985
      %v1987 = vpop.f32.mrb[0].mxu0
      %v1988 = vpop.f32.mrb[0].mxu0
      %v1989 = vadd.f32 0.0, %v1988
      %v1990 = vpop.f32.mrb[0].mxu0
      %1991 = vmatprep.mubr.bf16.mxu0 0
      %1992 = vmatmul.mubr.bf16.gmra.mrb[0].mxu0 %v1850
      %v1993 = vpop.f32.mrb[0].mxu0
      %v1994 = vadd.f32 0.0, %v1993
      %v1995 = vpop.f32.mrb[0].mxu0
      %v1996 = vpop.f32.mrb[0].mxu0
      %v1997 = vadd.f32 0.0, %v1996
      %v1998 = vpop.f32.mrb[0].mxu0
      %1999 = vmatprep.mubr.bf16.mxu0 0
      %2000 = vmatmul.mubr.bf16.gmra.mrb[0].mxu0 %v1851
      %v2001 = vpop.f32.mrb[0].mxu0
      %v2002 = vadd.f32 0.0, %v2001
      %v2003 = vpop.f32.mrb[0].mxu0
      %v2004 = vpop.f32.mrb[0].mxu0
      %v2005 = vadd.f32 0.0, %v2004
      %v2006 = vpop.f32.mrb[0].mxu0
      %2007 = vmatprep.mubr.bf16.mxu0 0
      %2008 = vmatmul.mubr.bf16.gmra.mrb[0].mxu0 %v1852
      %v2009 = vpop.f32.mrb[0].mxu0
      %v2010 = vadd.f32 0.0, %v2009
      %v2011 = vpop.f32.mrb[0].mxu0
      %v2012 = vpop.f32.mrb[0].mxu0
      %v2013 = vadd.f32 0.0, %v2012
      %v2014 = vpop.f32.mrb[0].mxu0
      %2015 = vmatprep.mubr.bf16.mxu0 0
      %2016 = vmatmul.mubr.bf16.gmra.mrb[0].mxu0 %v1853
      %v2017 = vpop.f32.mrb[0].mxu0
      %v2018 = vadd.f32 0.0, %v2017
      %v2019 = vpop.f32.mrb[0].mxu0
      %v2020 = vpop.f32.mrb[0].mxu0
      %v2021 = vadd.f32 0.0, %v2020
      %v2022 = vpop.f32.mrb[0].mxu0
      %2023 = vmatprep.mubr.bf16.mxu0 0
      %2024 = vmatmul.mubr.bf16.gmra.mrb[0].mxu0 %v1854
      %v2025 = vpop.f32.mrb[0].mxu0
      %v2026 = vadd.f32 0.0, %v2025
      %v2027 = vpop.f32.mrb[0].mxu0
      %v2028 = vpop.f32.mrb[0].mxu0
      %v2029 = vadd.f32 0.0, %v2028
      %v2030 = vpop.f32.mrb[0].mxu0
      %2031 = vmatprep.mubr.bf16.mxu0 0
      %2032 = vmatmul.mubr.bf16.gmra.mrb[0].mxu0 %v1855
      %v2033 = vpop.f32.mrb[0].mxu0
      %v2034 = vadd.f32 0.0, %v2033
      %v2035 = vpop.f32.mrb[0].mxu0
      %v2036 = vpop.f32.mrb[0].mxu0
      %v2037 = vadd.f32 0.0, %v2036
      %v2038 = vpop.f32.mrb[0].mxu0
      %2039 = vmatprep.mubr.bf16.mxu0 0
      %2040 = vmatmul.mubr.bf16.gmra.mrb[0].mxu0 %v1856
      %v2041 = vpop.f32.mrb[0].mxu0
      %v2042 = vadd.f32 0.0, %v2041
      %v2043 = vpop.f32.mrb[0].mxu0
      %v2044 = vpop.f32.mrb[0].mxu0
      %v2045 = vadd.f32 0.0, %v2044
      %v2046 = vpop.f32.mrb[0].mxu0
      %2047 = vmatprep.mubr.bf16.mxu0 0
      %2048 = vmatmul.mubr.bf16.gmra.mrb[0].mxu0 %v1857
      %v2049 = vpop.f32.mrb[0].mxu0
      %v2050 = vadd.f32 0.0, %v2049
      %v2051 = vpop.f32.mrb[0].mxu0
      %v2052 = vpop.f32.mrb[0].mxu0
      %v2053 = vadd.f32 0.0, %v2052
      %v2054 = vpop.f32.mrb[0].mxu0
      %2055 = vmatprep.mubr.bf16.mxu0 0
      %2056 = vmatmul.mubr.bf16.gmra.mrb[0].mxu0 %v1858
      %v2057 = vpop.f32.mrb[0].mxu0
      %v2058 = vadd.f32 0.0, %v2057
      %v2059 = vpop.f32.mrb[0].mxu0
      %v2060 = vpop.f32.mrb[0].mxu0
      %v2061 = vadd.f32 0.0, %v2060
      %v2062 = vpop.f32.mrb[0].mxu0
      %2063 = vmatprep.mubr.bf16.mxu0 0
      %2064 = vmatmul.mubr.bf16.gmra.mrb[0].mxu0 %v1859
      %v2065 = vpop.f32.mrb[0].mxu0
      %v2066 = vadd.f32 0.0, %v2065
      %v2067 = vpop.f32.mrb[0].mxu0
      %v2068 = vpop.f32.mrb[0].mxu0
      %v2069 = vadd.f32 0.0, %v2068
      %v2070 = vpop.f32.mrb[0].mxu0
      %2071 = vmatprep.mubr.bf16.mxu0 0
      %2072 = vmatmul.mubr.bf16.gmra.mrb[0].mxu0 %v1860
      %v2073 = vpop.f32.mrb[0].mxu0
      %v2074 = vadd.f32 0.0, %v2073
      %v2075 = vpop.f32.mrb[0].mxu0
      %v2076 = vpop.f32.mrb[0].mxu0
      %v2077 = vadd.f32 0.0, %v2076
      %v2078 = vpop.f32.mrb[0].mxu0
      %2079 = vmatprep.mubr.bf16.mxu0 0
      %2080 = vmatmul.mubr.bf16.gmra.mrb[0].mxu0 %v1861
      %v2081 = vpop.f32.mrb[0].mxu0
      %v2082 = vadd.f32 0.0, %v2081
      %v2083 = vpop.f32.mrb[0].mxu0
      %v2084 = vpop.f32.mrb[0].mxu0
      %v2085 = vadd.f32 0.0, %v2084
      %v2086 = vpop.f32.mrb[0].mxu0
      %2087 = vdwg.mxu0
      %v2088 = vadd.f32 %v1782, %v1962
      %v2089 = vadd.f32 %v1783, %v1965
      %v2090 = vadd.f32 %v1784, %v1970
      %v2091 = vadd.f32 %v1785, %v1973
      %v2092 = vadd.f32 %v1786, %v1978
      %v2093 = vadd.f32 %v1787, %v1981
      %v2094 = vadd.f32 %v1788, %v1986
      %v2095 = vadd.f32 %v1789, %v1989
      %v2096 = vadd.f32 %v1790, %v1994
      %v2097 = vadd.f32 %v1791, %v1997
      %v2098 = vadd.f32 %v1792, %v2002
      %v2099 = vadd.f32 %v1793, %v2005
      %v2100 = vadd.f32 %v1794, %v2010
      %v2101 = vadd.f32 %v1795, %v2013
      %v2102 = vadd.f32 %v1796, %v2018
      %v2103 = vadd.f32 %v1797, %v2021
      %v2104 = vadd.f32 %v1798, %v2026
      %v2105 = vadd.f32 %v1799, %v2029
      %v2106 = vadd.f32 %v1800, %v2034
      %v2107 = vadd.f32 %v1801, %v2037
      %v2108 = vadd.f32 %v1802, %v2042
      %v2109 = vadd.f32 %v1803, %v2045
      %v2110 = vadd.f32 %v1804, %v2050
      %v2111 = vadd.f32 %v1805, %v2053
      %v2112 = vadd.f32 %v1806, %v2058
      %v2113 = vadd.f32 %v1807, %v2061
      %v2114 = vadd.f32 %v1808, %v2066
      %v2115 = vadd.f32 %v1809, %v2069
      %v2116 = vadd.f32 %v1810, %v2074
      %v2117 = vadd.f32 %v1811, %v2077
      %v2118 = vadd.f32 %v1812, %v2082
      %v2119 = vadd.f32 %v1813, %v2085
      %s2120 = scalar_lea.vmem [#allocation2], 48
      %v2121 = vld [vmem:[%s2120] sm:$0xff]
      %v2122 = vld [vmem:[%s2120 + $0x8] sm:$0xff]
      %v2123 = vld [vmem:[%s2120 + $0x18] sm:$0xff]
      %v2124 = vld [vmem:[%s2120 + $0x20] sm:$0xff]
      %v2125 = vld [vmem:[%s2120 + $0x30] sm:$0xff]
      %v2126 = vld [vmem:[%s2120 + $0x38] sm:$0xff]
      %v2127 = vld [vmem:[%s2120 + $0x48] sm:$0xff]
      %v2128 = vld [vmem:[%s2120 + $0x50] sm:$0xff]
      %v2129 = vld [vmem:[%s2120 + $0x60] sm:$0xff]
      %v2130 = vld [vmem:[%s2120 + $0x68] sm:$0xff]
      %v2131 = vld [vmem:[%s2120 + $0x78] sm:$0xff]
      %v2132 = vld [vmem:[%s2120 + $0x80] sm:$0xff]
      %v2133 = vld [vmem:[%s2120 + $0x90] sm:$0xff]
      %v2134 = vld [vmem:[%s2120 + $0x98] sm:$0xff]
      %v2135 = vld [vmem:[%s2120 + $0xa8] sm:$0xff]
      %v2136 = vld [vmem:[%s2120 + $0xb0] sm:$0xff]
      %v2137 = vld [vmem:[%s2120 + $0xc0] sm:$0xff]
      %v2138 = vld [vmem:[%s2120 + $0xc8] sm:$0xff]
      %v2139 = vld [vmem:[%s2120 + $0xd8] sm:$0xff]
      %v2140 = vld [vmem:[%s2120 + $0xe0] sm:$0xff]
      %v2141 = vld [vmem:[%s2120 + $0xf0] sm:$0xff]
      %v2142 = vld [vmem:[%s2120 + $0xf8] sm:$0xff]
      %v2143 = vld [vmem:[%s2120 + $0x108] sm:$0xff]
      %v2144 = vld [vmem:[%s2120 + $0x110] sm:$0xff]
      %v2145 = vld [vmem:[%s2120 + $0x120] sm:$0xff]
      %v2146 = vld [vmem:[%s2120 + $0x128] sm:$0xff]
      %v2147 = vld [vmem:[%s2120 + $0x138] sm:$0xff]
      %v2148 = vld [vmem:[%s2120 + $0x140] sm:$0xff]
      %v2149 = vld [vmem:[%s2120 + $0x150] sm:$0xff]
      %v2150 = vld [vmem:[%s2120 + $0x158] sm:$0xff]
      %v2151 = vld [vmem:[%s2120 + $0x168] sm:$0xff]
      %v2152 = vld [vmem:[%s2120 + $0x170] sm:$0xff]
      %v2153 = vpack.c.bf16 %v2122, %v2121
      %v2154 = vpack.c.bf16 %v2124, %v2123
      %v2155 = vpack.c.bf16 %v2126, %v2125
      %v2156 = vpack.c.bf16 %v2128, %v2127
      %v2157 = vpack.c.bf16 %v2130, %v2129
      %v2158 = vpack.c.bf16 %v2132, %v2131
      %v2159 = vpack.c.bf16 %v2134, %v2133
      %v2160 = vpack.c.bf16 %v2136, %v2135
      %v2161 = vpack.c.bf16 %v2138, %v2137
      %v2162 = vpack.c.bf16 %v2140, %v2139
      %v2163 = vpack.c.bf16 %v2142, %v2141
      %v2164 = vpack.c.bf16 %v2144, %v2143
      %v2165 = vpack.c.bf16 %v2146, %v2145
      %v2166 = vpack.c.bf16 %v2148, %v2147
      %v2167 = vpack.c.bf16 %v2150, %v2149
      %v2168 = vpack.c.bf16 %v2152, %v2151
      %s2169 = scalar_lea.vmem %s1, 384
      %v2170 = vld [vmem:[%s2169] sm:$0xf]
      %v2171 = vld [vmem:[%s2169 + $0x4] sm:$0xf]
      %v2172 = vld [vmem:[%s2169 + $0x8] sm:$0xf]
      %v2173 = vld [vmem:[%s2169 + $0xc] sm:$0xf]
      %v2174 = vld [vmem:[%s2169 + $0x10] sm:$0xf]
      %v2175 = vld [vmem:[%s2169 + $0x14] sm:$0xf]
      %v2176 = vld [vmem:[%s2169 + $0x18] sm:$0xf]
      %v2177 = vld [vmem:[%s2169 + $0x1c] sm:$0xf]
      %v2178 = vld [vmem:[%s2169 + $0x20] sm:$0xf]
      %v2179 = vld [vmem:[%s2169 + $0x24] sm:$0xf]
      %v2180 = vld [vmem:[%s2169 + $0x28] sm:$0xf]
      %v2181 = vld [vmem:[%s2169 + $0x2c] sm:$0xf]
      %v2182 = vld [vmem:[%s2169 + $0x30] sm:$0xf]
      %v2183 = vld [vmem:[%s2169 + $0x34] sm:$0xf]
      %v2184 = vld [vmem:[%s2169 + $0x38] sm:$0xf]
      %v2185 = vld [vmem:[%s2169 + $0x3c] sm:$0xf]
      %v2202 = vunpack.c.l.b16 %v2170
      %v2203 = vunpack.c.l.b16 %v2171
      %v2204 = vunpack.c.l.b16 %v2172
      %v2205 = vunpack.c.l.b16 %v2173
      %v2206 = vunpack.c.l.b16 %v2174
      %v2207 = vunpack.c.l.b16 %v2175
      %v2208 = vunpack.c.l.b16 %v2176
      %v2209 = vunpack.c.l.b16 %v2177
      %v2210 = vunpack.c.l.b16 %v2178
      %v2211 = vunpack.c.l.b16 %v2179
      %v2212 = vunpack.c.l.b16 %v2180
      %v2213 = vunpack.c.l.b16 %v2181
      %v2214 = vunpack.c.l.b16 %v2182
      %v2215 = vunpack.c.l.b16 %v2183
      %v2216 = vunpack.c.l.b16 %v2184
      %v2217 = vunpack.c.l.b16 %v2185
      %v2218 = vpack.c.b16 %v2203, %v2202
      %v2219 = vpack.c.b16 %v2205, %v2204
      %v2220 = vpack.c.b16 %v2207, %v2206
      %v2221 = vpack.c.b16 %v2209, %v2208
      %v2222 = vpack.c.b16 %v2211, %v2210
      %v2223 = vpack.c.b16 %v2213, %v2212
      %v2224 = vpack.c.b16 %v2215, %v2214
      %v2225 = vpack.c.b16 %v2217, %v2216
      %2234 = vmatprep.subr.bf16.mxu0 0
      %2235 = vmatpush1.bf16.msra.mxu0 %v2218
      %2236 = vmatprep.subr.bf16.mxu0 0
      %2237 = vmatpush1.bf16.msra.mxu0 %v2219
      %2238 = vmatprep.subr.bf16.mxu0 0
      %2239 = vmatpush1.bf16.msra.mxu0 %v2220
      %2240 = vmatprep.subr.bf16.mxu0 0
      %2241 = vmatpush1.bf16.msra.mxu0 %v2221
      %2242 = vmatprep.subr.bf16.mxu0 0
      %2243 = vmatpush1.bf16.msra.mxu0 %v2222
      %2244 = vmatprep.subr.bf16.mxu0 0
      %2245 = vmatpush1.bf16.msra.mxu0 %v2223
      %2246 = vmatprep.subr.bf16.mxu0 0
      %2247 = vmatpush1.bf16.msra.mxu0 %v2224
      %2248 = vmatprep.subr.bf16.mxu0 0
      %2249 = vmatpush1.bf16.msra.mxu0 %v2225
      %2250 = vmatprep.subr.bf16.mxu0 0
      %2251 = vmatpush1.bf16.msra.mxu0 0
      %2252 = vmatprep.subr.bf16.mxu0 0
      %2253 = vmatpush1.bf16.msra.mxu0 0
      %2254 = vmatprep.subr.bf16.mxu0 0
      %2255 = vmatpush1.bf16.msra.mxu0 0
      %2256 = vmatprep.subr.bf16.mxu0 0
      %2257 = vmatpush1.bf16.msra.mxu0 0
      %2258 = vmatprep.subr.bf16.mxu0 0
      %2259 = vmatpush1.bf16.msra.mxu0 0
      %2260 = vmatprep.subr.bf16.mxu0 0
      %2261 = vmatpush1.bf16.msra.mxu0 0
      %2262 = vmatprep.subr.bf16.mxu0 0
      %2263 = vmatpush1.bf16.msra.mxu0 0
      %2264 = vmatprep.subr.bf16.mxu0 0
      %2265 = vmatpush1.bf16.msra.mxu0 0
      %2266 = vmatprep.mubr.bf16.mxu0 0
      %2267 = vmatmul.mubr.bf16.gmra.mrb[0].mxu0 %v2153
      %v2268 = vpop.f32.mrb[0].mxu0
      %v2269 = vadd.f32 0.0, %v2268
      %v2270 = vpop.f32.mrb[0].mxu0
      %v2271 = vpop.f32.mrb[0].mxu0
      %v2272 = vadd.f32 0.0, %v2271
      %v2273 = vpop.f32.mrb[0].mxu0
      %2274 = vmatprep.mubr.bf16.mxu0 0
      %2275 = vmatmul.mubr.bf16.gmra.mrb[0].mxu0 %v2154
      %v2276 = vpop.f32.mrb[0].mxu0
      %v2277 = vadd.f32 0.0, %v2276
      %v2278 = vpop.f32.mrb[0].mxu0
      %v2279 = vpop.f32.mrb[0].mxu0
      %v2280 = vadd.f32 0.0, %v2279
      %v2281 = vpop.f32.mrb[0].mxu0
      %2282 = vmatprep.mubr.bf16.mxu0 0
      %2283 = vmatmul.mubr.bf16.gmra.mrb[0].mxu0 %v2155
      %v2284 = vpop.f32.mrb[0].mxu0
      %v2285 = vadd.f32 0.0, %v2284
      %v2286 = vpop.f32.mrb[0].mxu0
      %v2287 = vpop.f32.mrb[0].mxu0
      %v2288 = vadd.f32 0.0, %v2287
      %v2289 = vpop.f32.mrb[0].mxu0
      %2290 = vmatprep.mubr.bf16.mxu0 0
      %2291 = vmatmul.mubr.bf16.gmra.mrb[0].mxu0 %v2156
      %v2292 = vpop.f32.mrb[0].mxu0
      %v2293 = vadd.f32 0.0, %v2292
      %v2294 = vpop.f32.mrb[0].mxu0
      %v2295 = vpop.f32.mrb[0].mxu0
      %v2296 = vadd.f32 0.0, %v2295
      %v2297 = vpop.f32.mrb[0].mxu0
      %2298 = vmatprep.mubr.bf16.mxu0 0
      %2299 = vmatmul.mubr.bf16.gmra.mrb[0].mxu0 %v2157
      %v2300 = vpop.f32.mrb[0].mxu0
      %v2301 = vadd.f32 0.0, %v2300
      %v2302 = vpop.f32.mrb[0].mxu0
      %v2303 = vpop.f32.mrb[0].mxu0
      %v2304 = vadd.f32 0.0, %v2303
      %v2305 = vpop.f32.mrb[0].mxu0
      %2306 = vmatprep.mubr.bf16.mxu0 0
      %2307 = vmatmul.mubr.bf16.gmra.mrb[0].mxu0 %v2158
      %v2308 = vpop.f32.mrb[0].mxu0
      %v2309 = vadd.f32 0.0, %v2308
      %v2310 = vpop.f32.mrb[0].mxu0
      %v2311 = vpop.f32.mrb[0].mxu0
      %v2312 = vadd.f32 0.0, %v2311
      %v2313 = vpop.f32.mrb[0].mxu0
      %2314 = vmatprep.mubr.bf16.mxu0 0
      %2315 = vmatmul.mubr.bf16.gmra.mrb[0].mxu0 %v2159
      %v2316 = vpop.f32.mrb[0].mxu0
      %v2317 = vadd.f32 0.0, %v2316
      %v2318 = vpop.f32.mrb[0].mxu0
      %v2319 = vpop.f32.mrb[0].mxu0
      %v2320 = vadd.f32 0.0, %v2319
      %v2321 = vpop.f32.mrb[0].mxu0
      %2322 = vmatprep.mubr.bf16.mxu0 0
      %2323 = vmatmul.mubr.bf16.gmra.mrb[0].mxu0 %v2160
      %v2324 = vpop.f32.mrb[0].mxu0
      %v2325 = vadd.f32 0.0, %v2324
      %v2326 = vpop.f32.mrb[0].mxu0
      %v2327 = vpop.f32.mrb[0].mxu0
      %v2328 = vadd.f32 0.0, %v2327
      %v2329 = vpop.f32.mrb[0].mxu0
      %2330 = vmatprep.mubr.bf16.mxu0 0
      %2331 = vmatmul.mubr.bf16.gmra.mrb[0].mxu0 %v2161
      %v2332 = vpop.f32.mrb[0].mxu0
      %v2333 = vadd.f32 0.0, %v2332
      %v2334 = vpop.f32.mrb[0].mxu0
      %v2335 = vpop.f32.mrb[0].mxu0
      %v2336 = vadd.f32 0.0, %v2335
      %v2337 = vpop.f32.mrb[0].mxu0
      %2338 = vmatprep.mubr.bf16.mxu0 0
      %2339 = vmatmul.mubr.bf16.gmra.mrb[0].mxu0 %v2162
      %v2340 = vpop.f32.mrb[0].mxu0
      %v2341 = vadd.f32 0.0, %v2340
      %v2342 = vpop.f32.mrb[0].mxu0
      %v2343 = vpop.f32.mrb[0].mxu0
      %v2344 = vadd.f32 0.0, %v2343
      %v2345 = vpop.f32.mrb[0].mxu0
      %2346 = vmatprep.mubr.bf16.mxu0 0
      %2347 = vmatmul.mubr.bf16.gmra.mrb[0].mxu0 %v2163
      %v2348 = vpop.f32.mrb[0].mxu0
      %v2349 = vadd.f32 0.0, %v2348
      %v2350 = vpop.f32.mrb[0].mxu0
      %v2351 = vpop.f32.mrb[0].mxu0
      %v2352 = vadd.f32 0.0, %v2351
      %v2353 = vpop.f32.mrb[0].mxu0
      %2354 = vmatprep.mubr.bf16.mxu0 0
      %2355 = vmatmul.mubr.bf16.gmra.mrb[0].mxu0 %v2164
      %v2356 = vpop.f32.mrb[0].mxu0
      %v2357 = vadd.f32 0.0, %v2356
      %v2358 = vpop.f32.mrb[0].mxu0
      %v2359 = vpop.f32.mrb[0].mxu0
      %v2360 = vadd.f32 0.0, %v2359
      %v2361 = vpop.f32.mrb[0].mxu0
      %2362 = vmatprep.mubr.bf16.mxu0 0
      %2363 = vmatmul.mubr.bf16.gmra.mrb[0].mxu0 %v2165
      %v2364 = vpop.f32.mrb[0].mxu0
      %v2365 = vadd.f32 0.0, %v2364
      %v2366 = vpop.f32.mrb[0].mxu0
      %v2367 = vpop.f32.mrb[0].mxu0
      %v2368 = vadd.f32 0.0, %v2367
      %v2369 = vpop.f32.mrb[0].mxu0
      %2370 = vmatprep.mubr.bf16.mxu0 0
      %2371 = vmatmul.mubr.bf16.gmra.mrb[0].mxu0 %v2166
      %v2372 = vpop.f32.mrb[0].mxu0
      %v2373 = vadd.f32 0.0, %v2372
      %v2374 = vpop.f32.mrb[0].mxu0
      %v2375 = vpop.f32.mrb[0].mxu0
      %v2376 = vadd.f32 0.0, %v2375
      %v2377 = vpop.f32.mrb[0].mxu0
      %2378 = vmatprep.mubr.bf16.mxu0 0
      %2379 = vmatmul.mubr.bf16.gmra.mrb[0].mxu0 %v2167
      %v2380 = vpop.f32.mrb[0].mxu0
      %v2381 = vadd.f32 0.0, %v2380
      %v2382 = vpop.f32.mrb[0].mxu0
      %v2383 = vpop.f32.mrb[0].mxu0
      %v2384 = vadd.f32 0.0, %v2383
      %v2385 = vpop.f32.mrb[0].mxu0
      %2386 = vmatprep.mubr.bf16.mxu0 0
      %2387 = vmatmul.mubr.bf16.gmra.mrb[0].mxu0 %v2168
      %v2388 = vpop.f32.mrb[0].mxu0
      %v2389 = vadd.f32 0.0, %v2388
      %v2390 = vpop.f32.mrb[0].mxu0
      %v2391 = vpop.f32.mrb[0].mxu0
      %v2392 = vadd.f32 0.0, %v2391
      %v2393 = vpop.f32.mrb[0].mxu0
      %2394 = vdwg.mxu0
      %v2395 = vadd.f32 %v2088, %v2269
      %v2396 = vadd.f32 %v2089, %v2272
      %v2397 = vadd.f32 %v2090, %v2277
      %v2398 = vadd.f32 %v2091, %v2280
      %v2399 = vadd.f32 %v2092, %v2285
      %v2400 = vadd.f32 %v2093, %v2288
      %v2401 = vadd.f32 %v2094, %v2293
      %v2402 = vadd.f32 %v2095, %v2296
      %v2403 = vadd.f32 %v2096, %v2301
      %v2404 = vadd.f32 %v2097, %v2304
      %v2405 = vadd.f32 %v2098, %v2309
      %v2406 = vadd.f32 %v2099, %v2312
      %v2407 = vadd.f32 %v2100, %v2317
      %v2408 = vadd.f32 %v2101, %v2320
      %v2409 = vadd.f32 %v2102, %v2325
      %v2410 = vadd.f32 %v2103, %v2328
      %v2411 = vadd.f32 %v2104, %v2333
      %v2412 = vadd.f32 %v2105, %v2336
      %v2413 = vadd.f32 %v2106, %v2341
      %v2414 = vadd.f32 %v2107, %v2344
      %v2415 = vadd.f32 %v2108, %v2349
      %v2416 = vadd.f32 %v2109, %v2352
      %v2417 = vadd.f32 %v2110, %v2357
      %v2418 = vadd.f32 %v2111, %v2360
      %v2419 = vadd.f32 %v2112, %v2365
      %v2420 = vadd.f32 %v2113, %v2368
      %v2421 = vadd.f32 %v2114, %v2373
      %v2422 = vadd.f32 %v2115, %v2376
      %v2423 = vadd.f32 %v2116, %v2381
      %v2424 = vadd.f32 %v2117, %v2384
      %v2425 = vadd.f32 %v2118, %v2389
      %v2426 = vadd.f32 %v2119, %v2392
      %v2427 = vld [vmem:[%s2120 + $0x1] sm:$0xff]
      %v2428 = vld [vmem:[%s2120 + $0x9] sm:$0xff]
      %v2429 = vld [vmem:[%s2120 + $0x19] sm:$0xff]
      %v2430 = vld [vmem:[%s2120 + $0x21] sm:$0xff]
      %v2431 = vld [vmem:[%s2120 + $0x31] sm:$0xff]
      %v2432 = vld [vmem:[%s2120 + $0x39] sm:$0xff]
      %v2433 = vld [vmem:[%s2120 + $0x49] sm:$0xff]
      %v2434 = vld [vmem:[%s2120 + $0x51] sm:$0xff]
      %v2435 = vld [vmem:[%s2120 + $0x61] sm:$0xff]
      %v2436 = vld [vmem:[%s2120 + $0x69] sm:$0xff]
      %v2437 = vld [vmem:[%s2120 + $0x79] sm:$0xff]
      %v2438 = vld [vmem:[%s2120 + $0x81] sm:$0xff]
      %v2439 = vld [vmem:[%s2120 + $0x91] sm:$0xff]
      %v2440 = vld [vmem:[%s2120 + $0x99] sm:$0xff]
      %v2441 = vld [vmem:[%s2120 + $0xa9] sm:$0xff]
      %v2442 = vld [vmem:[%s2120 + $0xb1] sm:$0xff]
      %v2443 = vld [vmem:[%s2120 + $0xc1] sm:$0xff]
      %v2444 = vld [vmem:[%s2120 + $0xc9] sm:$0xff]
      %v2445 = vld [vmem:[%s2120 + $0xd9] sm:$0xff]
      %v2446 = vld [vmem:[%s2120 + $0xe1] sm:$0xff]
      %v2447 = vld [vmem:[%s2120 + $0xf1] sm:$0xff]
      %v2448 = vld [vmem:[%s2120 + $0xf9] sm:$0xff]
      %v2449 = vld [vmem:[%s2120 + $0x109] sm:$0xff]
      %v2450 = vld [vmem:[%s2120 + $0x111] sm:$0xff]
      %v2451 = vld [vmem:[%s2120 + $0x121] sm:$0xff]
      %v2452 = vld [vmem:[%s2120 + $0x129] sm:$0xff]
      %v2453 = vld [vmem:[%s2120 + $0x139] sm:$0xff]
      %v2454 = vld [vmem:[%s2120 + $0x141] sm:$0xff]
      %v2455 = vld [vmem:[%s2120 + $0x151] sm:$0xff]
      %v2456 = vld [vmem:[%s2120 + $0x159] sm:$0xff]
      %v2457 = vld [vmem:[%s2120 + $0x169] sm:$0xff]
      %v2458 = vld [vmem:[%s2120 + $0x171] sm:$0xff]
      %v2459 = vpack.c.bf16 %v2428, %v2427
      %v2460 = vpack.c.bf16 %v2430, %v2429
      %v2461 = vpack.c.bf16 %v2432, %v2431
      %v2462 = vpack.c.bf16 %v2434, %v2433
      %v2463 = vpack.c.bf16 %v2436, %v2435
      %v2464 = vpack.c.bf16 %v2438, %v2437
      %v2465 = vpack.c.bf16 %v2440, %v2439
      %v2466 = vpack.c.bf16 %v2442, %v2441
      %v2467 = vpack.c.bf16 %v2444, %v2443
      %v2468 = vpack.c.bf16 %v2446, %v2445
      %v2469 = vpack.c.bf16 %v2448, %v2447
      %v2470 = vpack.c.bf16 %v2450, %v2449
      %v2471 = vpack.c.bf16 %v2452, %v2451
      %v2472 = vpack.c.bf16 %v2454, %v2453
      %v2473 = vpack.c.bf16 %v2456, %v2455
      %v2474 = vpack.c.bf16 %v2458, %v2457
      %s2475 = scalar_lea.vmem %s1, 448
      %v2476 = vld [vmem:[%s2475] sm:$0xf]
      %v2477 = vld [vmem:[%s2475 + $0x4] sm:$0xf]
      %v2478 = vld [vmem:[%s2475 + $0x8] sm:$0xf]
      %v2479 = vld [vmem:[%s2475 + $0xc] sm:$0xf]
      %v2480 = vld [vmem:[%s2475 + $0x10] sm:$0xf]
      %v2481 = vld [vmem:[%s2475 + $0x14] sm:$0xf]
      %v2482 = vld [vmem:[%s2475 + $0x18] sm:$0xf]
      %v2483 = vld [vmem:[%s2475 + $0x1c] sm:$0xf]
      %v2484 = vld [vmem:[%s2475 + $0x20] sm:$0xf]
      %v2485 = vld [vmem:[%s2475 + $0x24] sm:$0xf]
      %v2486 = vld [vmem:[%s2475 + $0x28] sm:$0xf]
      %v2487 = vld [vmem:[%s2475 + $0x2c] sm:$0xf]
      %v2488 = vld [vmem:[%s2475 + $0x30] sm:$0xf]
      %v2489 = vld [vmem:[%s2475 + $0x34] sm:$0xf]
      %v2490 = vld [vmem:[%s2475 + $0x38] sm:$0xf]
      %v2491 = vld [vmem:[%s2475 + $0x3c] sm:$0xf]
      %v2508 = vunpack.c.l.b16 %v2476
      %v2509 = vunpack.c.l.b16 %v2477
      %v2510 = vunpack.c.l.b16 %v2478
      %v2511 = vunpack.c.l.b16 %v2479
      %v2512 = vunpack.c.l.b16 %v2480
      %v2513 = vunpack.c.l.b16 %v2481
      %v2514 = vunpack.c.l.b16 %v2482
      %v2515 = vunpack.c.l.b16 %v2483
      %v2516 = vunpack.c.l.b16 %v2484
      %v2517 = vunpack.c.l.b16 %v2485
      %v2518 = vunpack.c.l.b16 %v2486
      %v2519 = vunpack.c.l.b16 %v2487
      %v2520 = vunpack.c.l.b16 %v2488
      %v2521 = vunpack.c.l.b16 %v2489
      %v2522 = vunpack.c.l.b16 %v2490
      %v2523 = vunpack.c.l.b16 %v2491
      %v2524 = vpack.c.b16 %v2509, %v2508
      %v2525 = vpack.c.b16 %v2511, %v2510
      %v2526 = vpack.c.b16 %v2513, %v2512
      %v2527 = vpack.c.b16 %v2515, %v2514
      %v2528 = vpack.c.b16 %v2517, %v2516
      %v2529 = vpack.c.b16 %v2519, %v2518
      %v2530 = vpack.c.b16 %v2521, %v2520
      %v2531 = vpack.c.b16 %v2523, %v2522
      %2540 = vmatprep.subr.bf16.mxu0 0
      %2541 = vmatpush1.bf16.msra.mxu0 %v2524
      %2542 = vmatprep.subr.bf16.mxu0 0
      %2543 = vmatpush1.bf16.msra.mxu0 %v2525
      %2544 = vmatprep.subr.bf16.mxu0 0
      %2545 = vmatpush1.bf16.msra.mxu0 %v2526
      %2546 = vmatprep.subr.bf16.mxu0 0
      %2547 = vmatpush1.bf16.msra.mxu0 %v2527
      %2548 = vmatprep.subr.bf16.mxu0 0
      %2549 = vmatpush1.bf16.msra.mxu0 %v2528
      %2550 = vmatprep.subr.bf16.mxu0 0
      %2551 = vmatpush1.bf16.msra.mxu0 %v2529
      %2552 = vmatprep.subr.bf16.mxu0 0
      %2553 = vmatpush1.bf16.msra.mxu0 %v2530
      %2554 = vmatprep.subr.bf16.mxu0 0
      %2555 = vmatpush1.bf16.msra.mxu0 %v2531
      %2556 = vmatprep.subr.bf16.mxu0 0
      %2557 = vmatpush1.bf16.msra.mxu0 0
      %2558 = vmatprep.subr.bf16.mxu0 0
      %2559 = vmatpush1.bf16.msra.mxu0 0
      %2560 = vmatprep.subr.bf16.mxu0 0
      %2561 = vmatpush1.bf16.msra.mxu0 0
      %2562 = vmatprep.subr.bf16.mxu0 0
      %2563 = vmatpush1.bf16.msra.mxu0 0
      %2564 = vmatprep.subr.bf16.mxu0 0
      %2565 = vmatpush1.bf16.msra.mxu0 0
      %2566 = vmatprep.subr.bf16.mxu0 0
      %2567 = vmatpush1.bf16.msra.mxu0 0
      %2568 = vmatprep.subr.bf16.mxu0 0
      %2569 = vmatpush1.bf16.msra.mxu0 0
      %2570 = vmatprep.subr.bf16.mxu0 0
      %2571 = vmatpush1.bf16.msra.mxu0 0
      %2572 = vmatprep.mubr.bf16.mxu0 0
      %2573 = vmatmul.mubr.bf16.gmra.mrb[0].mxu0 %v2459
      %v2574 = vpop.f32.mrb[0].mxu0
      %v2575 = vadd.f32 0.0, %v2574
      %v2576 = vpop.f32.mrb[0].mxu0
      %v2577 = vpop.f32.mrb[0].mxu0
      %v2578 = vadd.f32 0.0, %v2577
      %v2579 = vpop.f32.mrb[0].mxu0
      %2580 = vmatprep.mubr.bf16.mxu0 0
      %2581 = vmatmul.mubr.bf16.gmra.mrb[0].mxu0 %v2460
      %v2582 = vpop.f32.mrb[0].mxu0
      %v2583 = vadd.f32 0.0, %v2582
      %v2584 = vpop.f32.mrb[0].mxu0
      %v2585 = vpop.f32.mrb[0].mxu0
      %v2586 = vadd.f32 0.0, %v2585
      %v2587 = vpop.f32.mrb[0].mxu0
      %2588 = vmatprep.mubr.bf16.mxu0 0
      %2589 = vmatmul.mubr.bf16.gmra.mrb[0].mxu0 %v2461
      %v2590 = vpop.f32.mrb[0].mxu0
      %v2591 = vadd.f32 0.0, %v2590
      %v2592 = vpop.f32.mrb[0].mxu0
      %v2593 = vpop.f32.mrb[0].mxu0
      %v2594 = vadd.f32 0.0, %v2593
      %v2595 = vpop.f32.mrb[0].mxu0
      %2596 = vmatprep.mubr.bf16.mxu0 0
      %2597 = vmatmul.mubr.bf16.gmra.mrb[0].mxu0 %v2462
      %v2598 = vpop.f32.mrb[0].mxu0
      %v2599 = vadd.f32 0.0, %v2598
      %v2600 = vpop.f32.mrb[0].mxu0
      %v2601 = vpop.f32.mrb[0].mxu0
      %v2602 = vadd.f32 0.0, %v2601
      %v2603 = vpop.f32.mrb[0].mxu0
      %2604 = vmatprep.mubr.bf16.mxu0 0
      %2605 = vmatmul.mubr.bf16.gmra.mrb[0].mxu0 %v2463
      %v2606 = vpop.f32.mrb[0].mxu0
      %v2607 = vadd.f32 0.0, %v2606
      %v2608 = vpop.f32.mrb[0].mxu0
      %v2609 = vpop.f32.mrb[0].mxu0
      %v2610 = vadd.f32 0.0, %v2609
      %v2611 = vpop.f32.mrb[0].mxu0
      %2612 = vmatprep.mubr.bf16.mxu0 0
      %2613 = vmatmul.mubr.bf16.gmra.mrb[0].mxu0 %v2464
      %v2614 = vpop.f32.mrb[0].mxu0
      %v2615 = vadd.f32 0.0, %v2614
      %v2616 = vpop.f32.mrb[0].mxu0
      %v2617 = vpop.f32.mrb[0].mxu0
      %v2618 = vadd.f32 0.0, %v2617
      %v2619 = vpop.f32.mrb[0].mxu0
      %2620 = vmatprep.mubr.bf16.mxu0 0
      %2621 = vmatmul.mubr.bf16.gmra.mrb[0].mxu0 %v2465
      %v2622 = vpop.f32.mrb[0].mxu0
      %v2623 = vadd.f32 0.0, %v2622
      %v2624 = vpop.f32.mrb[0].mxu0
      %v2625 = vpop.f32.mrb[0].mxu0
      %v2626 = vadd.f32 0.0, %v2625
      %v2627 = vpop.f32.mrb[0].mxu0
      %2628 = vmatprep.mubr.bf16.mxu0 0
      %2629 = vmatmul.mubr.bf16.gmra.mrb[0].mxu0 %v2466
      %v2630 = vpop.f32.mrb[0].mxu0
      %v2631 = vadd.f32 0.0, %v2630
      %v2632 = vpop.f32.mrb[0].mxu0
      %v2633 = vpop.f32.mrb[0].mxu0
      %v2634 = vadd.f32 0.0, %v2633
      %v2635 = vpop.f32.mrb[0].mxu0
      %2636 = vmatprep.mubr.bf16.mxu0 0
      %2637 = vmatmul.mubr.bf16.gmra.mrb[0].mxu0 %v2467
      %v2638 = vpop.f32.mrb[0].mxu0
      %v2639 = vadd.f32 0.0, %v2638
      %v2640 = vpop.f32.mrb[0].mxu0
      %v2641 = vpop.f32.mrb[0].mxu0
      %v2642 = vadd.f32 0.0, %v2641
      %v2643 = vpop.f32.mrb[0].mxu0
      %2644 = vmatprep.mubr.bf16.mxu0 0
      %2645 = vmatmul.mubr.bf16.gmra.mrb[0].mxu0 %v2468
      %v2646 = vpop.f32.mrb[0].mxu0
      %v2647 = vadd.f32 0.0, %v2646
      %v2648 = vpop.f32.mrb[0].mxu0
      %v2649 = vpop.f32.mrb[0].mxu0
      %v2650 = vadd.f32 0.0, %v2649
      %v2651 = vpop.f32.mrb[0].mxu0
      %2652 = vmatprep.mubr.bf16.mxu0 0
      %2653 = vmatmul.mubr.bf16.gmra.mrb[0].mxu0 %v2469
      %v2654 = vpop.f32.mrb[0].mxu0
      %v2655 = vadd.f32 0.0, %v2654
      %v2656 = vpop.f32.mrb[0].mxu0
      %v2657 = vpop.f32.mrb[0].mxu0
      %v2658 = vadd.f32 0.0, %v2657
      %v2659 = vpop.f32.mrb[0].mxu0
      %2660 = vmatprep.mubr.bf16.mxu0 0
      %2661 = vmatmul.mubr.bf16.gmra.mrb[0].mxu0 %v2470
      %v2662 = vpop.f32.mrb[0].mxu0
      %v2663 = vadd.f32 0.0, %v2662
      %v2664 = vpop.f32.mrb[0].mxu0
      %v2665 = vpop.f32.mrb[0].mxu0
      %v2666 = vadd.f32 0.0, %v2665
      %v2667 = vpop.f32.mrb[0].mxu0
      %2668 = vmatprep.mubr.bf16.mxu0 0
      %2669 = vmatmul.mubr.bf16.gmra.mrb[0].mxu0 %v2471
      %v2670 = vpop.f32.mrb[0].mxu0
      %v2671 = vadd.f32 0.0, %v2670
      %v2672 = vpop.f32.mrb[0].mxu0
      %v2673 = vpop.f32.mrb[0].mxu0
      %v2674 = vadd.f32 0.0, %v2673
      %v2675 = vpop.f32.mrb[0].mxu0
      %2676 = vmatprep.mubr.bf16.mxu0 0
      %2677 = vmatmul.mubr.bf16.gmra.mrb[0].mxu0 %v2472
      %v2678 = vpop.f32.mrb[0].mxu0
      %v2679 = vadd.f32 0.0, %v2678
      %v2680 = vpop.f32.mrb[0].mxu0
      %v2681 = vpop.f32.mrb[0].mxu0
      %v2682 = vadd.f32 0.0, %v2681
      %v2683 = vpop.f32.mrb[0].mxu0
      %2684 = vmatprep.mubr.bf16.mxu0 0
      %2685 = vmatmul.mubr.bf16.gmra.mrb[0].mxu0 %v2473
      %v2686 = vpop.f32.mrb[0].mxu0
      %v2687 = vadd.f32 0.0, %v2686
      %v2688 = vpop.f32.mrb[0].mxu0
      %v2689 = vpop.f32.mrb[0].mxu0
      %v2690 = vadd.f32 0.0, %v2689
      %v2691 = vpop.f32.mrb[0].mxu0
      %2692 = vmatprep.mubr.bf16.mxu0 0
      %2693 = vmatmul.mubr.bf16.gmra.mrb[0].mxu0 %v2474
      %v2694 = vpop.f32.mrb[0].mxu0
      %v2695 = vadd.f32 0.0, %v2694
      %v2696 = vpop.f32.mrb[0].mxu0
      %v2697 = vpop.f32.mrb[0].mxu0
      %v2698 = vadd.f32 0.0, %v2697
      %v2699 = vpop.f32.mrb[0].mxu0
      %2700 = vdwg.mxu0
      %v2701 = vadd.f32 %v2395, %v2575
      %v2702 = vadd.f32 %v2396, %v2578
      %v2703 = vadd.f32 %v2397, %v2583
      %v2704 = vadd.f32 %v2398, %v2586
      %v2705 = vadd.f32 %v2399, %v2591
      %v2706 = vadd.f32 %v2400, %v2594
      %v2707 = vadd.f32 %v2401, %v2599
      %v2708 = vadd.f32 %v2402, %v2602
      %v2709 = vadd.f32 %v2403, %v2607
      %v2710 = vadd.f32 %v2404, %v2610
      %v2711 = vadd.f32 %v2405, %v2615
      %v2712 = vadd.f32 %v2406, %v2618
      %v2713 = vadd.f32 %v2407, %v2623
      %v2714 = vadd.f32 %v2408, %v2626
      %v2715 = vadd.f32 %v2409, %v2631
      %v2716 = vadd.f32 %v2410, %v2634
      %v2717 = vadd.f32 %v2411, %v2639
      %v2718 = vadd.f32 %v2412, %v2642
      %v2719 = vadd.f32 %v2413, %v2647
      %v2720 = vadd.f32 %v2414, %v2650
      %v2721 = vadd.f32 %v2415, %v2655
      %v2722 = vadd.f32 %v2416, %v2658
      %v2723 = vadd.f32 %v2417, %v2663
      %v2724 = vadd.f32 %v2418, %v2666
      %v2725 = vadd.f32 %v2419, %v2671
      %v2726 = vadd.f32 %v2420, %v2674
      %v2727 = vadd.f32 %v2421, %v2679
      %v2728 = vadd.f32 %v2422, %v2682
      %v2729 = vadd.f32 %v2423, %v2687
      %v2730 = vadd.f32 %v2424, %v2690
      %v2731 = vadd.f32 %v2425, %v2695
      %v2732 = vadd.f32 %v2426, %v2698
      %v2733 = vld [vmem:[%s2120 + $0x2] sm:$0xff]
      %v2734 = vld [vmem:[%s2120 + $0xa] sm:$0xff]
      %v2735 = vld [vmem:[%s2120 + $0x1a] sm:$0xff]
      %v2736 = vld [vmem:[%s2120 + $0x22] sm:$0xff]
      %v2737 = vld [vmem:[%s2120 + $0x32] sm:$0xff]
      %v2738 = vld [vmem:[%s2120 + $0x3a] sm:$0xff]
      %v2739 = vld [vmem:[%s2120 + $0x4a] sm:$0xff]
      %v2740 = vld [vmem:[%s2120 + $0x52] sm:$0xff]
      %v2741 = vld [vmem:[%s2120 + $0x62] sm:$0xff]
      %v2742 = vld [vmem:[%s2120 + $0x6a] sm:$0xff]
      %v2743 = vld [vmem:[%s2120 + $0x7a] sm:$0xff]
      %v2744 = vld [vmem:[%s2120 + $0x82] sm:$0xff]
      %v2745 = vld [vmem:[%s2120 + $0x92] sm:$0xff]
      %v2746 = vld [vmem:[%s2120 + $0x9a] sm:$0xff]
      %v2747 = vld [vmem:[%s2120 + $0xaa] sm:$0xff]
      %v2748 = vld [vmem:[%s2120 + $0xb2] sm:$0xff]
      %v2749 = vld [vmem:[%s2120 + $0xc2] sm:$0xff]
      %v2750 = vld [vmem:[%s2120 + $0xca] sm:$0xff]
      %v2751 = vld [vmem:[%s2120 + $0xda] sm:$0xff]
      %v2752 = vld [vmem:[%s2120 + $0xe2] sm:$0xff]
      %v2753 = vld [vmem:[%s2120 + $0xf2] sm:$0xff]
      %v2754 = vld [vmem:[%s2120 + $0xfa] sm:$0xff]
      %v2755 = vld [vmem:[%s2120 + $0x10a] sm:$0xff]
      %v2756 = vld [vmem:[%s2120 + $0x112] sm:$0xff]
      %v2757 = vld [vmem:[%s2120 + $0x122] sm:$0xff]
      %v2758 = vld [vmem:[%s2120 + $0x12a] sm:$0xff]
      %v2759 = vld [vmem:[%s2120 + $0x13a] sm:$0xff]
      %v2760 = vld [vmem:[%s2120 + $0x142] sm:$0xff]
      %v2761 = vld [vmem:[%s2120 + $0x152] sm:$0xff]
      %v2762 = vld [vmem:[%s2120 + $0x15a] sm:$0xff]
      %v2763 = vld [vmem:[%s2120 + $0x16a] sm:$0xff]
      %v2764 = vld [vmem:[%s2120 + $0x172] sm:$0xff]
      %v2765 = vpack.c.bf16 %v2734, %v2733
      %v2766 = vpack.c.bf16 %v2736, %v2735
      %v2767 = vpack.c.bf16 %v2738, %v2737
      %v2768 = vpack.c.bf16 %v2740, %v2739
      %v2769 = vpack.c.bf16 %v2742, %v2741
      %v2770 = vpack.c.bf16 %v2744, %v2743
      %v2771 = vpack.c.bf16 %v2746, %v2745
      %v2772 = vpack.c.bf16 %v2748, %v2747
      %v2773 = vpack.c.bf16 %v2750, %v2749
      %v2774 = vpack.c.bf16 %v2752, %v2751
      %v2775 = vpack.c.bf16 %v2754, %v2753
      %v2776 = vpack.c.bf16 %v2756, %v2755
      %v2777 = vpack.c.bf16 %v2758, %v2757
      %v2778 = vpack.c.bf16 %v2760, %v2759
      %v2779 = vpack.c.bf16 %v2762, %v2761
      %v2780 = vpack.c.bf16 %v2764, %v2763
      %s2781 = scalar_lea.vmem %s1, 512
      %v2782 = vld [vmem:[%s2781] sm:$0xf]
      %v2783 = vld [vmem:[%s2781 + $0x4] sm:$0xf]
      %v2784 = vld [vmem:[%s2781 + $0x8] sm:$0xf]
      %v2785 = vld [vmem:[%s2781 + $0xc] sm:$0xf]
      %v2786 = vld [vmem:[%s2781 + $0x10] sm:$0xf]
      %v2787 = vld [vmem:[%s2781 + $0x14] sm:$0xf]
      %v2788 = vld [vmem:[%s2781 + $0x18] sm:$0xf]
      %v2789 = vld [vmem:[%s2781 + $0x1c] sm:$0xf]
      %v2790 = vld [vmem:[%s2781 + $0x20] sm:$0xf]
      %v2791 = vld [vmem:[%s2781 + $0x24] sm:$0xf]
      %v2792 = vld [vmem:[%s2781 + $0x28] sm:$0xf]
      %v2793 = vld [vmem:[%s2781 + $0x2c] sm:$0xf]
      %v2794 = vld [vmem:[%s2781 + $0x30] sm:$0xf]
      %v2795 = vld [vmem:[%s2781 + $0x34] sm:$0xf]
      %v2796 = vld [vmem:[%s2781 + $0x38] sm:$0xf]
      %v2797 = vld [vmem:[%s2781 + $0x3c] sm:$0xf]
      %v2814 = vunpack.c.l.b16 %v2782
      %v2815 = vunpack.c.l.b16 %v2783
      %v2816 = vunpack.c.l.b16 %v2784
      %v2817 = vunpack.c.l.b16 %v2785
      %v2818 = vunpack.c.l.b16 %v2786
      %v2819 = vunpack.c.l.b16 %v2787
      %v2820 = vunpack.c.l.b16 %v2788
      %v2821 = vunpack.c.l.b16 %v2789
      %v2822 = vunpack.c.l.b16 %v2790
      %v2823 = vunpack.c.l.b16 %v2791
      %v2824 = vunpack.c.l.b16 %v2792
      %v2825 = vunpack.c.l.b16 %v2793
      %v2826 = vunpack.c.l.b16 %v2794
      %v2827 = vunpack.c.l.b16 %v2795
      %v2828 = vunpack.c.l.b16 %v2796
      %v2829 = vunpack.c.l.b16 %v2797
      %v2830 = vpack.c.b16 %v2815, %v2814
      %v2831 = vpack.c.b16 %v2817, %v2816
      %v2832 = vpack.c.b16 %v2819, %v2818
      %v2833 = vpack.c.b16 %v2821, %v2820
      %v2834 = vpack.c.b16 %v2823, %v2822
      %v2835 = vpack.c.b16 %v2825, %v2824
      %v2836 = vpack.c.b16 %v2827, %v2826
      %v2837 = vpack.c.b16 %v2829, %v2828
      %2846 = vmatprep.subr.bf16.mxu0 0
      %2847 = vmatpush1.bf16.msra.mxu0 %v2830
      %2848 = vmatprep.subr.bf16.mxu0 0
      %2849 = vmatpush1.bf16.msra.mxu0 %v2831
      %2850 = vmatprep.subr.bf16.mxu0 0
      %2851 = vmatpush1.bf16.msra.mxu0 %v2832
      %2852 = vmatprep.subr.bf16.mxu0 0
      %2853 = vmatpush1.bf16.msra.mxu0 %v2833
      %2854 = vmatprep.subr.bf16.mxu0 0
      %2855 = vmatpush1.bf16.msra.mxu0 %v2834
      %2856 = vmatprep.subr.bf16.mxu0 0
      %2857 = vmatpush1.bf16.msra.mxu0 %v2835
      %2858 = vmatprep.subr.bf16.mxu0 0
      %2859 = vmatpush1.bf16.msra.mxu0 %v2836
      %2860 = vmatprep.subr.bf16.mxu0 0
      %2861 = vmatpush1.bf16.msra.mxu0 %v2837
      %2862 = vmatprep.subr.bf16.mxu0 0
      %2863 = vmatpush1.bf16.msra.mxu0 0
      %2864 = vmatprep.subr.bf16.mxu0 0
      %2865 = vmatpush1.bf16.msra.mxu0 0
      %2866 = vmatprep.subr.bf16.mxu0 0
      %2867 = vmatpush1.bf16.msra.mxu0 0
      %2868 = vmatprep.subr.bf16.mxu0 0
      %2869 = vmatpush1.bf16.msra.mxu0 0
      %2870 = vmatprep.subr.bf16.mxu0 0
      %2871 = vmatpush1.bf16.msra.mxu0 0
      %2872 = vmatprep.subr.bf16.mxu0 0
      %2873 = vmatpush1.bf16.msra.mxu0 0
      %2874 = vmatprep.subr.bf16.mxu0 0
      %2875 = vmatpush1.bf16.msra.mxu0 0
      %2876 = vmatprep.subr.bf16.mxu0 0
      %2877 = vmatpush1.bf16.msra.mxu0 0
      %2878 = vmatprep.mubr.bf16.mxu0 0
      %2879 = vmatmul.mubr.bf16.gmra.mrb[0].mxu0 %v2765
      %v2880 = vpop.f32.mrb[0].mxu0
      %v2881 = vadd.f32 0.0, %v2880
      %v2882 = vpop.f32.mrb[0].mxu0
      %v2883 = vpop.f32.mrb[0].mxu0
      %v2884 = vadd.f32 0.0, %v2883
      %v2885 = vpop.f32.mrb[0].mxu0
      %2886 = vmatprep.mubr.bf16.mxu0 0
      %2887 = vmatmul.mubr.bf16.gmra.mrb[0].mxu0 %v2766
      %v2888 = vpop.f32.mrb[0].mxu0
      %v2889 = vadd.f32 0.0, %v2888
      %v2890 = vpop.f32.mrb[0].mxu0
      %v2891 = vpop.f32.mrb[0].mxu0
      %v2892 = vadd.f32 0.0, %v2891
      %v2893 = vpop.f32.mrb[0].mxu0
      %2894 = vmatprep.mubr.bf16.mxu0 0
      %2895 = vmatmul.mubr.bf16.gmra.mrb[0].mxu0 %v2767
      %v2896 = vpop.f32.mrb[0].mxu0
      %v2897 = vadd.f32 0.0, %v2896
      %v2898 = vpop.f32.mrb[0].mxu0
      %v2899 = vpop.f32.mrb[0].mxu0
      %v2900 = vadd.f32 0.0, %v2899
      %v2901 = vpop.f32.mrb[0].mxu0
      %2902 = vmatprep.mubr.bf16.mxu0 0
      %2903 = vmatmul.mubr.bf16.gmra.mrb[0].mxu0 %v2768
      %v2904 = vpop.f32.mrb[0].mxu0
      %v2905 = vadd.f32 0.0, %v2904
      %v2906 = vpop.f32.mrb[0].mxu0
      %v2907 = vpop.f32.mrb[0].mxu0
      %v2908 = vadd.f32 0.0, %v2907
      %v2909 = vpop.f32.mrb[0].mxu0
      %2910 = vmatprep.mubr.bf16.mxu0 0
      %2911 = vmatmul.mubr.bf16.gmra.mrb[0].mxu0 %v2769
      %v2912 = vpop.f32.mrb[0].mxu0
      %v2913 = vadd.f32 0.0, %v2912
      %v2914 = vpop.f32.mrb[0].mxu0
      %v2915 = vpop.f32.mrb[0].mxu0
      %v2916 = vadd.f32 0.0, %v2915
      %v2917 = vpop.f32.mrb[0].mxu0
      %2918 = vmatprep.mubr.bf16.mxu0 0
      %2919 = vmatmul.mubr.bf16.gmra.mrb[0].mxu0 %v2770
      %v2920 = vpop.f32.mrb[0].mxu0
      %v2921 = vadd.f32 0.0, %v2920
      %v2922 = vpop.f32.mrb[0].mxu0
      %v2923 = vpop.f32.mrb[0].mxu0
      %v2924 = vadd.f32 0.0, %v2923
      %v2925 = vpop.f32.mrb[0].mxu0
      %2926 = vmatprep.mubr.bf16.mxu0 0
      %2927 = vmatmul.mubr.bf16.gmra.mrb[0].mxu0 %v2771
      %v2928 = vpop.f32.mrb[0].mxu0
      %v2929 = vadd.f32 0.0, %v2928
      %v2930 = vpop.f32.mrb[0].mxu0
      %v2931 = vpop.f32.mrb[0].mxu0
      %v2932 = vadd.f32 0.0, %v2931
      %v2933 = vpop.f32.mrb[0].mxu0
      %2934 = vmatprep.mubr.bf16.mxu0 0
      %2935 = vmatmul.mubr.bf16.gmra.mrb[0].mxu0 %v2772
      %v2936 = vpop.f32.mrb[0].mxu0
      %v2937 = vadd.f32 0.0, %v2936
      %v2938 = vpop.f32.mrb[0].mxu0
      %v2939 = vpop.f32.mrb[0].mxu0
      %v2940 = vadd.f32 0.0, %v2939
      %v2941 = vpop.f32.mrb[0].mxu0
      %2942 = vmatprep.mubr.bf16.mxu0 0
      %2943 = vmatmul.mubr.bf16.gmra.mrb[0].mxu0 %v2773
      %v2944 = vpop.f32.mrb[0].mxu0
      %v2945 = vadd.f32 0.0, %v2944
      %v2946 = vpop.f32.mrb[0].mxu0
      %v2947 = vpop.f32.mrb[0].mxu0
      %v2948 = vadd.f32 0.0, %v2947
      %v2949 = vpop.f32.mrb[0].mxu0
      %2950 = vmatprep.mubr.bf16.mxu0 0
      %2951 = vmatmul.mubr.bf16.gmra.mrb[0].mxu0 %v2774
      %v2952 = vpop.f32.mrb[0].mxu0
      %v2953 = vadd.f32 0.0, %v2952
      %v2954 = vpop.f32.mrb[0].mxu0
      %v2955 = vpop.f32.mrb[0].mxu0
      %v2956 = vadd.f32 0.0, %v2955
      %v2957 = vpop.f32.mrb[0].mxu0
      %2958 = vmatprep.mubr.bf16.mxu0 0
      %2959 = vmatmul.mubr.bf16.gmra.mrb[0].mxu0 %v2775
      %v2960 = vpop.f32.mrb[0].mxu0
      %v2961 = vadd.f32 0.0, %v2960
      %v2962 = vpop.f32.mrb[0].mxu0
      %v2963 = vpop.f32.mrb[0].mxu0
      %v2964 = vadd.f32 0.0, %v2963
      %v2965 = vpop.f32.mrb[0].mxu0
      %2966 = vmatprep.mubr.bf16.mxu0 0
      %2967 = vmatmul.mubr.bf16.gmra.mrb[0].mxu0 %v2776
      %v2968 = vpop.f32.mrb[0].mxu0
      %v2969 = vadd.f32 0.0, %v2968
      %v2970 = vpop.f32.mrb[0].mxu0
      %v2971 = vpop.f32.mrb[0].mxu0
      %v2972 = vadd.f32 0.0, %v2971
      %v2973 = vpop.f32.mrb[0].mxu0
      %2974 = vmatprep.mubr.bf16.mxu0 0
      %2975 = vmatmul.mubr.bf16.gmra.mrb[0].mxu0 %v2777
      %v2976 = vpop.f32.mrb[0].mxu0
      %v2977 = vadd.f32 0.0, %v2976
      %v2978 = vpop.f32.mrb[0].mxu0
      %v2979 = vpop.f32.mrb[0].mxu0
      %v2980 = vadd.f32 0.0, %v2979
      %v2981 = vpop.f32.mrb[0].mxu0
      %2982 = vmatprep.mubr.bf16.mxu0 0
      %2983 = vmatmul.mubr.bf16.gmra.mrb[0].mxu0 %v2778
      %v2984 = vpop.f32.mrb[0].mxu0
      %v2985 = vadd.f32 0.0, %v2984
      %v2986 = vpop.f32.mrb[0].mxu0
      %v2987 = vpop.f32.mrb[0].mxu0
      %v2988 = vadd.f32 0.0, %v2987
      %v2989 = vpop.f32.mrb[0].mxu0
      %2990 = vmatprep.mubr.bf16.mxu0 0
      %2991 = vmatmul.mubr.bf16.gmra.mrb[0].mxu0 %v2779
      %v2992 = vpop.f32.mrb[0].mxu0
      %v2993 = vadd.f32 0.0, %v2992
      %v2994 = vpop.f32.mrb[0].mxu0
      %v2995 = vpop.f32.mrb[0].mxu0
      %v2996 = vadd.f32 0.0, %v2995
      %v2997 = vpop.f32.mrb[0].mxu0
      %2998 = vmatprep.mubr.bf16.mxu0 0
      %2999 = vmatmul.mubr.bf16.gmra.mrb[0].mxu0 %v2780
      %v3000 = vpop.f32.mrb[0].mxu0
      %v3001 = vadd.f32 0.0, %v3000
      %v3002 = vpop.f32.mrb[0].mxu0
      %v3003 = vpop.f32.mrb[0].mxu0
      %v3004 = vadd.f32 0.0, %v3003
      %v3005 = vpop.f32.mrb[0].mxu0
      %3006 = vdwg.mxu0
      %v3007 = vadd.f32 %v2701, %v2881
      %v3008 = vadd.f32 %v2702, %v2884
      %v3009 = vadd.f32 %v2703, %v2889
      %v3010 = vadd.f32 %v2704, %v2892
      %v3011 = vadd.f32 %v2705, %v2897
      %v3012 = vadd.f32 %v2706, %v2900
      %v3013 = vadd.f32 %v2707, %v2905
      %v3014 = vadd.f32 %v2708, %v2908
      %v3015 = vadd.f32 %v2709, %v2913
      %v3016 = vadd.f32 %v2710, %v2916
      %v3017 = vadd.f32 %v2711, %v2921
      %v3018 = vadd.f32 %v2712, %v2924
      %v3019 = vadd.f32 %v2713, %v2929
      %v3020 = vadd.f32 %v2714, %v2932
      %v3021 = vadd.f32 %v2715, %v2937
      %v3022 = vadd.f32 %v2716, %v2940
      %v3023 = vadd.f32 %v2717, %v2945
      %v3024 = vadd.f32 %v2718, %v2948
      %v3025 = vadd.f32 %v2719, %v2953
      %v3026 = vadd.f32 %v2720, %v2956
      %v3027 = vadd.f32 %v2721, %v2961
      %v3028 = vadd.f32 %v2722, %v2964
      %v3029 = vadd.f32 %v2723, %v2969
      %v3030 = vadd.f32 %v2724, %v2972
      %v3031 = vadd.f32 %v2725, %v2977
      %v3032 = vadd.f32 %v2726, %v2980
      %v3033 = vadd.f32 %v2727, %v2985
      %v3034 = vadd.f32 %v2728, %v2988
      %v3035 = vadd.f32 %v2729, %v2993
      %v3036 = vadd.f32 %v2730, %v2996
      %v3037 = vadd.f32 %v2731, %v3001
      %v3038 = vadd.f32 %v2732, %v3004
      %v3039 = vld [vmem:[%s2] sm:$0x1]
      %v3041 = vlaneseq
      %v3042 = vshrl.u32 %v3041, 7
      %v3043 = vsub.s32 0, %v3042
      %v3044 = vrot.slane %v3039, %v3043
      %v3046 = vadd.f32 %v3007, %v3044
      %v3047 = vadd.f32 %v3008, %v3044
      %v3048 = vadd.f32 %v3009, %v3044
      %v3049 = vadd.f32 %v3010, %v3044
      %v3050 = vadd.f32 %v3011, %v3044
      %v3051 = vadd.f32 %v3012, %v3044
      %v3052 = vadd.f32 %v3013, %v3044
      %v3053 = vadd.f32 %v3014, %v3044
      %v3054 = vadd.f32 %v3015, %v3044
      %v3055 = vadd.f32 %v3016, %v3044
      %v3056 = vadd.f32 %v3017, %v3044
      %v3057 = vadd.f32 %v3018, %v3044
      %v3058 = vadd.f32 %v3019, %v3044
      %v3059 = vadd.f32 %v3020, %v3044
      %v3060 = vadd.f32 %v3021, %v3044
      %v3061 = vadd.f32 %v3022, %v3044
      %v3062 = vadd.f32 %v3023, %v3044
      %v3063 = vadd.f32 %v3024, %v3044
      %v3064 = vadd.f32 %v3025, %v3044
      %v3065 = vadd.f32 %v3026, %v3044
      %v3066 = vadd.f32 %v3027, %v3044
      %v3067 = vadd.f32 %v3028, %v3044
      %v3068 = vadd.f32 %v3029, %v3044
      %v3069 = vadd.f32 %v3030, %v3044
      %v3070 = vadd.f32 %v3031, %v3044
      %v3071 = vadd.f32 %v3032, %v3044
      %v3072 = vadd.f32 %v3033, %v3044
      %v3073 = vadd.f32 %v3034, %v3044
      %v3074 = vadd.f32 %v3035, %v3044
      %v3075 = vadd.f32 %v3036, %v3044
      %v3076 = vadd.f32 %v3037, %v3044
      %v3077 = vadd.f32 %v3038, %v3044
      %3078 = vst [vmem:[%s204] sm:$0xff] %v3046
      %3079 = vst [vmem:[%s204 + $0x8] sm:$0xff] %v3047
      %3080 = vst [vmem:[%s204 + $0x10] sm:$0xff] %v3048
      %3081 = vst [vmem:[%s204 + $0x18] sm:$0xff] %v3049
      %3082 = vst [vmem:[%s204 + $0x20] sm:$0xff] %v3050
      %3083 = vst [vmem:[%s204 + $0x28] sm:$0xff] %v3051
      %3084 = vst [vmem:[%s204 + $0x30] sm:$0xff] %v3052
      %3085 = vst [vmem:[%s204 + $0x38] sm:$0xff] %v3053
      %3086 = vst [vmem:[%s204 + $0x40] sm:$0xff] %v3054
      %3087 = vst [vmem:[%s204 + $0x48] sm:$0xff] %v3055
      %3088 = vst [vmem:[%s204 + $0x50] sm:$0xff] %v3056
      %3089 = vst [vmem:[%s204 + $0x58] sm:$0xff] %v3057
      %3090 = vst [vmem:[%s204 + $0x60] sm:$0xff] %v3058
      %3091 = vst [vmem:[%s204 + $0x68] sm:$0xff] %v3059
      %3092 = vst [vmem:[%s204 + $0x70] sm:$0xff] %v3060
      %3093 = vst [vmem:[%s204 + $0x78] sm:$0xff] %v3061
      %3094 = vst [vmem:[%s204 + $0x80] sm:$0xff] %v3062
      %3095 = vst [vmem:[%s204 + $0x88] sm:$0xff] %v3063
      %3096 = vst [vmem:[%s204 + $0x90] sm:$0xff] %v3064
      %3097 = vst [vmem:[%s204 + $0x98] sm:$0xff] %v3065
      %3098 = vst [vmem:[%s204 + $0xa0] sm:$0xff] %v3066
      %3099 = vst [vmem:[%s204 + $0xa8] sm:$0xff] %v3067
      %3100 = vst [vmem:[%s204 + $0xb0] sm:$0xff] %v3068
      %3101 = vst [vmem:[%s204 + $0xb8] sm:$0xff] %v3069
      %3102 = vst [vmem:[%s204 + $0xc0] sm:$0xff] %v3070
      %3103 = vst [vmem:[%s204 + $0xc8] sm:$0xff] %v3071
      %3104 = vst [vmem:[%s204 + $0xd0] sm:$0xff] %v3072
      %3105 = vst [vmem:[%s204 + $0xd8] sm:$0xff] %v3073
      %3106 = vst [vmem:[%s204 + $0xe0] sm:$0xff] %v3074
      %3107 = vst [vmem:[%s204 + $0xe8] sm:$0xff] %v3075
      %3108 = vst [vmem:[%s204 + $0xf0] sm:$0xff] %v3076
      %3109 = vst [vmem:[%s204 + $0xf8] sm:$0xff] %v3077
      %v3110 = vadd.f32 %v3046, %v3047
      %v3111 = vadd.f32 %v3110, %v3048
      %v3112 = vadd.f32 %v3111, %v3049
      %v3113 = vadd.f32 %v3112, %v3050
      %v3114 = vadd.f32 %v3113, %v3051
      %v3115 = vadd.f32 %v3114, %v3052
      %v3116 = vadd.f32 %v3115, %v3053
      %v3117 = vadd.f32 %v3116, %v3054
      %v3118 = vadd.f32 %v3117, %v3055
      %v3119 = vadd.f32 %v3118, %v3056
      %v3120 = vadd.f32 %v3119, %v3057
      %v3121 = vadd.f32 %v3120, %v3058
      %v3122 = vadd.f32 %v3121, %v3059
      %v3123 = vadd.f32 %v3122, %v3060
      %v3124 = vadd.f32 %v3123, %v3061
      %v3125 = vadd.f32 %v3124, %v3062
      %v3126 = vadd.f32 %v3125, %v3063
      %v3127 = vadd.f32 %v3126, %v3064
      %v3128 = vadd.f32 %v3127, %v3065
      %v3129 = vadd.f32 %v3128, %v3066
      %v3130 = vadd.f32 %v3129, %v3067
      %v3131 = vadd.f32 %v3130, %v3068
      %v3132 = vadd.f32 %v3131, %v3069
      %v3133 = vadd.f32 %v3132, %v3070
      %v3134 = vadd.f32 %v3133, %v3071
      %v3135 = vadd.f32 %v3134, %v3072
      %v3136 = vadd.f32 %v3135, %v3073
      %v3137 = vadd.f32 %v3136, %v3074
      %v3138 = vadd.f32 %v3137, %v3075
      %v3139 = vadd.f32 %v3138, %v3076
      %v3140 = vadd.f32 %v3139, %v3077
      %v3141 = vrot.slane %v3140, 4
      %v3142 = vadd.f32 %v3140, %v3141
      %v3143 = vrot.slane %v3142, 2
      %v3144 = vadd.f32 %v3142, %v3143
      %v3145 = vrot.slane %v3144, 1
      %v3146 = vadd.f32 %v3144, %v3145
      %3147 = vst [vmem:[%s209] sm:$0x1] %v3146
      %v3148 = vmul.f32 %v3046, %v3046
      %v3149 = vmul.f32 %v3047, %v3047
      %v3150 = vmul.f32 %v3048, %v3048
      %v3151 = vmul.f32 %v3049, %v3049
      %v3152 = vmul.f32 %v3050, %v3050
      %v3153 = vmul.f32 %v3051, %v3051
      %v3154 = vmul.f32 %v3052, %v3052
      %v3155 = vmul.f32 %v3053, %v3053
      %v3156 = vmul.f32 %v3054, %v3054
      %v3157 = vmul.f32 %v3055, %v3055
      %v3158 = vmul.f32 %v3056, %v3056
      %v3159 = vmul.f32 %v3057, %v3057
      %v3160 = vmul.f32 %v3058, %v3058
      %v3161 = vmul.f32 %v3059, %v3059
      %v3162 = vmul.f32 %v3060, %v3060
      %v3163 = vmul.f32 %v3061, %v3061
      %v3164 = vmul.f32 %v3062, %v3062
      %v3165 = vmul.f32 %v3063, %v3063
      %v3166 = vmul.f32 %v3064, %v3064
      %v3167 = vmul.f32 %v3065, %v3065
      %v3168 = vmul.f32 %v3066, %v3066
      %v3169 = vmul.f32 %v3067, %v3067
      %v3170 = vmul.f32 %v3068, %v3068
      %v3171 = vmul.f32 %v3069, %v3069
      %v3172 = vmul.f32 %v3070, %v3070
      %v3173 = vmul.f32 %v3071, %v3071
      %v3174 = vmul.f32 %v3072, %v3072
      %v3175 = vmul.f32 %v3073, %v3073
      %v3176 = vmul.f32 %v3074, %v3074
      %v3177 = vmul.f32 %v3075, %v3075
      %v3178 = vmul.f32 %v3076, %v3076
      %v3179 = vmul.f32 %v3077, %v3077
      %v3180 = vadd.f32 %v3148, %v3149
      %v3181 = vadd.f32 %v3180, %v3150
      %v3182 = vadd.f32 %v3181, %v3151
      %v3183 = vadd.f32 %v3182, %v3152
      %v3184 = vadd.f32 %v3183, %v3153
      %v3185 = vadd.f32 %v3184, %v3154
      %v3186 = vadd.f32 %v3185, %v3155
      %v3187 = vadd.f32 %v3186, %v3156
      %v3188 = vadd.f32 %v3187, %v3157
      %v3189 = vadd.f32 %v3188, %v3158
      %v3190 = vadd.f32 %v3189, %v3159
      %v3191 = vadd.f32 %v3190, %v3160
      %v3192 = vadd.f32 %v3191, %v3161
      %v3193 = vadd.f32 %v3192, %v3162
      %v3194 = vadd.f32 %v3193, %v3163
      %v3195 = vadd.f32 %v3194, %v3164
      %v3196 = vadd.f32 %v3195, %v3165
      %v3197 = vadd.f32 %v3196, %v3166
      %v3198 = vadd.f32 %v3197, %v3167
      %v3199 = vadd.f32 %v3198, %v3168
      %v3200 = vadd.f32 %v3199, %v3169
      %v3201 = vadd.f32 %v3200, %v3170
      %v3202 = vadd.f32 %v3201, %v3171
      %v3203 = vadd.f32 %v3202, %v3172
      %v3204 = vadd.f32 %v3203, %v3173
      %v3205 = vadd.f32 %v3204, %v3174
      %v3206 = vadd.f32 %v3205, %v3175
      %v3207 = vadd.f32 %v3206, %v3176
      %v3208 = vadd.f32 %v3207, %v3177
      %v3209 = vadd.f32 %v3208, %v3178
      %v3210 = vadd.f32 %v3209, %v3179
      %v3211 = vrot.slane %v3210, 4
      %v3212 = vadd.f32 %v3210, %v3211
      %v3213 = vrot.slane %v3212, 2
      %v3214 = vadd.f32 %v3212, %v3213
      %v3215 = vrot.slane %v3214, 1
      %v3216 = vadd.f32 %v3214, %v3215
      %3217 = vst [vmem:[%s209 + $0x1] sm:$0x1] %v3216
      %s3218 = smul.u32 32, %s16
      %p3219 = scmp.lt.s32.totalorder %s3218, 63
      %s3220 = scalar_select %p3219, %s3218, 63
      %s3221 = smul.addr %s3220, 8
      %s3222 = scalar_lea.vmem %s3, %s3221
      %p3223 = scmp.lt.s32.totalorder %s16, 1
      %s3224 = scalar_select %p3223, %s16, 1
      %s3225 = smul.addr %s3224, 2
      %s3226 = scalar_lea.vmem %s4, %s3225
      // Predicated region
      $region33: #{conv_block_forward.2} parent=31 // pred_check
        %p3227 = pneg %p102
      $region34: #{conv_block_forward.2} parent=31 // pred_check_branch
        %3229 = sbr.rel (%p3227) target = $region36
      $region35: #{conv_block_forward.2} parent=31 // pred_region
        %s3230 = smul.u32 32, %s16
      $region36: #{conv_block_forward.2} parent=31 // pred_fallthru
        _
      // Predicated region
      $region37: #{conv_block_forward.2} parent=31 // pred_check
        %p3231 = pneg %p128
      $region38: #{conv_block_forward.2} parent=31 // pred_check_branch
        %3233 = sbr.rel (%p3231) target = $region40
      $region39: #{conv_block_forward.2} parent=31 // pred_region
        _
      $region40: #{conv_block_forward.2} parent=31 // pred_fallthru
        _
    $region32: #{conv_block_forward.2} parent=5 // pred_fallthru
      _
    %p3234 = scmp.le.s32.totalorder 2, %s11
    // Predicated region
    $region41: #{conv_block_forward.2} parent=5 // pred_check
      %p3235 = pneg %p3234
    $region42: #{conv_block_forward.2} parent=5 // pred_check_branch
      %3237 = sbr.rel (%p3235) target = $region44
    $region43: #{conv_block_forward.2} parent=5 // pred_region
      %s3238 = ssub.s32 %s11, 2
      // Predicated region
      $region45: #{conv_block_forward.2} parent=43 // pred_check
        %p3239 = pneg %p108
      $region46: #{conv_block_forward.2} parent=43 // pred_check_branch
        %3241 = sbr.rel (%p3239) target = $region48
      $region47: #{conv_block_forward.2} parent=43 // pred_region
        %s3242 = smul.u32 32, %s17
        %p3243 = scmp.lt.s32.totalorder %s3242, 63
        %s3244 = scalar_select %p3243, %s3242, 63
        %s3245 = smul.addr %s3244, 8
        %s3246 = scalar_lea.vmem %s3, %s3245
      $region48: #{conv_block_forward.2} parent=43 // pred_fallthru
        _
      // Predicated region
      $region49: #{conv_block_forward.2} parent=43 // pred_check
        %p3247 = pneg %p134
      $region50: #{conv_block_forward.2} parent=43 // pred_check_branch
        %3249 = sbr.rel (%p3247) target = $region52
      $region51: #{conv_block_forward.2} parent=43 // pred_region
        %p3250 = scmp.lt.s32.totalorder %s17, 1
        %s3251 = scalar_select %p3250, %s17, 1
        %s3252 = smul.addr %s3251, 2
        %s3253 = scalar_lea.vmem %s4, %s3252
      $region52: #{conv_block_forward.2} parent=43 // pred_fallthru
        _
    $region44: #{conv_block_forward.2} parent=5 // pred_fallthru
      _
  $region6: #{conv_block_forward.2} parent=0 // loop_footer
    %s15 = sadd.s32 1, %s11
  $region7: #{conv_block_forward.2} parent=0 // loop_footer_branch
    %10 = sbr.rel target = $region3
  $region8: #{conv_block_forward.2} parent=0 // loop_exit
    _

</llo_original>
